<compile_context>
chip_gen: v6e
topology: v6e:2x2x1
jax: 0.10.0
libtpu: 0.0.40
codegen_flags: <defaults>
</compile_context>

<pallas_src>
import functools

import jax
import jax.numpy as jnp
import numpy as np
from jax.experimental import pallas as pl
from jax.experimental.pallas import tpu as pltpu


# --------------------------------------------------------------------------
# Kernel: one batch element of CVT.forward
# --------------------------------------------------------------------------
def cvt_kernel(H, W,
               xT_ref,                                    # (1, L, C)
               w1t_ref, b1c_ref, w2t_ref, b2c_ref,        # shape_transform
               ftw3_ref, ftb3_ref, ftw1_ref, ftb1_ref,    # ft block
               btw3_ref, btb3_ref, btw1_ref, btb1_ref,    # bt block
               wq_ref, bq_ref, wk_ref, bk_ref, wv_ref, bv_ref,   # q/k/v 1x1
               fcwa_ref, fcwb_ref, fcb_ref,               # f_conv (split)
               out_ref):                                  # (1, HW, C)
    f32 = jnp.float32
    HW = H * W
    C = xT_ref.shape[-1]

    def relu(v):
        return jnp.maximum(v, 0.0)

    # ---- shape_transform: two Linear + ReLU, transposed so result is
    # spatial-major: img[p, c] == img_feat_torch[b, c, p]
    xT = xT_ref[0].astype(f32)                                          # (L, C)
    h = relu(jnp.dot(w1t_ref[...], xT, preferred_element_type=f32)
             + b1c_ref[...])                                            # (HW, C)
    img = relu(jnp.dot(w2t_ref[...], h, preferred_element_type=f32)
               + b2c_ref[...])                                          # (HW, C)

    # ---- im2col for a padded 3x3 conv: one matmul per conv (K = 9*C).
    # Zero-pad constants hoisted (broadcast_in_dim is not CSE'd by JAX).
    zrow = jnp.zeros((1, W, C), f32)
    zcol = jnp.zeros((H + 2, 1, C), f32)

    def im2col3x3(x_flat):                                              # (HW, C)
        x3 = x_flat.reshape(H, W, C)
        xp = jnp.concatenate([zrow, x3, zrow], axis=0)                  # (H+2, W, C)
        xp = jnp.concatenate([zcol, xp, zcol], axis=1)                  # (H+2, W+2, C)
        taps = [xp[dy:dy + H, dx:dx + W, :]
                for dy in range(3) for dx in range(3)]
        return jnp.concatenate(taps, axis=-1).reshape(HW, 9 * C)        # (HW, 9*C)

    # ---- ft: conv3x3+ReLU, conv1x1+ReLU
    t = relu(jnp.dot(im2col3x3(img), ftw3_ref[...],
                     preferred_element_type=f32) + ftb3_ref[...])
    f_feat = relu(jnp.dot(t, ftw1_ref[...],
                          preferred_element_type=f32) + ftb1_ref[...])  # (HW, C)

    # ---- bt: conv3x3+ReLU, conv1x1+ReLU  (patches of f_feat reused by f_conv)
    patches_f = im2col3x3(f_feat)
    t = relu(jnp.dot(patches_f, btw3_ref[...],
                     preferred_element_type=f32) + btb3_ref[...])
    b_feat = relu(jnp.dot(t, btw1_ref[...],
                          preferred_element_type=f32) + btb1_ref[...])  # (HW, C)

    # ---- 1x1 query / key / value convs
    query = jnp.dot(f_feat, wq_ref[...], preferred_element_type=f32) + bq_ref[...]   # (HW, C8)
    key = jnp.dot(img, wk_ref[...], preferred_element_type=f32) + bk_ref[...]        # (HW, C8)
    value = jnp.dot(b_feat, wv_ref[...], preferred_element_type=f32) + bv_ref[...]   # (HW, C)

    # ---- attention scores, row-wise max + first-argmax selection
    # att[i, j] = sum_c key[i, c] * query[j, c]
    att = jax.lax.dot_general(key, query, (((1,), (1,)), ((), ())),
                              preferred_element_type=f32)               # (HW, HW)
    maxv = jnp.max(att, axis=-1, keepdims=True)                         # (HW, 1)
    col = jax.lax.broadcasted_iota(jnp.int32, (HW, HW), 1).astype(f32)
    idx = jnp.min(jnp.where(att >= maxv, col, float(HW)),
                  axis=-1, keepdims=True)                               # first argmax
    onehot = (col == idx).astype(f32)                                   # (HW, HW)
    selected = jnp.dot(onehot, value, preferred_element_type=f32)       # (HW, C)

    # ---- f_conv on channel-concat(f_feat, selected) via split weights,
    # gate with max attention value, residual add.
    front = (jnp.dot(patches_f, fcwa_ref[...], preferred_element_type=f32)
             + jnp.dot(im2col3x3(selected), fcwb_ref[...], preferred_element_type=f32)
             + fcb_ref[...])                                            # (HW, C)
    out_ref[0] = (f_feat + front * maxv).astype(out_ref.dtype)


# --------------------------------------------------------------------------
# Wrapper: NCHW in / NCHW out, builds matmul-friendly weight operands
# --------------------------------------------------------------------------
def cvt_forward(x_nchw, params, out_dim):
    B, C, Hin, Win = x_nchw.shape
    L = Hin * Win
    H, W = out_dim
    HW = H * W
    C8 = params['q_w'].shape[0]

    # (B, C, L) -> (B, L, C) so the kernel works spatial-major throughout.
    xT = jnp.transpose(x_nchw.reshape(B, C, L), (0, 2, 1))

    def oihw_to_mat(w):      # (O, I, 3, 3) -> (9*I, O), row = (dy*3+dx)*I + i
        return jnp.transpose(w, (2, 3, 1, 0)).reshape(9 * w.shape[1], w.shape[0])

    weights = [
        params['st_w1'],                       # (HW, L)   used as left operand
        params['st_b1'].reshape(HW, 1),
        params['st_w2'],                       # (HW, HW)
        params['st_b2'].reshape(HW, 1),
        oihw_to_mat(params['ft_w3']),          # (9C, C)
        params['ft_b3'].reshape(1, C),
        params['ft_w1'].T,                     # (C, C)
        params['ft_b1'].reshape(1, C),
        oihw_to_mat(params['bt_w3']),
        params['bt_b3'].reshape(1, C),
        params['bt_w1'].T,
        params['bt_b1'].reshape(1, C),
        params['q_w'].T,                       # (C, C8)
        params['q_b'].reshape(1, C8),
        params['k_w'].T,
        params['k_b'].reshape(1, C8),
        params['v_w'].T,                       # (C, C)
        params['v_b'].reshape(1, C),
        oihw_to_mat(params['f_w3'][:, :C, :, :]),   # (9C, C)  f_feat half
        oihw_to_mat(params['f_w3'][:, C:, :, :]),   # (9C, C)  selected half
        params['f_b'].reshape(1, C),
    ]

    def full_spec(a):
        nd = a.ndim
        return pl.BlockSpec(a.shape, lambda i, _nd=nd: (0,) * _nd)

    grid_spec = pltpu.PrefetchScalarGridSpec(
        num_scalar_prefetch=0,
        grid=(B,),
        in_specs=[pl.BlockSpec((1, L, C), lambda i: (i, 0, 0))]
                 + [full_spec(a) for a in weights],
        out_specs=pl.BlockSpec((1, HW, C), lambda i: (i, 0, 0)),
    )

    out_flat = pl.pallas_call(
        functools.partial(cvt_kernel, H, W),
        out_shape=jax.ShapeDtypeStruct((B, HW, C), jnp.float32),
        grid_spec=grid_spec,
        compiler_params=pltpu.CompilerParams(
            dimension_semantics=("parallel",)),
    )(xT, *weights)

    # (B, HW, C) -> (B, C, H, W)
    return jnp.transpose(out_flat, (0, 2, 1)).reshape(B, C, H, W)


# --------------------------------------------------------------------------
# Synthetic parameters (torch-like layouts: Linear (out,in), Conv OIHW)
# --------------------------------------------------------------------------
def init_params(key, feat_dim, out_dim, feat_c):
    L = feat_dim[0] * feat_dim[1]
    HW = out_dim[0] * out_dim[1]
    C = feat_c
    C8 = C // 8
    ks = jax.random.split(key, 20)

    def dense(k, shape, fan_in):
        return jax.random.normal(k, shape, jnp.float32) / np.sqrt(fan_in)

    def bias(k, n):
        return 0.1 * jax.random.normal(k, (n,), jnp.float32)

    return dict(
        st_w1=dense(ks[0], (HW, L), L), st_b1=bias(ks[1], HW),
        st_w2=dense(ks[2], (HW, HW), HW), st_b2=bias(ks[3], HW),
        ft_w3=dense(ks[4], (C, C, 3, 3), 9 * C), ft_b3=bias(ks[5], C),
        ft_w1=dense(ks[6], (C, C), C), ft_b1=bias(ks[7], C),
        bt_w3=dense(ks[8], (C, C, 3, 3), 9 * C), bt_b3=bias(ks[9], C),
        bt_w1=dense(ks[10], (C, C), C), bt_b1=bias(ks[11], C),
        q_w=dense(ks[12], (C8, C), C), q_b=bias(ks[13], C8),
        k_w=dense(ks[14], (C8, C), C), k_b=bias(ks[15], C8),
        v_w=dense(ks[16], (C, C), C), v_b=bias(ks[17], C),
        f_w3=dense(ks[18], (C, 2 * C, 3, 3), 18 * C), f_b=bias(ks[19], C),
    )


# --------------------------------------------------------------------------
# Pure-JAX reference (mirror of the PyTorch module, NCHW)
# --------------------------------------------------------------------------
def cvt_reference(x, p, out_dim):
    hp = jax.lax.Precision.HIGHEST
    B, C, Hin, Win = x.shape
    H, W = out_dim
    HW = H * W
    relu = lambda v: jnp.maximum(v, 0.0)

    v = x.reshape(B, C, Hin * Win)
    v = relu(jnp.einsum('bcl,ol->bco', v, p['st_w1'], precision=hp) + p['st_b1'])
    v = relu(jnp.einsum('bcl,ol->bco', v, p['st_w2'], precision=hp) + p['st_b2'])
    img = v.reshape(B, C, H, W)

    def conv3(xin, w, b):
        y = jax.lax.conv_general_dilated(
            xin, w, window_strides=(1, 1), padding=((1, 1), (1, 1)),
            dimension_numbers=('NCHW', 'OIHW', 'NCHW'), precision=hp)
        return y + b.reshape(1, -1, 1, 1)

    def conv1(xin, w_oi, b):
        return jnp.einsum('bchw,oc->bohw', xin, w_oi, precision=hp) + b.reshape(1, -1, 1, 1)

    f = relu(conv1(relu(conv3(img, p['ft_w3'], p['ft_b3'])), p['ft_w1'], p['ft_b1']))
    bf = relu(conv1(relu(conv3(f, p['bt_w3'], p['bt_b3'])), p['bt_w1'], p['bt_b1']))

    q = conv1(f, p['q_w'], p['q_b']).reshape(B, -1, HW)
    k = conv1(img, p['k_w'], p['k_b']).reshape(B, -1, HW)
    val = conv1(bf, p['v_w'], p['v_b']).reshape(B, C, HW)

    att = jnp.einsum('bci,bcj->bij', k, q, precision=hp)          # (B, HW, HW)
    maxv = jnp.max(att, axis=-1)
    idx = jnp.argmax(att, axis=-1)
    sel = jnp.take_along_axis(val, jnp.broadcast_to(idx[:, None, :], (B, C, HW)),
                              axis=2).reshape(B, C, H, W)

    front = conv3(jnp.concatenate([f, sel], axis=1), p['f_w3'], p['f_b'])
    front = front * maxv.reshape(B, 1, H, W)
    return f + front


if __name__ == "__main__":
    key = jax.random.PRNGKey(0)
    kx, kp = jax.random.split(key)

    feat_dim = (8, 8)        # input spatial dims  -> Linear in = 64
    out_dim = (8, 8)         # out_channels = 64, output spatial = 8x8
    feat_c = 32              # feat_c // 8 = 4
    B = 2

    x = jax.random.normal(kx, (B, feat_c, feat_dim[0], feat_dim[1]), jnp.float32)
    params = init_params(kp, feat_dim, out_dim, feat_c)

    out = cvt_forward(x, params, out_dim)
    out = jax.block_until_ready(out)

    assert out.shape == (B, feat_c, out_dim[0], out_dim[1]), out.shape
    assert bool(jnp.all(jnp.isfinite(out)))

    # Robust consistency check vs the pure-JAX reference (tolerant of MXU
    # precision and the measure-zero chance of an argmax tie flip).
    ref = cvt_reference(x, params, out_dim)
    rel_err = jnp.abs(out - ref) / jnp.maximum(jnp.abs(ref), 1.0)
    assert float(jnp.mean(rel_err < 5e-2)) > 0.9, float(jnp.max(rel_err))

    print("KERNEL_OK")
</pallas_src>

<mosaic_0001>
module attributes {stable_mosaic.version = 11 : i64} {
  func.func @cvt_kernel(%arg0: i32, %arg1: memref<1x64x32xf32, #tpu.memory_space<vmem>>, %arg2: memref<64x64xf32, #tpu.memory_space<vmem>>, %arg3: memref<64x1xf32, #tpu.memory_space<vmem>>, %arg4: memref<64x64xf32, #tpu.memory_space<vmem>>, %arg5: memref<64x1xf32, #tpu.memory_space<vmem>>, %arg6: memref<288x32xf32, #tpu.memory_space<vmem>>, %arg7: memref<1x32xf32, #tpu.memory_space<vmem>>, %arg8: memref<32x32xf32, #tpu.memory_space<vmem>>, %arg9: memref<1x32xf32, #tpu.memory_space<vmem>>, %arg10: memref<288x32xf32, #tpu.memory_space<vmem>>, %arg11: memref<1x32xf32, #tpu.memory_space<vmem>>, %arg12: memref<32x32xf32, #tpu.memory_space<vmem>>, %arg13: memref<1x32xf32, #tpu.memory_space<vmem>>, %arg14: memref<32x4xf32, #tpu.memory_space<vmem>>, %arg15: memref<1x4xf32, #tpu.memory_space<vmem>>, %arg16: memref<32x4xf32, #tpu.memory_space<vmem>>, %arg17: memref<1x4xf32, #tpu.memory_space<vmem>>, %arg18: memref<32x32xf32, #tpu.memory_space<vmem>>, %arg19: memref<1x32xf32, #tpu.memory_space<vmem>>, %arg20: memref<288x32xf32, #tpu.memory_space<vmem>>, %arg21: memref<288x32xf32, #tpu.memory_space<vmem>>, %arg22: memref<1x32xf32, #tpu.memory_space<vmem>>, %arg23: memref<1x64x32xf32, #tpu.memory_space<vmem>>) attributes {dimension_semantics = [#tpu.dimension_semantics<parallel>], iteration_bounds = array<i64: 2>, scalar_prefetch = 0 : i64, scratch_operands = 0 : i64, tpu.core_type = #tpu.core_type<tc>, window_params = [{transform_indices = @transform_0, window_bounds = array<i64: 1, 64, 32>}, {pipeline_mode = #tpu.pipeline_mode<synchronous>, transform_indices = @transform_1, window_bounds = array<i64: 64, 64>}, {pipeline_mode = #tpu.pipeline_mode<synchronous>, transform_indices = @transform_2, window_bounds = array<i64: 64, 1>}, {pipeline_mode = #tpu.pipeline_mode<synchronous>, transform_indices = @transform_3, window_bounds = array<i64: 64, 64>}, {pipeline_mode = #tpu.pipeline_mode<synchronous>, transform_indices = @transform_4, window_bounds = array<i64: 64, 1>}, {pipeline_mode = #tpu.pipeline_mode<synchronous>, transform_indices = @transform_5, window_bounds = array<i64: 288, 32>}, {pipeline_mode = #tpu.pipeline_mode<synchronous>, transform_indices = @transform_6, window_bounds = array<i64: 1, 32>}, {pipeline_mode = #tpu.pipeline_mode<synchronous>, transform_indices = @transform_7, window_bounds = array<i64: 32, 32>}, {pipeline_mode = #tpu.pipeline_mode<synchronous>, transform_indices = @transform_8, window_bounds = array<i64: 1, 32>}, {pipeline_mode = #tpu.pipeline_mode<synchronous>, transform_indices = @transform_9, window_bounds = array<i64: 288, 32>}, {pipeline_mode = #tpu.pipeline_mode<synchronous>, transform_indices = @transform_10, window_bounds = array<i64: 1, 32>}, {pipeline_mode = #tpu.pipeline_mode<synchronous>, transform_indices = @transform_11, window_bounds = array<i64: 32, 32>}, {pipeline_mode = #tpu.pipeline_mode<synchronous>, transform_indices = @transform_12, window_bounds = array<i64: 1, 32>}, {pipeline_mode = #tpu.pipeline_mode<synchronous>, transform_indices = @transform_13, window_bounds = array<i64: 32, 4>}, {pipeline_mode = #tpu.pipeline_mode<synchronous>, transform_indices = @transform_14, window_bounds = array<i64: 1, 4>}, {pipeline_mode = #tpu.pipeline_mode<synchronous>, transform_indices = @transform_15, window_bounds = array<i64: 32, 4>}, {pipeline_mode = #tpu.pipeline_mode<synchronous>, transform_indices = @transform_16, window_bounds = array<i64: 1, 4>}, {pipeline_mode = #tpu.pipeline_mode<synchronous>, transform_indices = @transform_17, window_bounds = array<i64: 32, 32>}, {pipeline_mode = #tpu.pipeline_mode<synchronous>, transform_indices = @transform_18, window_bounds = array<i64: 1, 32>}, {pipeline_mode = #tpu.pipeline_mode<synchronous>, transform_indices = @transform_19, window_bounds = array<i64: 288, 32>}, {pipeline_mode = #tpu.pipeline_mode<synchronous>, transform_indices = @transform_20, window_bounds = array<i64: 288, 32>}, {pipeline_mode = #tpu.pipeline_mode<synchronous>, transform_indices = @transform_21, window_bounds = array<i64: 1, 32>}, {transform_indices = @transform_22, window_bounds = array<i64: 1, 64, 32>}]} {
    %c0 = arith.constant 0 : index
    %c0_0 = arith.constant 0 : index
    %c0_1 = arith.constant 0 : index
    %0 = vector.load %arg1[%c0, %c0_0, %c0_1] : memref<1x64x32xf32, #tpu.memory_space<vmem>>, vector<1x64x32xf32>
    %1 = vector.shape_cast %0 : vector<1x64x32xf32> to vector<64x32xf32>
    %c0_2 = arith.constant 0 : index
    %c0_3 = arith.constant 0 : index
    %2 = vector.load %arg2[%c0_2, %c0_3] : memref<64x64xf32, #tpu.memory_space<vmem>>, vector<64x64xf32>
    %cst = arith.constant dense<0.000000e+00> : vector<64x32xf32>
    %3 = tpu.matmul %2, %1, %cst {dimension_numbers = #tpu.dot_dimension_numbers<[1], [0], [0], [1], [0, 0, 1, 1], [], []>} : vector<64x64xf32>, vector<64x32xf32>, vector<64x32xf32> -> vector<64x32xf32>
    %c0_4 = arith.constant 0 : index
    %c0_5 = arith.constant 0 : index
    %4 = vector.load %arg3[%c0_4, %c0_5] : memref<64x1xf32, #tpu.memory_space<vmem>>, vector<64x1xf32>
    %5 = vector.broadcast %4 : vector<64x1xf32> to vector<64x32xf32>
    %6 = arith.addf %3, %5 : vector<64x32xf32>
    %cst_6 = arith.constant 0.000000e+00 : f32
    %7 = vector.broadcast %cst_6 : f32 to vector<64x32xf32>
    %8 = arith.maximumf %6, %7 : vector<64x32xf32>
    %c0_7 = arith.constant 0 : index
    %c0_8 = arith.constant 0 : index
    %9 = vector.load %arg4[%c0_7, %c0_8] : memref<64x64xf32, #tpu.memory_space<vmem>>, vector<64x64xf32>
    %cst_9 = arith.constant dense<0.000000e+00> : vector<64x32xf32>
    %10 = tpu.matmul %9, %8, %cst_9 {dimension_numbers = #tpu.dot_dimension_numbers<[1], [0], [0], [1], [0, 0, 1, 1], [], []>} : vector<64x64xf32>, vector<64x32xf32>, vector<64x32xf32> -> vector<64x32xf32>
    %c0_10 = arith.constant 0 : index
    %c0_11 = arith.constant 0 : index
    %11 = vector.load %arg5[%c0_10, %c0_11] : memref<64x1xf32, #tpu.memory_space<vmem>>, vector<64x1xf32>
    %12 = vector.broadcast %11 : vector<64x1xf32> to vector<64x32xf32>
    %13 = arith.addf %10, %12 : vector<64x32xf32>
    %cst_12 = arith.constant 0.000000e+00 : f32
    %14 = vector.broadcast %cst_12 : f32 to vector<64x32xf32>
    %15 = arith.maximumf %13, %14 : vector<64x32xf32>
    %cst_13 = arith.constant 0.000000e+00 : f32
    %16 = vector.broadcast %cst_13 : f32 to vector<1x8x32xf32>
    %cst_14 = arith.constant 0.000000e+00 : f32
    %17 = vector.broadcast %cst_14 : f32 to vector<10x1x32xf32>
    %18 = vector.shape_cast %15 : vector<64x32xf32> to vector<8x8x32xf32>
    %19 = tpu.concatenate %16, %18, %16 in 0 : vector<1x8x32xf32>, vector<8x8x32xf32>, vector<1x8x32xf32> -> vector<10x8x32xf32>
    %20 = tpu.concatenate %17, %19, %17 in 1 : vector<10x1x32xf32>, vector<10x8x32xf32>, vector<10x1x32xf32> -> vector<10x10x32xf32>
    %21 = vector.extract_strided_slice %20 {offsets = [0, 0, 0], sizes = [8, 8, 32], strides = [1, 1, 1]} : vector<10x10x32xf32> to vector<8x8x32xf32>
    %22 = vector.extract_strided_slice %20 {offsets = [0, 1, 0], sizes = [8, 8, 32], strides = [1, 1, 1]} : vector<10x10x32xf32> to vector<8x8x32xf32>
    %23 = vector.extract_strided_slice %20 {offsets = [0, 2, 0], sizes = [8, 8, 32], strides = [1, 1, 1]} : vector<10x10x32xf32> to vector<8x8x32xf32>
    %24 = vector.extract_strided_slice %20 {offsets = [1, 0, 0], sizes = [8, 8, 32], strides = [1, 1, 1]} : vector<10x10x32xf32> to vector<8x8x32xf32>
    %25 = vector.extract_strided_slice %20 {offsets = [1, 1, 0], sizes = [8, 8, 32], strides = [1, 1, 1]} : vector<10x10x32xf32> to vector<8x8x32xf32>
    %26 = vector.extract_strided_slice %20 {offsets = [1, 2, 0], sizes = [8, 8, 32], strides = [1, 1, 1]} : vector<10x10x32xf32> to vector<8x8x32xf32>
    %27 = vector.extract_strided_slice %20 {offsets = [2, 0, 0], sizes = [8, 8, 32], strides = [1, 1, 1]} : vector<10x10x32xf32> to vector<8x8x32xf32>
    %28 = vector.extract_strided_slice %20 {offsets = [2, 1, 0], sizes = [8, 8, 32], strides = [1, 1, 1]} : vector<10x10x32xf32> to vector<8x8x32xf32>
    %29 = vector.extract_strided_slice %20 {offsets = [2, 2, 0], sizes = [8, 8, 32], strides = [1, 1, 1]} : vector<10x10x32xf32> to vector<8x8x32xf32>
    %30 = tpu.concatenate %21, %22, %23, %24, %25, %26, %27, %28, %29 in 2 : vector<8x8x32xf32>, vector<8x8x32xf32>, vector<8x8x32xf32>, vector<8x8x32xf32>, vector<8x8x32xf32>, vector<8x8x32xf32>, vector<8x8x32xf32>, vector<8x8x32xf32>, vector<8x8x32xf32> -> vector<8x8x288xf32>
    %31 = vector.shape_cast %30 : vector<8x8x288xf32> to vector<64x288xf32>
    %c0_15 = arith.constant 0 : index
    %c0_16 = arith.constant 0 : index
    %32 = vector.load %arg6[%c0_15, %c0_16] : memref<288x32xf32, #tpu.memory_space<vmem>>, vector<288x32xf32>
    %cst_17 = arith.constant dense<0.000000e+00> : vector<64x32xf32>
    %33 = tpu.matmul %31, %32, %cst_17 {dimension_numbers = #tpu.dot_dimension_numbers<[1], [0], [0], [1], [0, 0, 1, 1], [], []>} : vector<64x288xf32>, vector<288x32xf32>, vector<64x32xf32> -> vector<64x32xf32>
    %c0_18 = arith.constant 0 : index
    %c0_19 = arith.constant 0 : index
    %34 = vector.load %arg7[%c0_18, %c0_19] : memref<1x32xf32, #tpu.memory_space<vmem>>, vector<1x32xf32>
    %35 = vector.broadcast %34 : vector<1x32xf32> to vector<64x32xf32>
    %36 = arith.addf %33, %35 : vector<64x32xf32>
    %cst_20 = arith.constant 0.000000e+00 : f32
    %37 = vector.broadcast %cst_20 : f32 to vector<64x32xf32>
    %38 = arith.maximumf %36, %37 : vector<64x32xf32>
    %c0_21 = arith.constant 0 : index
    %c0_22 = arith.constant 0 : index
    %39 = vector.load %arg8[%c0_21, %c0_22] : memref<32x32xf32, #tpu.memory_space<vmem>>, vector<32x32xf32>
    %cst_23 = arith.constant dense<0.000000e+00> : vector<64x32xf32>
    %40 = tpu.matmul %38, %39, %cst_23 {dimension_numbers = #tpu.dot_dimension_numbers<[1], [0], [0], [1], [0, 0, 1, 1], [], []>} : vector<64x32xf32>, vector<32x32xf32>, vector<64x32xf32> -> vector<64x32xf32>
    %c0_24 = arith.constant 0 : index
    %c0_25 = arith.constant 0 : index
    %41 = vector.load %arg9[%c0_24, %c0_25] : memref<1x32xf32, #tpu.memory_space<vmem>>, vector<1x32xf32>
    %42 = vector.broadcast %41 : vector<1x32xf32> to vector<64x32xf32>
    %43 = arith.addf %40, %42 : vector<64x32xf32>
    %cst_26 = arith.constant 0.000000e+00 : f32
    %44 = vector.broadcast %cst_26 : f32 to vector<64x32xf32>
    %45 = arith.maximumf %43, %44 : vector<64x32xf32>
    %46 = vector.shape_cast %45 : vector<64x32xf32> to vector<8x8x32xf32>
    %47 = tpu.concatenate %16, %46, %16 in 0 : vector<1x8x32xf32>, vector<8x8x32xf32>, vector<1x8x32xf32> -> vector<10x8x32xf32>
    %48 = tpu.concatenate %17, %47, %17 in 1 : vector<10x1x32xf32>, vector<10x8x32xf32>, vector<10x1x32xf32> -> vector<10x10x32xf32>
    %49 = vector.extract_strided_slice %48 {offsets = [0, 0, 0], sizes = [8, 8, 32], strides = [1, 1, 1]} : vector<10x10x32xf32> to vector<8x8x32xf32>
    %50 = vector.extract_strided_slice %48 {offsets = [0, 1, 0], sizes = [8, 8, 32], strides = [1, 1, 1]} : vector<10x10x32xf32> to vector<8x8x32xf32>
    %51 = vector.extract_strided_slice %48 {offsets = [0, 2, 0], sizes = [8, 8, 32], strides = [1, 1, 1]} : vector<10x10x32xf32> to vector<8x8x32xf32>
    %52 = vector.extract_strided_slice %48 {offsets = [1, 0, 0], sizes = [8, 8, 32], strides = [1, 1, 1]} : vector<10x10x32xf32> to vector<8x8x32xf32>
    %53 = vector.extract_strided_slice %48 {offsets = [1, 1, 0], sizes = [8, 8, 32], strides = [1, 1, 1]} : vector<10x10x32xf32> to vector<8x8x32xf32>
    %54 = vector.extract_strided_slice %48 {offsets = [1, 2, 0], sizes = [8, 8, 32], strides = [1, 1, 1]} : vector<10x10x32xf32> to vector<8x8x32xf32>
    %55 = vector.extract_strided_slice %48 {offsets = [2, 0, 0], sizes = [8, 8, 32], strides = [1, 1, 1]} : vector<10x10x32xf32> to vector<8x8x32xf32>
    %56 = vector.extract_strided_slice %48 {offsets = [2, 1, 0], sizes = [8, 8, 32], strides = [1, 1, 1]} : vector<10x10x32xf32> to vector<8x8x32xf32>
    %57 = vector.extract_strided_slice %48 {offsets = [2, 2, 0], sizes = [8, 8, 32], strides = [1, 1, 1]} : vector<10x10x32xf32> to vector<8x8x32xf32>
    %58 = tpu.concatenate %49, %50, %51, %52, %53, %54, %55, %56, %57 in 2 : vector<8x8x32xf32>, vector<8x8x32xf32>, vector<8x8x32xf32>, vector<8x8x32xf32>, vector<8x8x32xf32>, vector<8x8x32xf32>, vector<8x8x32xf32>, vector<8x8x32xf32>, vector<8x8x32xf32> -> vector<8x8x288xf32>
    %59 = vector.shape_cast %58 : vector<8x8x288xf32> to vector<64x288xf32>
    %c0_27 = arith.constant 0 : index
    %c0_28 = arith.constant 0 : index
    %60 = vector.load %arg10[%c0_27, %c0_28] : memref<288x32xf32, #tpu.memory_space<vmem>>, vector<288x32xf32>
    %cst_29 = arith.constant dense<0.000000e+00> : vector<64x32xf32>
    %61 = tpu.matmul %59, %60, %cst_29 {dimension_numbers = #tpu.dot_dimension_numbers<[1], [0], [0], [1], [0, 0, 1, 1], [], []>} : vector<64x288xf32>, vector<288x32xf32>, vector<64x32xf32> -> vector<64x32xf32>
    %c0_30 = arith.constant 0 : index
    %c0_31 = arith.constant 0 : index
    %62 = vector.load %arg11[%c0_30, %c0_31] : memref<1x32xf32, #tpu.memory_space<vmem>>, vector<1x32xf32>
    %63 = vector.broadcast %62 : vector<1x32xf32> to vector<64x32xf32>
    %64 = arith.addf %61, %63 : vector<64x32xf32>
    %cst_32 = arith.constant 0.000000e+00 : f32
    %65 = vector.broadcast %cst_32 : f32 to vector<64x32xf32>
    %66 = arith.maximumf %64, %65 : vector<64x32xf32>
    %c0_33 = arith.constant 0 : index
    %c0_34 = arith.constant 0 : index
    %67 = vector.load %arg12[%c0_33, %c0_34] : memref<32x32xf32, #tpu.memory_space<vmem>>, vector<32x32xf32>
    %cst_35 = arith.constant dense<0.000000e+00> : vector<64x32xf32>
    %68 = tpu.matmul %66, %67, %cst_35 {dimension_numbers = #tpu.dot_dimension_numbers<[1], [0], [0], [1], [0, 0, 1, 1], [], []>} : vector<64x32xf32>, vector<32x32xf32>, vector<64x32xf32> -> vector<64x32xf32>
    %c0_36 = arith.constant 0 : index
    %c0_37 = arith.constant 0 : index
    %69 = vector.load %arg13[%c0_36, %c0_37] : memref<1x32xf32, #tpu.memory_space<vmem>>, vector<1x32xf32>
    %70 = vector.broadcast %69 : vector<1x32xf32> to vector<64x32xf32>
    %71 = arith.addf %68, %70 : vector<64x32xf32>
    %cst_38 = arith.constant 0.000000e+00 : f32
    %72 = vector.broadcast %cst_38 : f32 to vector<64x32xf32>
    %73 = arith.maximumf %71, %72 : vector<64x32xf32>
    %c0_39 = arith.constant 0 : index
    %c0_40 = arith.constant 0 : index
    %74 = vector.load %arg14[%c0_39, %c0_40] : memref<32x4xf32, #tpu.memory_space<vmem>>, vector<32x4xf32>
    %cst_41 = arith.constant dense<0.000000e+00> : vector<64x4xf32>
    %75 = tpu.matmul %45, %74, %cst_41 {dimension_numbers = #tpu.dot_dimension_numbers<[1], [0], [0], [1], [0, 0, 1, 1], [], []>} : vector<64x32xf32>, vector<32x4xf32>, vector<64x4xf32> -> vector<64x4xf32>
    %c0_42 = arith.constant 0 : index
    %c0_43 = arith.constant 0 : index
    %76 = vector.load %arg15[%c0_42, %c0_43] : memref<1x4xf32, #tpu.memory_space<vmem>>, vector<1x4xf32>
    %77 = vector.broadcast %76 : vector<1x4xf32> to vector<64x4xf32>
    %78 = arith.addf %75, %77 : vector<64x4xf32>
    %c0_44 = arith.constant 0 : index
    %c0_45 = arith.constant 0 : index
    %79 = vector.load %arg16[%c0_44, %c0_45] : memref<32x4xf32, #tpu.memory_space<vmem>>, vector<32x4xf32>
    %cst_46 = arith.constant dense<0.000000e+00> : vector<64x4xf32>
    %80 = tpu.matmul %15, %79, %cst_46 {dimension_numbers = #tpu.dot_dimension_numbers<[1], [0], [0], [1], [0, 0, 1, 1], [], []>} : vector<64x32xf32>, vector<32x4xf32>, vector<64x4xf32> -> vector<64x4xf32>
    %c0_47 = arith.constant 0 : index
    %c0_48 = arith.constant 0 : index
    %81 = vector.load %arg17[%c0_47, %c0_48] : memref<1x4xf32, #tpu.memory_space<vmem>>, vector<1x4xf32>
    %82 = vector.broadcast %81 : vector<1x4xf32> to vector<64x4xf32>
    %83 = arith.addf %80, %82 : vector<64x4xf32>
    %c0_49 = arith.constant 0 : index
    %c0_50 = arith.constant 0 : index
    %84 = vector.load %arg18[%c0_49, %c0_50] : memref<32x32xf32, #tpu.memory_space<vmem>>, vector<32x32xf32>
    %cst_51 = arith.constant dense<0.000000e+00> : vector<64x32xf32>
    %85 = tpu.matmul %73, %84, %cst_51 {dimension_numbers = #tpu.dot_dimension_numbers<[1], [0], [0], [1], [0, 0, 1, 1], [], []>} : vector<64x32xf32>, vector<32x32xf32>, vector<64x32xf32> -> vector<64x32xf32>
    %c0_52 = arith.constant 0 : index
    %c0_53 = arith.constant 0 : index
    %86 = vector.load %arg19[%c0_52, %c0_53] : memref<1x32xf32, #tpu.memory_space<vmem>>, vector<1x32xf32>
    %87 = vector.broadcast %86 : vector<1x32xf32> to vector<64x32xf32>
    %88 = arith.addf %85, %87 : vector<64x32xf32>
    %cst_54 = arith.constant dense<0.000000e+00> : vector<64x64xf32>
    %89 = tpu.matmul %83, %78, %cst_54 {dimension_numbers = #tpu.dot_dimension_numbers<[1], [1], [0], [0], [0, 0, 1, 0], [], []>} : vector<64x4xf32>, vector<64x4xf32>, vector<64x64xf32> -> vector<64x64xf32>
    %cst_55 = arith.constant dense<0xFF800000> : vector<64xf32>
    %90 = vector.multi_reduction <maximumf>, %89, %cst_55 [1] : vector<64x64xf32> to vector<64xf32>
    %91 = vector.shape_cast %90 : vector<64xf32> to vector<64x1xf32>
    %92 = tpu.iota {dimensions = array<i32: 1>} : vector<64x64xi32>
    %93 = arith.sitofp %92 : vector<64x64xi32> to vector<64x64xf32>
    %94 = vector.broadcast %91 : vector<64x1xf32> to vector<64x64xf32>
    %95 = arith.cmpf oge, %89, %94 : vector<64x64xf32>
    %cst_56 = arith.constant 6.400000e+01 : f32
    %96 = vector.broadcast %cst_56 : f32 to vector<64x64xf32>
    %97 = arith.select %95, %93, %96 : vector<64x64xi1>, vector<64x64xf32>
    %cst_57 = arith.constant dense<0x7F800000> : vector<64xf32>
    %98 = vector.multi_reduction <minimumf>, %97, %cst_57 [1] : vector<64x64xf32> to vector<64xf32>
    %99 = vector.shape_cast %98 : vector<64xf32> to vector<64x1xf32>
    %100 = vector.broadcast %99 : vector<64x1xf32> to vector<64x64xf32>
    %101 = arith.cmpf oeq, %93, %100 : vector<64x64xf32>
    %102 = arith.extui %101 : vector<64x64xi1> to vector<64x64xi32>
    %103 = arith.sitofp %102 : vector<64x64xi32> to vector<64x64xf32>
    %cst_58 = arith.constant dense<0.000000e+00> : vector<64x32xf32>
    %104 = tpu.matmul %103, %88, %cst_58 {dimension_numbers = #tpu.dot_dimension_numbers<[1], [0], [0], [1], [0, 0, 1, 1], [], []>} : vector<64x64xf32>, vector<64x32xf32>, vector<64x32xf32> -> vector<64x32xf32>
    %c0_59 = arith.constant 0 : index
    %c0_60 = arith.constant 0 : index
    %105 = vector.load %arg20[%c0_59, %c0_60] : memref<288x32xf32, #tpu.memory_space<vmem>>, vector<288x32xf32>
    %cst_61 = arith.constant dense<0.000000e+00> : vector<64x32xf32>
    %106 = tpu.matmul %59, %105, %cst_61 {dimension_numbers = #tpu.dot_dimension_numbers<[1], [0], [0], [1], [0, 0, 1, 1], [], []>} : vector<64x288xf32>, vector<288x32xf32>, vector<64x32xf32> -> vector<64x32xf32>
    %107 = vector.shape_cast %104 : vector<64x32xf32> to vector<8x8x32xf32>
    %108 = tpu.concatenate %16, %107, %16 in 0 : vector<1x8x32xf32>, vector<8x8x32xf32>, vector<1x8x32xf32> -> vector<10x8x32xf32>
    %109 = tpu.concatenate %17, %108, %17 in 1 : vector<10x1x32xf32>, vector<10x8x32xf32>, vector<10x1x32xf32> -> vector<10x10x32xf32>
    %110 = vector.extract_strided_slice %109 {offsets = [0, 0, 0], sizes = [8, 8, 32], strides = [1, 1, 1]} : vector<10x10x32xf32> to vector<8x8x32xf32>
    %111 = vector.extract_strided_slice %109 {offsets = [0, 1, 0], sizes = [8, 8, 32], strides = [1, 1, 1]} : vector<10x10x32xf32> to vector<8x8x32xf32>
    %112 = vector.extract_strided_slice %109 {offsets = [0, 2, 0], sizes = [8, 8, 32], strides = [1, 1, 1]} : vector<10x10x32xf32> to vector<8x8x32xf32>
    %113 = vector.extract_strided_slice %109 {offsets = [1, 0, 0], sizes = [8, 8, 32], strides = [1, 1, 1]} : vector<10x10x32xf32> to vector<8x8x32xf32>
    %114 = vector.extract_strided_slice %109 {offsets = [1, 1, 0], sizes = [8, 8, 32], strides = [1, 1, 1]} : vector<10x10x32xf32> to vector<8x8x32xf32>
    %115 = vector.extract_strided_slice %109 {offsets = [1, 2, 0], sizes = [8, 8, 32], strides = [1, 1, 1]} : vector<10x10x32xf32> to vector<8x8x32xf32>
    %116 = vector.extract_strided_slice %109 {offsets = [2, 0, 0], sizes = [8, 8, 32], strides = [1, 1, 1]} : vector<10x10x32xf32> to vector<8x8x32xf32>
    %117 = vector.extract_strided_slice %109 {offsets = [2, 1, 0], sizes = [8, 8, 32], strides = [1, 1, 1]} : vector<10x10x32xf32> to vector<8x8x32xf32>
    %118 = vector.extract_strided_slice %109 {offsets = [2, 2, 0], sizes = [8, 8, 32], strides = [1, 1, 1]} : vector<10x10x32xf32> to vector<8x8x32xf32>
    %119 = tpu.concatenate %110, %111, %112, %113, %114, %115, %116, %117, %118 in 2 : vector<8x8x32xf32>, vector<8x8x32xf32>, vector<8x8x32xf32>, vector<8x8x32xf32>, vector<8x8x32xf32>, vector<8x8x32xf32>, vector<8x8x32xf32>, vector<8x8x32xf32>, vector<8x8x32xf32> -> vector<8x8x288xf32>
    %120 = vector.shape_cast %119 : vector<8x8x288xf32> to vector<64x288xf32>
    %c0_62 = arith.constant 0 : index
    %c0_63 = arith.constant 0 : index
    %121 = vector.load %arg21[%c0_62, %c0_63] : memref<288x32xf32, #tpu.memory_space<vmem>>, vector<288x32xf32>
    %cst_64 = arith.constant dense<0.000000e+00> : vector<64x32xf32>
    %122 = tpu.matmul %120, %121, %cst_64 {dimension_numbers = #tpu.dot_dimension_numbers<[1], [0], [0], [1], [0, 0, 1, 1], [], []>} : vector<64x288xf32>, vector<288x32xf32>, vector<64x32xf32> -> vector<64x32xf32>
    %123 = arith.addf %106, %122 : vector<64x32xf32>
    %c0_65 = arith.constant 0 : index
    %c0_66 = arith.constant 0 : index
    %124 = vector.load %arg22[%c0_65, %c0_66] : memref<1x32xf32, #tpu.memory_space<vmem>>, vector<1x32xf32>
    %125 = vector.broadcast %124 : vector<1x32xf32> to vector<64x32xf32>
    %126 = arith.addf %123, %125 : vector<64x32xf32>
    %127 = vector.broadcast %91 : vector<64x1xf32> to vector<64x32xf32>
    %128 = arith.mulf %126, %127 : vector<64x32xf32>
    %129 = arith.addf %45, %128 : vector<64x32xf32>
    %c0_67 = arith.constant 0 : index
    %c0_68 = arith.constant 0 : index
    %c0_69 = arith.constant 0 : index
    %130 = vector.load %arg23[%c0_67, %c0_68, %c0_69] : memref<1x64x32xf32, #tpu.memory_space<vmem>>, vector<1x64x32xf32>
    %131 = vector.shape_cast %130 : vector<1x64x32xf32> to vector<64x32xf32>
    %132 = vector.shape_cast %129 : vector<64x32xf32> to vector<1x64x32xf32>
    tpu.vector_store %arg23[%c0_67, %c0_68, %c0_69], %132 {strides = array<i32>} : memref<1x64x32xf32, #tpu.memory_space<vmem>>, vector<1x64x32xf32>,
    return
  }
  func.func @transform_0(%arg0: i32) -> (i32, i32, i32) {
    %c0_i32 = arith.constant 0 : i32
    %c0_i32_0 = arith.constant 0 : i32
    %c0_i32_1 = arith.constant 0 : i32
    return %arg0, %c0_i32, %c0_i32_0 : i32, i32, i32
  }
  func.func @transform_1(%arg0: i32) -> (i32, i32) {
    %c0_i32 = arith.constant 0 : i32
    %c0_i32_0 = arith.constant 0 : i32
    %c0_i32_1 = arith.constant 0 : i32
    return %c0_i32, %c0_i32_0 : i32, i32
  }
  func.func @transform_2(%arg0: i32) -> (i32, i32) {
    %c0_i32 = arith.constant 0 : i32
    %c0_i32_0 = arith.constant 0 : i32
    %c0_i32_1 = arith.constant 0 : i32
    return %c0_i32, %c0_i32_0 : i32, i32
  }
  func.func @transform_3(%arg0: i32) -> (i32, i32) {
    %c0_i32 = arith.constant 0 : i32
    %c0_i32_0 = arith.constant 0 : i32
    %c0_i32_1 = arith.constant 0 : i32
    return %c0_i32, %c0_i32_0 : i32, i32
  }
  func.func @transform_4(%arg0: i32) -> (i32, i32) {
    %c0_i32 = arith.constant 0 : i32
    %c0_i32_0 = arith.constant 0 : i32
    %c0_i32_1 = arith.constant 0 : i32
    return %c0_i32, %c0_i32_0 : i32, i32
  }
  func.func @transform_5(%arg0: i32) -> (i32, i32) {
    %c0_i32 = arith.constant 0 : i32
    %c0_i32_0 = arith.constant 0 : i32
    %c0_i32_1 = arith.constant 0 : i32
    return %c0_i32, %c0_i32_0 : i32, i32
  }
  func.func @transform_6(%arg0: i32) -> (i32, i32) {
    %c0_i32 = arith.constant 0 : i32
    %c0_i32_0 = arith.constant 0 : i32
    %c0_i32_1 = arith.constant 0 : i32
    return %c0_i32, %c0_i32_0 : i32, i32
  }
  func.func @transform_7(%arg0: i32) -> (i32, i32) {
    %c0_i32 = arith.constant 0 : i32
    %c0_i32_0 = arith.constant 0 : i32
    %c0_i32_1 = arith.constant 0 : i32
    return %c0_i32, %c0_i32_0 : i32, i32
  }
  func.func @transform_8(%arg0: i32) -> (i32, i32) {
    %c0_i32 = arith.constant 0 : i32
    %c0_i32_0 = arith.constant 0 : i32
    %c0_i32_1 = arith.constant 0 : i32
    return %c0_i32, %c0_i32_0 : i32, i32
  }
  func.func @transform_9(%arg0: i32) -> (i32, i32) {
    %c0_i32 = arith.constant 0 : i32
    %c0_i32_0 = arith.constant 0 : i32
    %c0_i32_1 = arith.constant 0 : i32
    return %c0_i32, %c0_i32_0 : i32, i32
  }
  func.func @transform_10(%arg0: i32) -> (i32, i32) {
    %c0_i32 = arith.constant 0 : i32
    %c0_i32_0 = arith.constant 0 : i32
    %c0_i32_1 = arith.constant 0 : i32
    return %c0_i32, %c0_i32_0 : i32, i32
  }
  func.func @transform_11(%arg0: i32) -> (i32, i32) {
    %c0_i32 = arith.constant 0 : i32
    %c0_i32_0 = arith.constant 0 : i32
    %c0_i32_1 = arith.constant 0 : i32
    return %c0_i32, %c0_i32_0 : i32, i32
  }
  func.func @transform_12(%arg0: i32) -> (i32, i32) {
    %c0_i32 = arith.constant 0 : i32
    %c0_i32_0 = arith.constant 0 : i32
    %c0_i32_1 = arith.constant 0 : i32
    return %c0_i32, %c0_i32_0 : i32, i32
  }
  func.func @transform_13(%arg0: i32) -> (i32, i32) {
    %c0_i32 = arith.constant 0 : i32
    %c0_i32_0 = arith.constant 0 : i32
    %c0_i32_1 = arith.constant 0 : i32
    return %c0_i32, %c0_i32_0 : i32, i32
  }
  func.func @transform_14(%arg0: i32) -> (i32, i32) {
    %c0_i32 = arith.constant 0 : i32
    %c0_i32_0 = arith.constant 0 : i32
    %c0_i32_1 = arith.constant 0 : i32
    return %c0_i32, %c0_i32_0 : i32, i32
  }
  func.func @transform_15(%arg0: i32) -> (i32, i32) {
    %c0_i32 = arith.constant 0 : i32
    %c0_i32_0 = arith.constant 0 : i32
    %c0_i32_1 = arith.constant 0 : i32
    return %c0_i32, %c0_i32_0 : i32, i32
  }
  func.func @transform_16(%arg0: i32) -> (i32, i32) {
    %c0_i32 = arith.constant 0 : i32
    %c0_i32_0 = arith.constant 0 : i32
    %c0_i32_1 = arith.constant 0 : i32
    return %c0_i32, %c0_i32_0 : i32, i32
  }
  func.func @transform_17(%arg0: i32) -> (i32, i32) {
    %c0_i32 = arith.constant 0 : i32
    %c0_i32_0 = arith.constant 0 : i32
    %c0_i32_1 = arith.constant 0 : i32
    return %c0_i32, %c0_i32_0 : i32, i32
  }
  func.func @transform_18(%arg0: i32) -> (i32, i32) {
    %c0_i32 = arith.constant 0 : i32
    %c0_i32_0 = arith.constant 0 : i32
    %c0_i32_1 = arith.constant 0 : i32
    return %c0_i32, %c0_i32_0 : i32, i32
  }
  func.func @transform_19(%arg0: i32) -> (i32, i32) {
    %c0_i32 = arith.constant 0 : i32
    %c0_i32_0 = arith.constant 0 : i32
    %c0_i32_1 = arith.constant 0 : i32
    return %c0_i32, %c0_i32_0 : i32, i32
  }
  func.func @transform_20(%arg0: i32) -> (i32, i32) {
    %c0_i32 = arith.constant 0 : i32
    %c0_i32_0 = arith.constant 0 : i32
    %c0_i32_1 = arith.constant 0 : i32
    return %c0_i32, %c0_i32_0 : i32, i32
  }
  func.func @transform_21(%arg0: i32) -> (i32, i32) {
    %c0_i32 = arith.constant 0 : i32
    %c0_i32_0 = arith.constant 0 : i32
    %c0_i32_1 = arith.constant 0 : i32
    return %c0_i32, %c0_i32_0 : i32, i32
  }
  func.func @transform_22(%arg0: i32) -> (i32, i32, i32) {
    %c0_i32 = arith.constant 0 : i32
    %c0_i32_0 = arith.constant 0 : i32
    %c0_i32_1 = arith.constant 0 : i32
    return %arg0, %c0_i32, %c0_i32_0 : i32, i32, i32
  }
}

</mosaic_0001>

<llo_original>
// kernel: tpu_custom_call.1
$region0: #{tpu_custom_call.1}
  #allocation0 [shape = 'u32[]', space=smem, size = 0x4, offset = 0x4, fixed_abs, tag = 'smem constant byte address 0x4 - core index']
  #allocation1 [shape = 'u32[144,128]{1,0:T(1,128)}', space=vmem, size = 0x12000, scoped, tag = 'internal scratch']
  %s0 = inlined_call_operand.vmem [shape: f32[2,64,32], index: 0, kind: input, shape index: {}]
  %s1 = inlined_call_operand.vmem [shape: f32[64,64], index: 1, kind: input, shape index: {}]
  %s2 = inlined_call_operand.vmem [shape: f32[64,1], index: 2, kind: input, shape index: {}]
  %s3 = inlined_call_operand.vmem [shape: f32[64,64], index: 3, kind: input, shape index: {}]
  %s4 = inlined_call_operand.vmem [shape: f32[64,1], index: 4, kind: input, shape index: {}]
  %s5 = inlined_call_operand.vmem [shape: f32[288,32], index: 5, kind: input, shape index: {}]
  %s6 = inlined_call_operand.vmem [shape: f32[1,32], index: 6, kind: input, shape index: {}]
  %s7 = inlined_call_operand.vmem [shape: f32[32,32], index: 7, kind: input, shape index: {}]
  %s8 = inlined_call_operand.vmem [shape: f32[1,32], index: 8, kind: input, shape index: {}]
  %s9 = inlined_call_operand.vmem [shape: f32[288,32], index: 9, kind: input, shape index: {}]
  %s10 = inlined_call_operand.vmem [shape: f32[1,32], index: 10, kind: input, shape index: {}]
  %s11 = inlined_call_operand.vmem [shape: f32[32,32], index: 11, kind: input, shape index: {}]
  %s12 = inlined_call_operand.vmem [shape: f32[1,32], index: 12, kind: input, shape index: {}]
  %s13 = inlined_call_operand.vmem [shape: f32[32,4], index: 13, kind: input, shape index: {}]
  %s14 = inlined_call_operand.vmem [shape: f32[1,4], index: 14, kind: input, shape index: {}]
  %s15 = inlined_call_operand.vmem [shape: f32[32,4], index: 15, kind: input, shape index: {}]
  %s16 = inlined_call_operand.vmem [shape: f32[1,4], index: 16, kind: input, shape index: {}]
  %s17 = inlined_call_operand.vmem [shape: f32[32,32], index: 17, kind: input, shape index: {}]
  %s18 = inlined_call_operand.vmem [shape: f32[1,32], index: 18, kind: input, shape index: {}]
  %s19 = inlined_call_operand.vmem [shape: f32[288,32], index: 19, kind: input, shape index: {}]
  %s20 = inlined_call_operand.vmem [shape: f32[288,32], index: 20, kind: input, shape index: {}]
  %s21 = inlined_call_operand.vmem [shape: f32[1,32], index: 21, kind: input, shape index: {}]
  %s22 = inlined_call_operand.vmem [shape: f32[2,64,32], index: 22, kind: output, shape index: {}]
  %s23 = sld [smem:[#allocation0]]
  $region121: #{tpu_custom_call.1} parent=0
    _
  %s25 = ssub.s32 1, %s23
  %s26 = scalar_select 0, %s25, %s23
  loop: start=0, step=1, limit=4
  $region2: #{tpu_custom_call.1} parent=0 // loop_pre_header
    _
  $region3: #{tpu_custom_call.1} parent=0 // loop_header
    %s28 = sphi 0, %s32
    %p29 = scmp.ge.s32.totalorder %s28, 4
    %s38 = sphi 0, %s40
    %s41 = sphi 0, %s38
    %s42 = sphi 0, %s41
    %s58 = sphi 0, %s42
    %s62 = sphi 0, %s62
    %s64 = sphi 0, %s62
    %s65 = sphi 0, %s64
    %s79 = sphi 0, %s65
    %s83 = sphi 0, %s83
    %s85 = sphi 0, %s83
    %s86 = sphi 0, %s85
    %s100 = sphi 0, %s86
    %s104 = sphi 0, %s104
    %s106 = sphi 0, %s104
    %s107 = sphi 0, %s106
    %s121 = sphi 0, %s107
    %s125 = sphi 0, %s125
    %s127 = sphi 0, %s125
    %s128 = sphi 0, %s127
    %s142 = sphi 0, %s128
    %s146 = sphi 0, %s146
    %s148 = sphi 0, %s146
    %s149 = sphi 0, %s148
    %s163 = sphi 0, %s149
    %s167 = sphi 0, %s167
    %s169 = sphi 0, %s167
    %s170 = sphi 0, %s169
    %s184 = sphi 0, %s170
    %s188 = sphi 0, %s188
    %s190 = sphi 0, %s188
    %s191 = sphi 0, %s190
    %s205 = sphi 0, %s191
    %s209 = sphi 0, %s209
    %s211 = sphi 0, %s209
    %s212 = sphi 0, %s211
    %s226 = sphi 0, %s212
    %s230 = sphi 0, %s230
    %s232 = sphi 0, %s230
    %s233 = sphi 0, %s232
    %s247 = sphi 0, %s233
    %s251 = sphi 0, %s251
    %s253 = sphi 0, %s251
    %s254 = sphi 0, %s253
    %s268 = sphi 0, %s254
    %s272 = sphi 0, %s272
    %s274 = sphi 0, %s272
    %s275 = sphi 0, %s274
    %s289 = sphi 0, %s275
    %s293 = sphi 0, %s293
    %s295 = sphi 0, %s293
    %s296 = sphi 0, %s295
    %s310 = sphi 0, %s296
    %s314 = sphi 0, %s314
    %s316 = sphi 0, %s314
    %s317 = sphi 0, %s316
    %s331 = sphi 0, %s317
    %s335 = sphi 0, %s335
    %s337 = sphi 0, %s335
    %s338 = sphi 0, %s337
    %s352 = sphi 0, %s338
    %s356 = sphi 0, %s356
    %s358 = sphi 0, %s356
    %s359 = sphi 0, %s358
    %s373 = sphi 0, %s359
    %s377 = sphi 0, %s377
    %s379 = sphi 0, %s377
    %s380 = sphi 0, %s379
    %s394 = sphi 0, %s380
    %s398 = sphi 0, %s398
    %s400 = sphi 0, %s398
    %s401 = sphi 0, %s400
    %s415 = sphi 0, %s401
    %s419 = sphi 0, %s419
    %s421 = sphi 0, %s419
    %s422 = sphi 0, %s421
    %s436 = sphi 0, %s422
    %s440 = sphi 0, %s440
    %s442 = sphi 0, %s440
    %s443 = sphi 0, %s442
    %s457 = sphi 0, %s443
    %s461 = sphi 0, %s461
    %s463 = sphi 0, %s461
    %s464 = sphi 0, %s463
    %s478 = sphi 0, %s464
    %s482 = sphi 0, %s482
    %s484 = sphi 0, %s482
    %s485 = sphi 0, %s484
    %s499 = sphi 0, %s485
    %s505 = sphi 0, %s507
    %s508 = sphi 0, %s505
    %s509 = sphi 0, %s508
    %s525 = sphi 0, %s509
  $region4: #{tpu_custom_call.1} parent=0 // loop_header_branch
    %31 = sbr.rel (%p29) target = $region8
  $region5: #{tpu_custom_call.1} parent=0 // loop_body
    %s33 = ssub.s32 %s28, 1
    %s34 = ssub.s32 %s28, 2
    %s35 = sadd.s32 %s28, 1
    %s36 = ssub.s32 %s28, %s35
    %p37 = scmp.eq.s32.totalorder %s36, 0
    %s39 = sadd.s32 %s38, 1
    %s40 = scalar_select %p37, %s38, %s39
    %p43 = pneg %p37
    %p44 = scmp.eq.s32.totalorder %s28, 1
    %p45 = por %p43, %p44
    %p46 = scmp.ne.s32.totalorder %s38, %s41
    %p47 = scmp.eq.s32.totalorder %s28, 0
    %p48 = por %p46, %p47
    %p49 = scmp.ne.s32.totalorder %s38, %s41
    %p50 = scmp.eq.s32.totalorder %s33, 1
    %p51 = por %p49, %p50
    %p52 = scmp.ne.s32.totalorder %s41, %s42
    %p53 = scmp.eq.s32.totalorder %s33, 0
    %p54 = por %p52, %p53
    %p55 = scmp.ne.s32.totalorder %s41, %s42
    %p56 = scmp.eq.s32.totalorder %s34, 1
    %p57 = por %p55, %p56
    %p59 = scmp.ne.s32.totalorder %s42, %s58
    %p60 = scmp.eq.s32.totalorder %s34, 0
    %p61 = por %p59, %p60
    %s63 = sadd.s32 %s62, 1
    %p66 = scmp.eq.s32.totalorder %s28, 1
    %p67 = scmp.ne.s32.totalorder %s62, %s64
    %p68 = scmp.eq.s32.totalorder %s28, 0
    %p69 = por %p67, %p68
    %p70 = scmp.ne.s32.totalorder %s62, %s64
    %p71 = scmp.eq.s32.totalorder %s33, 1
    %p72 = por %p70, %p71
    %p73 = scmp.ne.s32.totalorder %s64, %s65
    %p74 = scmp.eq.s32.totalorder %s33, 0
    %p75 = por %p73, %p74
    %p76 = scmp.ne.s32.totalorder %s64, %s65
    %p77 = scmp.eq.s32.totalorder %s34, 1
    %p78 = por %p76, %p77
    %p80 = scmp.ne.s32.totalorder %s65, %s79
    %p81 = scmp.eq.s32.totalorder %s34, 0
    %p82 = por %p80, %p81
    %s84 = sadd.s32 %s83, 1
    %p87 = scmp.eq.s32.totalorder %s28, 1
    %p88 = scmp.ne.s32.totalorder %s83, %s85
    %p89 = scmp.eq.s32.totalorder %s28, 0
    %p90 = por %p88, %p89
    %p91 = scmp.ne.s32.totalorder %s83, %s85
    %p92 = scmp.eq.s32.totalorder %s33, 1
    %p93 = por %p91, %p92
    %p94 = scmp.ne.s32.totalorder %s85, %s86
    %p95 = scmp.eq.s32.totalorder %s33, 0
    %p96 = por %p94, %p95
    %p97 = scmp.ne.s32.totalorder %s85, %s86
    %p98 = scmp.eq.s32.totalorder %s34, 1
    %p99 = por %p97, %p98
    %p101 = scmp.ne.s32.totalorder %s86, %s100
    %p102 = scmp.eq.s32.totalorder %s34, 0
    %p103 = por %p101, %p102
    %s105 = sadd.s32 %s104, 1
    %p108 = scmp.eq.s32.totalorder %s28, 1
    %p109 = scmp.ne.s32.totalorder %s104, %s106
    %p110 = scmp.eq.s32.totalorder %s28, 0
    %p111 = por %p109, %p110
    %p112 = scmp.ne.s32.totalorder %s104, %s106
    %p113 = scmp.eq.s32.totalorder %s33, 1
    %p114 = por %p112, %p113
    %p115 = scmp.ne.s32.totalorder %s106, %s107
    %p116 = scmp.eq.s32.totalorder %s33, 0
    %p117 = por %p115, %p116
    %p118 = scmp.ne.s32.totalorder %s106, %s107
    %p119 = scmp.eq.s32.totalorder %s34, 1
    %p120 = por %p118, %p119
    %p122 = scmp.ne.s32.totalorder %s107, %s121
    %p123 = scmp.eq.s32.totalorder %s34, 0
    %p124 = por %p122, %p123
    %s126 = sadd.s32 %s125, 1
    %p129 = scmp.eq.s32.totalorder %s28, 1
    %p130 = scmp.ne.s32.totalorder %s125, %s127
    %p131 = scmp.eq.s32.totalorder %s28, 0
    %p132 = por %p130, %p131
    %p133 = scmp.ne.s32.totalorder %s125, %s127
    %p134 = scmp.eq.s32.totalorder %s33, 1
    %p135 = por %p133, %p134
    %p136 = scmp.ne.s32.totalorder %s127, %s128
    %p137 = scmp.eq.s32.totalorder %s33, 0
    %p138 = por %p136, %p137
    %p139 = scmp.ne.s32.totalorder %s127, %s128
    %p140 = scmp.eq.s32.totalorder %s34, 1
    %p141 = por %p139, %p140
    %p143 = scmp.ne.s32.totalorder %s128, %s142
    %p144 = scmp.eq.s32.totalorder %s34, 0
    %p145 = por %p143, %p144
    %s147 = sadd.s32 %s146, 1
    %p150 = scmp.eq.s32.totalorder %s28, 1
    %p151 = scmp.ne.s32.totalorder %s146, %s148
    %p152 = scmp.eq.s32.totalorder %s28, 0
    %p153 = por %p151, %p152
    %p154 = scmp.ne.s32.totalorder %s146, %s148
    %p155 = scmp.eq.s32.totalorder %s33, 1
    %p156 = por %p154, %p155
    %p157 = scmp.ne.s32.totalorder %s148, %s149
    %p158 = scmp.eq.s32.totalorder %s33, 0
    %p159 = por %p157, %p158
    %p160 = scmp.ne.s32.totalorder %s148, %s149
    %p161 = scmp.eq.s32.totalorder %s34, 1
    %p162 = por %p160, %p161
    %p164 = scmp.ne.s32.totalorder %s149, %s163
    %p165 = scmp.eq.s32.totalorder %s34, 0
    %p166 = por %p164, %p165
    %s168 = sadd.s32 %s167, 1
    %p171 = scmp.eq.s32.totalorder %s28, 1
    %p172 = scmp.ne.s32.totalorder %s167, %s169
    %p173 = scmp.eq.s32.totalorder %s28, 0
    %p174 = por %p172, %p173
    %p175 = scmp.ne.s32.totalorder %s167, %s169
    %p176 = scmp.eq.s32.totalorder %s33, 1
    %p177 = por %p175, %p176
    %p178 = scmp.ne.s32.totalorder %s169, %s170
    %p179 = scmp.eq.s32.totalorder %s33, 0
    %p180 = por %p178, %p179
    %p181 = scmp.ne.s32.totalorder %s169, %s170
    %p182 = scmp.eq.s32.totalorder %s34, 1
    %p183 = por %p181, %p182
    %p185 = scmp.ne.s32.totalorder %s170, %s184
    %p186 = scmp.eq.s32.totalorder %s34, 0
    %p187 = por %p185, %p186
    %s189 = sadd.s32 %s188, 1
    %p192 = scmp.eq.s32.totalorder %s28, 1
    %p193 = scmp.ne.s32.totalorder %s188, %s190
    %p194 = scmp.eq.s32.totalorder %s28, 0
    %p195 = por %p193, %p194
    %p196 = scmp.ne.s32.totalorder %s188, %s190
    %p197 = scmp.eq.s32.totalorder %s33, 1
    %p198 = por %p196, %p197
    %p199 = scmp.ne.s32.totalorder %s190, %s191
    %p200 = scmp.eq.s32.totalorder %s33, 0
    %p201 = por %p199, %p200
    %p202 = scmp.ne.s32.totalorder %s190, %s191
    %p203 = scmp.eq.s32.totalorder %s34, 1
    %p204 = por %p202, %p203
    %p206 = scmp.ne.s32.totalorder %s191, %s205
    %p207 = scmp.eq.s32.totalorder %s34, 0
    %p208 = por %p206, %p207
    %s210 = sadd.s32 %s209, 1
    %p213 = scmp.eq.s32.totalorder %s28, 1
    %p214 = scmp.ne.s32.totalorder %s209, %s211
    %p215 = scmp.eq.s32.totalorder %s28, 0
    %p216 = por %p214, %p215
    %p217 = scmp.ne.s32.totalorder %s209, %s211
    %p218 = scmp.eq.s32.totalorder %s33, 1
    %p219 = por %p217, %p218
    %p220 = scmp.ne.s32.totalorder %s211, %s212
    %p221 = scmp.eq.s32.totalorder %s33, 0
    %p222 = por %p220, %p221
    %p223 = scmp.ne.s32.totalorder %s211, %s212
    %p224 = scmp.eq.s32.totalorder %s34, 1
    %p225 = por %p223, %p224
    %p227 = scmp.ne.s32.totalorder %s212, %s226
    %p228 = scmp.eq.s32.totalorder %s34, 0
    %p229 = por %p227, %p228
    %s231 = sadd.s32 %s230, 1
    %p234 = scmp.eq.s32.totalorder %s28, 1
    %p235 = scmp.ne.s32.totalorder %s230, %s232
    %p236 = scmp.eq.s32.totalorder %s28, 0
    %p237 = por %p235, %p236
    %p238 = scmp.ne.s32.totalorder %s230, %s232
    %p239 = scmp.eq.s32.totalorder %s33, 1
    %p240 = por %p238, %p239
    %p241 = scmp.ne.s32.totalorder %s232, %s233
    %p242 = scmp.eq.s32.totalorder %s33, 0
    %p243 = por %p241, %p242
    %p244 = scmp.ne.s32.totalorder %s232, %s233
    %p245 = scmp.eq.s32.totalorder %s34, 1
    %p246 = por %p244, %p245
    %p248 = scmp.ne.s32.totalorder %s233, %s247
    %p249 = scmp.eq.s32.totalorder %s34, 0
    %p250 = por %p248, %p249
    %s252 = sadd.s32 %s251, 1
    %p255 = scmp.eq.s32.totalorder %s28, 1
    %p256 = scmp.ne.s32.totalorder %s251, %s253
    %p257 = scmp.eq.s32.totalorder %s28, 0
    %p258 = por %p256, %p257
    %p259 = scmp.ne.s32.totalorder %s251, %s253
    %p260 = scmp.eq.s32.totalorder %s33, 1
    %p261 = por %p259, %p260
    %p262 = scmp.ne.s32.totalorder %s253, %s254
    %p263 = scmp.eq.s32.totalorder %s33, 0
    %p264 = por %p262, %p263
    %p265 = scmp.ne.s32.totalorder %s253, %s254
    %p266 = scmp.eq.s32.totalorder %s34, 1
    %p267 = por %p265, %p266
    %p269 = scmp.ne.s32.totalorder %s254, %s268
    %p270 = scmp.eq.s32.totalorder %s34, 0
    %p271 = por %p269, %p270
    %s273 = sadd.s32 %s272, 1
    %p276 = scmp.eq.s32.totalorder %s28, 1
    %p277 = scmp.ne.s32.totalorder %s272, %s274
    %p278 = scmp.eq.s32.totalorder %s28, 0
    %p279 = por %p277, %p278
    %p280 = scmp.ne.s32.totalorder %s272, %s274
    %p281 = scmp.eq.s32.totalorder %s33, 1
    %p282 = por %p280, %p281
    %p283 = scmp.ne.s32.totalorder %s274, %s275
    %p284 = scmp.eq.s32.totalorder %s33, 0
    %p285 = por %p283, %p284
    %p286 = scmp.ne.s32.totalorder %s274, %s275
    %p287 = scmp.eq.s32.totalorder %s34, 1
    %p288 = por %p286, %p287
    %p290 = scmp.ne.s32.totalorder %s275, %s289
    %p291 = scmp.eq.s32.totalorder %s34, 0
    %p292 = por %p290, %p291
    %s294 = sadd.s32 %s293, 1
    %p297 = scmp.eq.s32.totalorder %s28, 1
    %p298 = scmp.ne.s32.totalorder %s293, %s295
    %p299 = scmp.eq.s32.totalorder %s28, 0
    %p300 = por %p298, %p299
    %p301 = scmp.ne.s32.totalorder %s293, %s295
    %p302 = scmp.eq.s32.totalorder %s33, 1
    %p303 = por %p301, %p302
    %p304 = scmp.ne.s32.totalorder %s295, %s296
    %p305 = scmp.eq.s32.totalorder %s33, 0
    %p306 = por %p304, %p305
    %p307 = scmp.ne.s32.totalorder %s295, %s296
    %p308 = scmp.eq.s32.totalorder %s34, 1
    %p309 = por %p307, %p308
    %p311 = scmp.ne.s32.totalorder %s296, %s310
    %p312 = scmp.eq.s32.totalorder %s34, 0
    %p313 = por %p311, %p312
    %s315 = sadd.s32 %s314, 1
    %p318 = scmp.eq.s32.totalorder %s28, 1
    %p319 = scmp.ne.s32.totalorder %s314, %s316
    %p320 = scmp.eq.s32.totalorder %s28, 0
    %p321 = por %p319, %p320
    %p322 = scmp.ne.s32.totalorder %s314, %s316
    %p323 = scmp.eq.s32.totalorder %s33, 1
    %p324 = por %p322, %p323
    %p325 = scmp.ne.s32.totalorder %s316, %s317
    %p326 = scmp.eq.s32.totalorder %s33, 0
    %p327 = por %p325, %p326
    %p328 = scmp.ne.s32.totalorder %s316, %s317
    %p329 = scmp.eq.s32.totalorder %s34, 1
    %p330 = por %p328, %p329
    %p332 = scmp.ne.s32.totalorder %s317, %s331
    %p333 = scmp.eq.s32.totalorder %s34, 0
    %p334 = por %p332, %p333
    %s336 = sadd.s32 %s335, 1
    %p339 = scmp.eq.s32.totalorder %s28, 1
    %p340 = scmp.ne.s32.totalorder %s335, %s337
    %p341 = scmp.eq.s32.totalorder %s28, 0
    %p342 = por %p340, %p341
    %p343 = scmp.ne.s32.totalorder %s335, %s337
    %p344 = scmp.eq.s32.totalorder %s33, 1
    %p345 = por %p343, %p344
    %p346 = scmp.ne.s32.totalorder %s337, %s338
    %p347 = scmp.eq.s32.totalorder %s33, 0
    %p348 = por %p346, %p347
    %p349 = scmp.ne.s32.totalorder %s337, %s338
    %p350 = scmp.eq.s32.totalorder %s34, 1
    %p351 = por %p349, %p350
    %p353 = scmp.ne.s32.totalorder %s338, %s352
    %p354 = scmp.eq.s32.totalorder %s34, 0
    %p355 = por %p353, %p354
    %s357 = sadd.s32 %s356, 1
    %p360 = scmp.eq.s32.totalorder %s28, 1
    %p361 = scmp.ne.s32.totalorder %s356, %s358
    %p362 = scmp.eq.s32.totalorder %s28, 0
    %p363 = por %p361, %p362
    %p364 = scmp.ne.s32.totalorder %s356, %s358
    %p365 = scmp.eq.s32.totalorder %s33, 1
    %p366 = por %p364, %p365
    %p367 = scmp.ne.s32.totalorder %s358, %s359
    %p368 = scmp.eq.s32.totalorder %s33, 0
    %p369 = por %p367, %p368
    %p370 = scmp.ne.s32.totalorder %s358, %s359
    %p371 = scmp.eq.s32.totalorder %s34, 1
    %p372 = por %p370, %p371
    %p374 = scmp.ne.s32.totalorder %s359, %s373
    %p375 = scmp.eq.s32.totalorder %s34, 0
    %p376 = por %p374, %p375
    %s378 = sadd.s32 %s377, 1
    %p381 = scmp.eq.s32.totalorder %s28, 1
    %p382 = scmp.ne.s32.totalorder %s377, %s379
    %p383 = scmp.eq.s32.totalorder %s28, 0
    %p384 = por %p382, %p383
    %p385 = scmp.ne.s32.totalorder %s377, %s379
    %p386 = scmp.eq.s32.totalorder %s33, 1
    %p387 = por %p385, %p386
    %p388 = scmp.ne.s32.totalorder %s379, %s380
    %p389 = scmp.eq.s32.totalorder %s33, 0
    %p390 = por %p388, %p389
    %p391 = scmp.ne.s32.totalorder %s379, %s380
    %p392 = scmp.eq.s32.totalorder %s34, 1
    %p393 = por %p391, %p392
    %p395 = scmp.ne.s32.totalorder %s380, %s394
    %p396 = scmp.eq.s32.totalorder %s34, 0
    %p397 = por %p395, %p396
    %s399 = sadd.s32 %s398, 1
    %p402 = scmp.eq.s32.totalorder %s28, 1
    %p403 = scmp.ne.s32.totalorder %s398, %s400
    %p404 = scmp.eq.s32.totalorder %s28, 0
    %p405 = por %p403, %p404
    %p406 = scmp.ne.s32.totalorder %s398, %s400
    %p407 = scmp.eq.s32.totalorder %s33, 1
    %p408 = por %p406, %p407
    %p409 = scmp.ne.s32.totalorder %s400, %s401
    %p410 = scmp.eq.s32.totalorder %s33, 0
    %p411 = por %p409, %p410
    %p412 = scmp.ne.s32.totalorder %s400, %s401
    %p413 = scmp.eq.s32.totalorder %s34, 1
    %p414 = por %p412, %p413
    %p416 = scmp.ne.s32.totalorder %s401, %s415
    %p417 = scmp.eq.s32.totalorder %s34, 0
    %p418 = por %p416, %p417
    %s420 = sadd.s32 %s419, 1
    %p423 = scmp.eq.s32.totalorder %s28, 1
    %p424 = scmp.ne.s32.totalorder %s419, %s421
    %p425 = scmp.eq.s32.totalorder %s28, 0
    %p426 = por %p424, %p425
    %p427 = scmp.ne.s32.totalorder %s419, %s421
    %p428 = scmp.eq.s32.totalorder %s33, 1
    %p429 = por %p427, %p428
    %p430 = scmp.ne.s32.totalorder %s421, %s422
    %p431 = scmp.eq.s32.totalorder %s33, 0
    %p432 = por %p430, %p431
    %p433 = scmp.ne.s32.totalorder %s421, %s422
    %p434 = scmp.eq.s32.totalorder %s34, 1
    %p435 = por %p433, %p434
    %p437 = scmp.ne.s32.totalorder %s422, %s436
    %p438 = scmp.eq.s32.totalorder %s34, 0
    %p439 = por %p437, %p438
    %s441 = sadd.s32 %s440, 1
    %p444 = scmp.eq.s32.totalorder %s28, 1
    %p445 = scmp.ne.s32.totalorder %s440, %s442
    %p446 = scmp.eq.s32.totalorder %s28, 0
    %p447 = por %p445, %p446
    %p448 = scmp.ne.s32.totalorder %s440, %s442
    %p449 = scmp.eq.s32.totalorder %s33, 1
    %p450 = por %p448, %p449
    %p451 = scmp.ne.s32.totalorder %s442, %s443
    %p452 = scmp.eq.s32.totalorder %s33, 0
    %p453 = por %p451, %p452
    %p454 = scmp.ne.s32.totalorder %s442, %s443
    %p455 = scmp.eq.s32.totalorder %s34, 1
    %p456 = por %p454, %p455
    %p458 = scmp.ne.s32.totalorder %s443, %s457
    %p459 = scmp.eq.s32.totalorder %s34, 0
    %p460 = por %p458, %p459
    %s462 = sadd.s32 %s461, 1
    %p465 = scmp.eq.s32.totalorder %s28, 1
    %p466 = scmp.ne.s32.totalorder %s461, %s463
    %p467 = scmp.eq.s32.totalorder %s28, 0
    %p468 = por %p466, %p467
    %p469 = scmp.ne.s32.totalorder %s461, %s463
    %p470 = scmp.eq.s32.totalorder %s33, 1
    %p471 = por %p469, %p470
    %p472 = scmp.ne.s32.totalorder %s463, %s464
    %p473 = scmp.eq.s32.totalorder %s33, 0
    %p474 = por %p472, %p473
    %p475 = scmp.ne.s32.totalorder %s463, %s464
    %p476 = scmp.eq.s32.totalorder %s34, 1
    %p477 = por %p475, %p476
    %p479 = scmp.ne.s32.totalorder %s464, %s478
    %p480 = scmp.eq.s32.totalorder %s34, 0
    %p481 = por %p479, %p480
    %s483 = sadd.s32 %s482, 1
    %p486 = scmp.eq.s32.totalorder %s28, 1
    %p487 = scmp.ne.s32.totalorder %s482, %s484
    %p488 = scmp.eq.s32.totalorder %s28, 0
    %p489 = por %p487, %p488
    %p490 = scmp.ne.s32.totalorder %s482, %s484
    %p491 = scmp.eq.s32.totalorder %s33, 1
    %p492 = por %p490, %p491
    %p493 = scmp.ne.s32.totalorder %s484, %s485
    %p494 = scmp.eq.s32.totalorder %s33, 0
    %p495 = por %p493, %p494
    %p496 = scmp.ne.s32.totalorder %s484, %s485
    %p497 = scmp.eq.s32.totalorder %s34, 1
    %p498 = por %p496, %p497
    %p500 = scmp.ne.s32.totalorder %s485, %s499
    %p501 = scmp.eq.s32.totalorder %s34, 0
    %p502 = por %p500, %p501
    %s503 = ssub.s32 %s28, %s35
    %p504 = scmp.eq.s32.totalorder %s503, 0
    %s506 = sadd.s32 %s505, 1
    %s507 = scalar_select %p504, %s505, %s506
    %p510 = pneg %p504
    %p511 = scmp.eq.s32.totalorder %s28, 1
    %p512 = por %p510, %p511
    %p513 = scmp.ne.s32.totalorder %s505, %s508
    %p514 = scmp.eq.s32.totalorder %s28, 0
    %p515 = por %p513, %p514
    %p516 = scmp.ne.s32.totalorder %s505, %s508
    %p517 = scmp.eq.s32.totalorder %s33, 1
    %p518 = por %p516, %p517
    %p519 = scmp.ne.s32.totalorder %s508, %s509
    %p520 = scmp.eq.s32.totalorder %s33, 0
    %p521 = por %p519, %p520
    %p522 = scmp.ne.s32.totalorder %s508, %s509
    %p523 = scmp.eq.s32.totalorder %s34, 1
    %p524 = por %p522, %p523
    %p526 = scmp.ne.s32.totalorder %s509, %s525
    %p527 = scmp.eq.s32.totalorder %s34, 0
    %p528 = por %p526, %p527
    %p529 = scmp.le.s32.totalorder 1, %s28
    %p530 = scmp.lt.s32.totalorder %s28, 3
    %p531 = pnand %p529, %p530
    %p532 = pneg %p531
    // Predicated region
    $region9: #{tpu_custom_call.1} parent=5 // pred_check
      _
    $region10: #{tpu_custom_call.1} parent=5 // pred_check_branch
      %534 = sbr.rel (%p531) target = $region12
    $region11: #{tpu_custom_call.1} parent=5 // pred_region
      %s535 = ssub.s32 %s28, 1
      // Predicated region
      $region13: #{tpu_custom_call.1} parent=11 // pred_check
        %p536 = pneg %p75
      $region14: #{tpu_custom_call.1} parent=11 // pred_check_branch
        %538 = sbr.rel (%p536) target = $region16
      $region15: #{tpu_custom_call.1} parent=11 // pred_region
        _
      $region16: #{tpu_custom_call.1} parent=11 // pred_fallthru
        _
      // Predicated region
      $region17: #{tpu_custom_call.1} parent=11 // pred_check
        %p539 = pneg %p96
      $region18: #{tpu_custom_call.1} parent=11 // pred_check_branch
        %541 = sbr.rel (%p539) target = $region20
      $region19: #{tpu_custom_call.1} parent=11 // pred_region
        _
      $region20: #{tpu_custom_call.1} parent=11 // pred_fallthru
        _
      // Predicated region
      $region21: #{tpu_custom_call.1} parent=11 // pred_check
        %p542 = pneg %p117
      $region22: #{tpu_custom_call.1} parent=11 // pred_check_branch
        %544 = sbr.rel (%p542) target = $region24
      $region23: #{tpu_custom_call.1} parent=11 // pred_region
        _
      $region24: #{tpu_custom_call.1} parent=11 // pred_fallthru
        _
      // Predicated region
      $region25: #{tpu_custom_call.1} parent=11 // pred_check
        %p545 = pneg %p138
      $region26: #{tpu_custom_call.1} parent=11 // pred_check_branch
        %547 = sbr.rel (%p545) target = $region28
      $region27: #{tpu_custom_call.1} parent=11 // pred_region
        _
      $region28: #{tpu_custom_call.1} parent=11 // pred_fallthru
        _
      // Predicated region
      $region29: #{tpu_custom_call.1} parent=11 // pred_check
        %p548 = pneg %p159
      $region30: #{tpu_custom_call.1} parent=11 // pred_check_branch
        %550 = sbr.rel (%p548) target = $region32
      $region31: #{tpu_custom_call.1} parent=11 // pred_region
        _
      $region32: #{tpu_custom_call.1} parent=11 // pred_fallthru
        _
      // Predicated region
      $region33: #{tpu_custom_call.1} parent=11 // pred_check
        %p551 = pneg %p180
      $region34: #{tpu_custom_call.1} parent=11 // pred_check_branch
        %553 = sbr.rel (%p551) target = $region36
      $region35: #{tpu_custom_call.1} parent=11 // pred_region
        _
      $region36: #{tpu_custom_call.1} parent=11 // pred_fallthru
        _
      // Predicated region
      $region37: #{tpu_custom_call.1} parent=11 // pred_check
        %p554 = pneg %p201
      $region38: #{tpu_custom_call.1} parent=11 // pred_check_branch
        %556 = sbr.rel (%p554) target = $region40
      $region39: #{tpu_custom_call.1} parent=11 // pred_region
        _
      $region40: #{tpu_custom_call.1} parent=11 // pred_fallthru
        _
      // Predicated region
      $region41: #{tpu_custom_call.1} parent=11 // pred_check
        %p557 = pneg %p222
      $region42: #{tpu_custom_call.1} parent=11 // pred_check_branch
        %559 = sbr.rel (%p557) target = $region44
      $region43: #{tpu_custom_call.1} parent=11 // pred_region
        _
      $region44: #{tpu_custom_call.1} parent=11 // pred_fallthru
        _
      // Predicated region
      $region45: #{tpu_custom_call.1} parent=11 // pred_check
        %p560 = pneg %p243
      $region46: #{tpu_custom_call.1} parent=11 // pred_check_branch
        %562 = sbr.rel (%p560) target = $region48
      $region47: #{tpu_custom_call.1} parent=11 // pred_region
        _
      $region48: #{tpu_custom_call.1} parent=11 // pred_fallthru
        _
      // Predicated region
      $region49: #{tpu_custom_call.1} parent=11 // pred_check
        %p563 = pneg %p264
      $region50: #{tpu_custom_call.1} parent=11 // pred_check_branch
        %565 = sbr.rel (%p563) target = $region52
      $region51: #{tpu_custom_call.1} parent=11 // pred_region
        _
      $region52: #{tpu_custom_call.1} parent=11 // pred_fallthru
        _
      // Predicated region
      $region53: #{tpu_custom_call.1} parent=11 // pred_check
        %p566 = pneg %p285
      $region54: #{tpu_custom_call.1} parent=11 // pred_check_branch
        %568 = sbr.rel (%p566) target = $region56
      $region55: #{tpu_custom_call.1} parent=11 // pred_region
        _
      $region56: #{tpu_custom_call.1} parent=11 // pred_fallthru
        _
      // Predicated region
      $region57: #{tpu_custom_call.1} parent=11 // pred_check
        %p569 = pneg %p306
      $region58: #{tpu_custom_call.1} parent=11 // pred_check_branch
        %571 = sbr.rel (%p569) target = $region60
      $region59: #{tpu_custom_call.1} parent=11 // pred_region
        _
      $region60: #{tpu_custom_call.1} parent=11 // pred_fallthru
        _
      // Predicated region
      $region61: #{tpu_custom_call.1} parent=11 // pred_check
        %p572 = pneg %p327
      $region62: #{tpu_custom_call.1} parent=11 // pred_check_branch
        %574 = sbr.rel (%p572) target = $region64
      $region63: #{tpu_custom_call.1} parent=11 // pred_region
        _
      $region64: #{tpu_custom_call.1} parent=11 // pred_fallthru
        _
      // Predicated region
      $region65: #{tpu_custom_call.1} parent=11 // pred_check
        %p575 = pneg %p348
      $region66: #{tpu_custom_call.1} parent=11 // pred_check_branch
        %577 = sbr.rel (%p575) target = $region68
      $region67: #{tpu_custom_call.1} parent=11 // pred_region
        _
      $region68: #{tpu_custom_call.1} parent=11 // pred_fallthru
        _
      // Predicated region
      $region69: #{tpu_custom_call.1} parent=11 // pred_check
        %p578 = pneg %p369
      $region70: #{tpu_custom_call.1} parent=11 // pred_check_branch
        %580 = sbr.rel (%p578) target = $region72
      $region71: #{tpu_custom_call.1} parent=11 // pred_region
        _
      $region72: #{tpu_custom_call.1} parent=11 // pred_fallthru
        _
      // Predicated region
      $region73: #{tpu_custom_call.1} parent=11 // pred_check
        %p581 = pneg %p390
      $region74: #{tpu_custom_call.1} parent=11 // pred_check_branch
        %583 = sbr.rel (%p581) target = $region76
      $region75: #{tpu_custom_call.1} parent=11 // pred_region
        _
      $region76: #{tpu_custom_call.1} parent=11 // pred_fallthru
        _
      // Predicated region
      $region77: #{tpu_custom_call.1} parent=11 // pred_check
        %p584 = pneg %p411
      $region78: #{tpu_custom_call.1} parent=11 // pred_check_branch
        %586 = sbr.rel (%p584) target = $region80
      $region79: #{tpu_custom_call.1} parent=11 // pred_region
        _
      $region80: #{tpu_custom_call.1} parent=11 // pred_fallthru
        _
      // Predicated region
      $region81: #{tpu_custom_call.1} parent=11 // pred_check
        %p587 = pneg %p432
      $region82: #{tpu_custom_call.1} parent=11 // pred_check_branch
        %589 = sbr.rel (%p587) target = $region84
      $region83: #{tpu_custom_call.1} parent=11 // pred_region
        _
      $region84: #{tpu_custom_call.1} parent=11 // pred_fallthru
        _
      // Predicated region
      $region85: #{tpu_custom_call.1} parent=11 // pred_check
        %p590 = pneg %p453
      $region86: #{tpu_custom_call.1} parent=11 // pred_check_branch
        %592 = sbr.rel (%p590) target = $region88
      $region87: #{tpu_custom_call.1} parent=11 // pred_region
        _
      $region88: #{tpu_custom_call.1} parent=11 // pred_fallthru
        _
      // Predicated region
      $region89: #{tpu_custom_call.1} parent=11 // pred_check
        %p593 = pneg %p474
      $region90: #{tpu_custom_call.1} parent=11 // pred_check_branch
        %595 = sbr.rel (%p593) target = $region92
      $region91: #{tpu_custom_call.1} parent=11 // pred_region
        _
      $region92: #{tpu_custom_call.1} parent=11 // pred_fallthru
        _
      // Predicated region
      $region93: #{tpu_custom_call.1} parent=11 // pred_check
        %p596 = pneg %p495
      $region94: #{tpu_custom_call.1} parent=11 // pred_check_branch
        %598 = sbr.rel (%p596) target = $region96
      $region95: #{tpu_custom_call.1} parent=11 // pred_region
        _
      $region96: #{tpu_custom_call.1} parent=11 // pred_fallthru
        _
    $region12: #{tpu_custom_call.1} parent=5 // pred_fallthru
      _
    %p599 = scmp.lt.s32.totalorder %s28, 2
    // Predicated region
    $region97: #{tpu_custom_call.1} parent=5 // pred_check
      %p600 = pneg %p599
    $region98: #{tpu_custom_call.1} parent=5 // pred_check_branch
      %602 = sbr.rel (%p600) target = $region100
    $region99: #{tpu_custom_call.1} parent=5 // pred_region
      // Predicated region
      $region101: #{tpu_custom_call.1} parent=99 // pred_check
        %p603 = pneg %p48
      $region102: #{tpu_custom_call.1} parent=99 // pred_check_branch
        %605 = sbr.rel (%p603) target = $region104
      $region103: #{tpu_custom_call.1} parent=99 // pred_region
        %p606 = scmp.lt.s32.totalorder %s28, 1
        %s607 = scalar_select %p606, %s28, 1
        %s608 = smul.addr %s607, 8
        %s609 = smul.addr %s608, 8
        %s610 = scalar_lea.vmem %s0, %s609
      $region104: #{tpu_custom_call.1} parent=99 // pred_fallthru
        _
    $region100: #{tpu_custom_call.1} parent=5 // pred_fallthru
      _
    %p611 = scmp.le.s32.totalorder 1, %s28
    %p612 = scmp.lt.s32.totalorder %s28, 3
    %p613 = pnand %p611, %p612
    %p614 = pneg %p613
    // Predicated region
    $region105: #{tpu_custom_call.1} parent=5 // pred_check
      _
    $region106: #{tpu_custom_call.1} parent=5 // pred_check_branch
      %616 = sbr.rel (%p613) target = $region108
    $region107: #{tpu_custom_call.1} parent=5 // pred_region
      %s617 = ssub.s32 %s28, 1
      %p618 = scmp.lt.s32.totalorder %s33, 1
      %s619 = scalar_select %p618, %s33, 1
      %s620 = smul.addr %s619, 8
      %s621 = smul.addr %s620, 8
      %s622 = scalar_lea.vmem %s0, %s621
      %p623 = pneg %p54
      %p624 = pneg %p51
      %p625 = pneg %p75
      %p626 = pneg %p72
      %p627 = pneg %p96
      %p628 = pneg %p93
      %p629 = pneg %p117
      %p630 = pneg %p114
      %p631 = pneg %p138
      %p632 = pneg %p135
      %p633 = pneg %p159
      %p634 = pneg %p156
      %p635 = pneg %p180
      %p636 = pneg %p177
      %p637 = pneg %p201
      %p638 = pneg %p198
      %p639 = pneg %p222
      %p640 = pneg %p219
      %p641 = pneg %p243
      %p642 = pneg %p240
      %p643 = pneg %p264
      %p644 = pneg %p261
      %p645 = pneg %p285
      %p646 = pneg %p282
      %p647 = pneg %p306
      %p648 = pneg %p303
      %p649 = pneg %p327
      %p650 = pneg %p324
      %p651 = pneg %p348
      %p652 = pneg %p345
      %p653 = pneg %p369
      %p654 = pneg %p366
      %p655 = pneg %p390
      %p656 = pneg %p387
      %p657 = pneg %p411
      %p658 = pneg %p408
      %p659 = pneg %p432
      %p660 = pneg %p429
      %p661 = pneg %p453
      %p662 = pneg %p450
      %p663 = pneg %p474
      %p664 = pneg %p471
      %p665 = pneg %p495
      %p666 = pneg %p492
      %p667 = pneg %p521
      %p668 = pneg %p518
      %p669 = scmp.lt.s32.totalorder %s33, 1
      %s670 = scalar_select %p669, %s33, 1
      %s671 = smul.addr %s670, 8
      %s672 = smul.addr %s671, 8
      %s673 = scalar_lea.vmem %s22, %s672
      %p674 = scmp.lt.s32.totalorder %s33, 1
      %s675 = scalar_select %p674, %s33, 1
      %s676 = smul.addr %s675, 8
      %s677 = smul.addr %s676, 8
      %s678 = scalar_lea.vmem %s0, %s677
      %p679 = scmp.lt.s32.totalorder %s33, 1
      %s680 = scalar_select %p679, %s33, 1
      %s681 = smul.addr %s680, 8
      %s682 = smul.addr %s681, 8
      %s683 = scalar_lea.vmem %s22, %s682
      %v684 = vld [vmem:[%s678] sm:$0xff]
      %v685 = vld [vmem:[%s678 + $0x8] sm:$0xff]
      %v686 = vld [vmem:[%s678 + $0x10] sm:$0xff]
      %v687 = vld [vmem:[%s678 + $0x18] sm:$0xff]
      %v688 = vld [vmem:[%s678 + $0x20] sm:$0xff]
      %v689 = vld [vmem:[%s678 + $0x28] sm:$0xff]
      %v690 = vld [vmem:[%s678 + $0x30] sm:$0xff]
      %v691 = vld [vmem:[%s678 + $0x38] sm:$0xff]
      %v692 = vld [vmem:[%s1] sm:$0xff]
      %v693 = vld [vmem:[%s1 + $0x8] sm:$0xff]
      %v694 = vld [vmem:[%s1 + $0x10] sm:$0xff]
      %v695 = vld [vmem:[%s1 + $0x18] sm:$0xff]
      %v696 = vld [vmem:[%s1 + $0x20] sm:$0xff]
      %v697 = vld [vmem:[%s1 + $0x28] sm:$0xff]
      %v698 = vld [vmem:[%s1 + $0x30] sm:$0xff]
      %v699 = vld [vmem:[%s1 + $0x38] sm:$0xff]
      %v700 = vld [vmem:[%s2] sm:$0xff]
      %v701 = vld [vmem:[%s2 + $0x8] sm:$0xff]
      %v702 = vld [vmem:[%s2 + $0x10] sm:$0xff]
      %v703 = vld [vmem:[%s2 + $0x18] sm:$0xff]
      %v704 = vld [vmem:[%s2 + $0x20] sm:$0xff]
      %v705 = vld [vmem:[%s2 + $0x28] sm:$0xff]
      %v706 = vld [vmem:[%s2 + $0x30] sm:$0xff]
      %v707 = vld [vmem:[%s2 + $0x38] sm:$0xff]
      %709 = vset.pattern.permute.xlu0 0
      %710 = vperm.xlu0 %709, %v700
      %v711 = vpop.permute.xlu0 %710
      %714 = vset.pattern.permute.xlu0 0
      %715 = vperm.xlu0 %714, %v701
      %v716 = vpop.permute.xlu0 %715
      %719 = vset.pattern.permute.xlu0 0
      %720 = vperm.xlu0 %719, %v702
      %v721 = vpop.permute.xlu0 %720
      %724 = vset.pattern.permute.xlu0 0
      %725 = vperm.xlu0 %724, %v703
      %v726 = vpop.permute.xlu0 %725
      %729 = vset.pattern.permute.xlu0 0
      %730 = vperm.xlu0 %729, %v704
      %v731 = vpop.permute.xlu0 %730
      %734 = vset.pattern.permute.xlu0 0
      %735 = vperm.xlu0 %734, %v705
      %v736 = vpop.permute.xlu0 %735
      %739 = vset.pattern.permute.xlu0 0
      %740 = vperm.xlu0 %739, %v706
      %v741 = vpop.permute.xlu0 %740
      %744 = vset.pattern.permute.xlu0 0
      %745 = vperm.xlu0 %744, %v707
      %v746 = vpop.permute.xlu0 %745
      %vm748 = vcmask 523264
      %v750 = vsel %vm748, %v692, 0
      %v753 = vsel %vm748, %v693, 0
      %v756 = vsel %vm748, %v694, 0
      %v759 = vsel %vm748, %v695, 0
      %v762 = vsel %vm748, %v696, 0
      %v765 = vsel %vm748, %v697, 0
      %v768 = vsel %vm748, %v698, 0
      %v771 = vsel %vm748, %v699, 0
      %773 = vmatprep.subr.mxu0 0.0
      %774 = vmatpush1.msra.mxu0 0.0
      %775 = vmatprep.subr.mxu0 0.0
      %776 = vmatpush1.msra.mxu0 0.0
      %777 = vmatprep.subr.mxu0 0.0
      %778 = vmatpush1.msra.mxu0 0.0
      %779 = vmatprep.subr.mxu0 0.0
      %780 = vmatpush1.msra.mxu0 0.0
      %781 = vmatprep.subr.mxu0 0.0
      %782 = vmatpush1.msra.mxu0 0.0
      %783 = vmatprep.subr.mxu0 0.0
      %784 = vmatpush1.msra.mxu0 0.0
      %785 = vmatprep.subr.mxu0 0.0
      %786 = vmatpush1.msra.mxu0 0.0
      %787 = vmatprep.subr.mxu0 0.0
      %788 = vmatpush1.msra.mxu0 0.0
      %789 = vmatprep.subr.mxu0 0.0
      %790 = vmatpush1.msra.mxu0 %v691
      %791 = vmatprep.subr.mxu0 0.0
      %792 = vmatpush1.msra.mxu0 %v690
      %793 = vmatprep.subr.mxu0 0.0
      %794 = vmatpush1.msra.mxu0 %v689
      %795 = vmatprep.subr.mxu0 0.0
      %796 = vmatpush1.msra.mxu0 %v688
      %797 = vmatprep.subr.mxu0 0.0
      %798 = vmatpush1.msra.mxu0 %v687
      %799 = vmatprep.subr.mxu0 0.0
      %800 = vmatpush1.msra.mxu0 %v686
      %801 = vmatprep.subr.mxu0 0.0
      %802 = vmatpush1.msra.mxu0 %v685
      %803 = vmatprep.subr.mxu0 0.0
      %804 = vmatpush1.msra.mxu0 %v684
      %805 = vmatprep.subr.mxu0 0.0
      %806 = vmatpush2.msra.mxu0 0.0
      %807 = vmatprep.subr.mxu0 0.0
      %808 = vmatpush2.msra.mxu0 0.0
      %809 = vmatprep.subr.mxu0 0.0
      %810 = vmatpush2.msra.mxu0 0.0
      %811 = vmatprep.subr.mxu0 0.0
      %812 = vmatpush2.msra.mxu0 0.0
      %813 = vmatprep.subr.mxu0 0.0
      %814 = vmatpush2.msra.mxu0 0.0
      %815 = vmatprep.subr.mxu0 0.0
      %816 = vmatpush2.msra.mxu0 0.0
      %817 = vmatprep.subr.mxu0 0.0
      %818 = vmatpush2.msra.mxu0 0.0
      %819 = vmatprep.subr.mxu0 0.0
      %820 = vmatpush2.msra.mxu0 0.0
      %821 = vmatprep.subr.mxu0 0.0
      %822 = vmatpush2.msra.mxu0 0.0
      %823 = vmatprep.subr.mxu0 0.0
      %824 = vmatpush2.msra.mxu0 0.0
      %825 = vmatprep.subr.mxu0 0.0
      %826 = vmatpush2.msra.mxu0 0.0
      %827 = vmatprep.subr.mxu0 0.0
      %828 = vmatpush2.msra.mxu0 0.0
      %829 = vmatprep.subr.mxu0 0.0
      %830 = vmatpush2.msra.mxu0 0.0
      %831 = vmatprep.subr.mxu0 0.0
      %832 = vmatpush2.msra.mxu0 0.0
      %833 = vmatprep.subr.mxu0 0.0
      %834 = vmatpush2.msra.mxu0 0.0
      %835 = vmatprep.subr.mxu0 0.0
      %836 = vmatpush2.msra.mxu0 0.0
      %837 = vmatprep.mubr.f32.mxu0 0.0
      %838 = vmatmul.mubr.f32.gmra.mxu0 %v750
      %v839 = vpop.f32.mrf.mxu0
      %v840 = vadd.f32 %v711, %v839
      %v841 = vpop.f32.mrf.mxu0
      %842 = vmatprep.mubr.f32.mxu0 0.0
      %843 = vmatmul.mubr.f32.gmra.mxu0 %v753
      %v844 = vpop.f32.mrf.mxu0
      %v845 = vadd.f32 %v716, %v844
      %v846 = vpop.f32.mrf.mxu0
      %847 = vmatprep.mubr.f32.mxu0 0.0
      %848 = vmatmul.mubr.f32.gmra.mxu0 %v756
      %v849 = vpop.f32.mrf.mxu0
      %v850 = vadd.f32 %v721, %v849
      %v851 = vpop.f32.mrf.mxu0
      %852 = vmatprep.mubr.f32.mxu0 0.0
      %853 = vmatmul.mubr.f32.gmra.mxu0 %v759
      %v854 = vpop.f32.mrf.mxu0
      %v855 = vadd.f32 %v726, %v854
      %v856 = vpop.f32.mrf.mxu0
      %857 = vmatprep.mubr.f32.mxu0 0.0
      %858 = vmatmul.mubr.f32.gmra.mxu0 %v762
      %v859 = vpop.f32.mrf.mxu0
      %v860 = vadd.f32 %v731, %v859
      %v861 = vpop.f32.mrf.mxu0
      %862 = vmatprep.mubr.f32.mxu0 0.0
      %863 = vmatmul.mubr.f32.gmra.mxu0 %v765
      %v864 = vpop.f32.mrf.mxu0
      %v865 = vadd.f32 %v736, %v864
      %v866 = vpop.f32.mrf.mxu0
      %867 = vmatprep.mubr.f32.mxu0 0.0
      %868 = vmatmul.mubr.f32.gmra.mxu0 %v768
      %v869 = vpop.f32.mrf.mxu0
      %v870 = vadd.f32 %v741, %v869
      %v871 = vpop.f32.mrf.mxu0
      %872 = vmatprep.mubr.f32.mxu0 0.0
      %873 = vmatmul.mubr.f32.gmra.mxu0 %v771
      %v874 = vpop.f32.mrf.mxu0
      %v875 = vadd.f32 %v746, %v874
      %v876 = vpop.f32.mrf.mxu0
      %877 = vdwg.mxu0
      %v878 = vmax.f32 %v840, 0.0
      %v879 = vmax.f32 %v845, 0.0
      %v880 = vmax.f32 %v850, 0.0
      %v881 = vmax.f32 %v855, 0.0
      %v882 = vmax.f32 %v860, 0.0
      %v883 = vmax.f32 %v865, 0.0
      %v884 = vmax.f32 %v870, 0.0
      %v885 = vmax.f32 %v875, 0.0
      %v886 = vld [vmem:[%s3] sm:$0xff]
      %v887 = vld [vmem:[%s3 + $0x8] sm:$0xff]
      %v888 = vld [vmem:[%s3 + $0x10] sm:$0xff]
      %v889 = vld [vmem:[%s3 + $0x18] sm:$0xff]
      %v890 = vld [vmem:[%s3 + $0x20] sm:$0xff]
      %v891 = vld [vmem:[%s3 + $0x28] sm:$0xff]
      %v892 = vld [vmem:[%s3 + $0x30] sm:$0xff]
      %v893 = vld [vmem:[%s3 + $0x38] sm:$0xff]
      %v894 = vld [vmem:[%s4] sm:$0xff]
      %v895 = vld [vmem:[%s4 + $0x8] sm:$0xff]
      %v896 = vld [vmem:[%s4 + $0x10] sm:$0xff]
      %v897 = vld [vmem:[%s4 + $0x18] sm:$0xff]
      %v898 = vld [vmem:[%s4 + $0x20] sm:$0xff]
      %v899 = vld [vmem:[%s4 + $0x28] sm:$0xff]
      %v900 = vld [vmem:[%s4 + $0x30] sm:$0xff]
      %v901 = vld [vmem:[%s4 + $0x38] sm:$0xff]
      %903 = vset.pattern.permute.xlu0 0
      %904 = vperm.xlu0 %903, %v894
      %v905 = vpop.permute.xlu0 %904
      %908 = vset.pattern.permute.xlu0 0
      %909 = vperm.xlu0 %908, %v895
      %v910 = vpop.permute.xlu0 %909
      %913 = vset.pattern.permute.xlu0 0
      %914 = vperm.xlu0 %913, %v896
      %v915 = vpop.permute.xlu0 %914
      %918 = vset.pattern.permute.xlu0 0
      %919 = vperm.xlu0 %918, %v897
      %v920 = vpop.permute.xlu0 %919
      %923 = vset.pattern.permute.xlu0 0
      %924 = vperm.xlu0 %923, %v898
      %v925 = vpop.permute.xlu0 %924
      %928 = vset.pattern.permute.xlu0 0
      %929 = vperm.xlu0 %928, %v899
      %v930 = vpop.permute.xlu0 %929
      %933 = vset.pattern.permute.xlu0 0
      %934 = vperm.xlu0 %933, %v900
      %v935 = vpop.permute.xlu0 %934
      %938 = vset.pattern.permute.xlu0 0
      %939 = vperm.xlu0 %938, %v901
      %v940 = vpop.permute.xlu0 %939
      %v943 = vsel %vm748, %v886, 0
      %v946 = vsel %vm748, %v887, 0
      %v949 = vsel %vm748, %v888, 0
      %v952 = vsel %vm748, %v889, 0
      %v955 = vsel %vm748, %v890, 0
      %v958 = vsel %vm748, %v891, 0
      %v961 = vsel %vm748, %v892, 0
      %v964 = vsel %vm748, %v893, 0
      %966 = vmatprep.subr.mxu0 0.0
      %967 = vmatpush1.msra.mxu0 0.0
      %968 = vmatprep.subr.mxu0 0.0
      %969 = vmatpush1.msra.mxu0 0.0
      %970 = vmatprep.subr.mxu0 0.0
      %971 = vmatpush1.msra.mxu0 0.0
      %972 = vmatprep.subr.mxu0 0.0
      %973 = vmatpush1.msra.mxu0 0.0
      %974 = vmatprep.subr.mxu0 0.0
      %975 = vmatpush1.msra.mxu0 0.0
      %976 = vmatprep.subr.mxu0 0.0
      %977 = vmatpush1.msra.mxu0 0.0
      %978 = vmatprep.subr.mxu0 0.0
      %979 = vmatpush1.msra.mxu0 0.0
      %980 = vmatprep.subr.mxu0 0.0
      %981 = vmatpush1.msra.mxu0 0.0
      %982 = vmatprep.subr.mxu0 0.0
      %983 = vmatpush1.msra.mxu0 %v885
      %984 = vmatprep.subr.mxu0 0.0
      %985 = vmatpush1.msra.mxu0 %v884
      %986 = vmatprep.subr.mxu0 0.0
      %987 = vmatpush1.msra.mxu0 %v883
      %988 = vmatprep.subr.mxu0 0.0
      %989 = vmatpush1.msra.mxu0 %v882
      %990 = vmatprep.subr.mxu0 0.0
      %991 = vmatpush1.msra.mxu0 %v881
      %992 = vmatprep.subr.mxu0 0.0
      %993 = vmatpush1.msra.mxu0 %v880
      %994 = vmatprep.subr.mxu0 0.0
      %995 = vmatpush1.msra.mxu0 %v879
      %996 = vmatprep.subr.mxu0 0.0
      %997 = vmatpush1.msra.mxu0 %v878
      %998 = vmatprep.subr.mxu0 0.0
      %999 = vmatpush2.msra.mxu0 0.0
      %1000 = vmatprep.subr.mxu0 0.0
      %1001 = vmatpush2.msra.mxu0 0.0
      %1002 = vmatprep.subr.mxu0 0.0
      %1003 = vmatpush2.msra.mxu0 0.0
      %1004 = vmatprep.subr.mxu0 0.0
      %1005 = vmatpush2.msra.mxu0 0.0
      %1006 = vmatprep.subr.mxu0 0.0
      %1007 = vmatpush2.msra.mxu0 0.0
      %1008 = vmatprep.subr.mxu0 0.0
      %1009 = vmatpush2.msra.mxu0 0.0
      %1010 = vmatprep.subr.mxu0 0.0
      %1011 = vmatpush2.msra.mxu0 0.0
      %1012 = vmatprep.subr.mxu0 0.0
      %1013 = vmatpush2.msra.mxu0 0.0
      %1014 = vmatprep.subr.mxu0 0.0
      %1015 = vmatpush2.msra.mxu0 0.0
      %1016 = vmatprep.subr.mxu0 0.0
      %1017 = vmatpush2.msra.mxu0 0.0
      %1018 = vmatprep.subr.mxu0 0.0
      %1019 = vmatpush2.msra.mxu0 0.0
      %1020 = vmatprep.subr.mxu0 0.0
      %1021 = vmatpush2.msra.mxu0 0.0
      %1022 = vmatprep.subr.mxu0 0.0
      %1023 = vmatpush2.msra.mxu0 0.0
      %1024 = vmatprep.subr.mxu0 0.0
      %1025 = vmatpush2.msra.mxu0 0.0
      %1026 = vmatprep.subr.mxu0 0.0
      %1027 = vmatpush2.msra.mxu0 0.0
      %1028 = vmatprep.subr.mxu0 0.0
      %1029 = vmatpush2.msra.mxu0 0.0
      %1030 = vmatprep.mubr.f32.mxu0 0.0
      %1031 = vmatmul.mubr.f32.gmra.mxu0 %v943
      %v1032 = vpop.f32.mrf.mxu0
      %v1033 = vadd.f32 %v905, %v1032
      %v1034 = vpop.f32.mrf.mxu0
      %1035 = vmatprep.mubr.f32.mxu0 0.0
      %1036 = vmatmul.mubr.f32.gmra.mxu0 %v946
      %v1037 = vpop.f32.mrf.mxu0
      %v1038 = vadd.f32 %v910, %v1037
      %v1039 = vpop.f32.mrf.mxu0
      %1040 = vmatprep.mubr.f32.mxu0 0.0
      %1041 = vmatmul.mubr.f32.gmra.mxu0 %v949
      %v1042 = vpop.f32.mrf.mxu0
      %v1043 = vadd.f32 %v915, %v1042
      %v1044 = vpop.f32.mrf.mxu0
      %1045 = vmatprep.mubr.f32.mxu0 0.0
      %1046 = vmatmul.mubr.f32.gmra.mxu0 %v952
      %v1047 = vpop.f32.mrf.mxu0
      %v1048 = vadd.f32 %v920, %v1047
      %v1049 = vpop.f32.mrf.mxu0
      %1050 = vmatprep.mubr.f32.mxu0 0.0
      %1051 = vmatmul.mubr.f32.gmra.mxu0 %v955
      %v1052 = vpop.f32.mrf.mxu0
      %v1053 = vadd.f32 %v925, %v1052
      %v1054 = vpop.f32.mrf.mxu0
      %1055 = vmatprep.mubr.f32.mxu0 0.0
      %1056 = vmatmul.mubr.f32.gmra.mxu0 %v958
      %v1057 = vpop.f32.mrf.mxu0
      %v1058 = vadd.f32 %v930, %v1057
      %v1059 = vpop.f32.mrf.mxu0
      %1060 = vmatprep.mubr.f32.mxu0 0.0
      %1061 = vmatmul.mubr.f32.gmra.mxu0 %v961
      %v1062 = vpop.f32.mrf.mxu0
      %v1063 = vadd.f32 %v935, %v1062
      %v1064 = vpop.f32.mrf.mxu0
      %1065 = vmatprep.mubr.f32.mxu0 0.0
      %1066 = vmatmul.mubr.f32.gmra.mxu0 %v964
      %v1067 = vpop.f32.mrf.mxu0
      %v1068 = vadd.f32 %v940, %v1067
      %v1069 = vpop.f32.mrf.mxu0
      %1070 = vdwg.mxu0
      %v1071 = vmax.f32 %v1033, 0.0
      %v1072 = vmax.f32 %v1038, 0.0
      %v1073 = vmax.f32 %v1043, 0.0
      %v1074 = vmax.f32 %v1048, 0.0
      %v1075 = vmax.f32 %v1053, 0.0
      %v1076 = vmax.f32 %v1058, 0.0
      %v1077 = vmax.f32 %v1063, 0.0
      %v1078 = vmax.f32 %v1068, 0.0
      %v1088 = vrot.slane 0.0, 7
      %v1089 = vrot.slane %v1071, 7
      %v1090 = vrot.slane %v1072, 7
      %v1091 = vrot.slane %v1073, 7
      %v1092 = vrot.slane %v1074, 7
      %v1093 = vrot.slane %v1075, 7
      %v1094 = vrot.slane %v1076, 7
      %v1095 = vrot.slane %v1077, 7
      %v1096 = vrot.slane %v1078, 7
      %vm1106 = vcmask 1040384
      %v1107 = vsel %vm1106, 0.0, %v1088
      %v1108 = vsel %vm1106, 0.0, %v1089
      %v1109 = vsel %vm1106, 0.0, %v1090
      %v1110 = vsel %vm1106, 0.0, %v1091
      %v1111 = vsel %vm1106, 0.0, %v1092
      %v1112 = vsel %vm1106, 0.0, %v1093
      %v1113 = vsel %vm1106, 0.0, %v1094
      %v1114 = vsel %vm1106, 0.0, %v1095
      %v1115 = vsel %vm1106, 0.0, %v1096
      %v1116 = vsel %vm1106, %v1088, 0.0
      %v1117 = vsel %vm1106, %v1089, 0.0
      %v1118 = vsel %vm1106, %v1090, 0.0
      %v1119 = vsel %vm1106, %v1091, 0.0
      %v1120 = vsel %vm1106, %v1092, 0.0
      %v1121 = vsel %vm1106, %v1093, 0.0
      %v1122 = vsel %vm1106, %v1094, 0.0
      %v1123 = vsel %vm1106, %v1095, 0.0
      %v1124 = vsel %vm1106, %v1096, 0.0
      %vm1141 = vcmask 1046528
      %v1142 = vrot.slane %v1107, 1
      %v1143 = vrot.slane %v1116, 1
      %v1144 = vsel %vm1141, %v1142, %v1143
      %v1145 = vrot.slane %v1108, 1
      %v1146 = vrot.slane %v1117, 1
      %v1147 = vsel %vm1141, %v1145, %v1146
      %v1148 = vrot.slane %v1109, 1
      %v1149 = vrot.slane %v1118, 1
      %v1150 = vsel %vm1141, %v1148, %v1149
      %v1151 = vrot.slane %v1110, 1
      %v1152 = vrot.slane %v1119, 1
      %v1153 = vsel %vm1141, %v1151, %v1152
      %v1154 = vrot.slane %v1111, 1
      %v1155 = vrot.slane %v1120, 1
      %v1156 = vsel %vm1141, %v1154, %v1155
      %v1157 = vrot.slane %v1112, 1
      %v1158 = vrot.slane %v1121, 1
      %v1159 = vsel %vm1141, %v1157, %v1158
      %v1160 = vrot.slane %v1113, 1
      %v1161 = vrot.slane %v1122, 1
      %v1162 = vsel %vm1141, %v1160, %v1161
      %v1163 = vrot.slane %v1114, 1
      %v1164 = vrot.slane %v1123, 1
      %v1165 = vsel %vm1141, %v1163, %v1164
      %1166 = vrot.lane.b32.xlu0 %v1144, 32
      %v1167 = vpop.permute.xlu0 %1166
      %1168 = vrot.lane.b32.xlu0 %v1147, 32
      %v1169 = vpop.permute.xlu0 %1168
      %1170 = vrot.lane.b32.xlu0 %v1150, 32
      %v1171 = vpop.permute.xlu0 %1170
      %1172 = vrot.lane.b32.xlu0 %v1153, 32
      %v1173 = vpop.permute.xlu0 %1172
      %1174 = vrot.lane.b32.xlu0 %v1156, 32
      %v1175 = vpop.permute.xlu0 %1174
      %1176 = vrot.lane.b32.xlu0 %v1159, 32
      %v1177 = vpop.permute.xlu0 %1176
      %1178 = vrot.lane.b32.xlu0 %v1162, 32
      %v1179 = vpop.permute.xlu0 %1178
      %1180 = vrot.lane.b32.xlu0 %v1165, 32
      %v1181 = vpop.permute.xlu0 %1180
      %vm1190 = vcmask 1045504
      %v1191 = vrot.slane %v1107, 2
      %v1192 = vrot.slane %v1116, 2
      %v1193 = vsel %vm1190, %v1191, %v1192
      %v1194 = vrot.slane %v1108, 2
      %v1195 = vrot.slane %v1117, 2
      %v1196 = vsel %vm1190, %v1194, %v1195
      %v1197 = vrot.slane %v1109, 2
      %v1198 = vrot.slane %v1118, 2
      %v1199 = vsel %vm1190, %v1197, %v1198
      %v1200 = vrot.slane %v1110, 2
      %v1201 = vrot.slane %v1119, 2
      %v1202 = vsel %vm1190, %v1200, %v1201
      %v1203 = vrot.slane %v1111, 2
      %v1204 = vrot.slane %v1120, 2
      %v1205 = vsel %vm1190, %v1203, %v1204
      %v1206 = vrot.slane %v1112, 2
      %v1207 = vrot.slane %v1121, 2
      %v1208 = vsel %vm1190, %v1206, %v1207
      %v1209 = vrot.slane %v1113, 2
      %v1210 = vrot.slane %v1122, 2
      %v1211 = vsel %vm1190, %v1209, %v1210
      %v1212 = vrot.slane %v1114, 2
      %v1213 = vrot.slane %v1123, 2
      %v1214 = vsel %vm1190, %v1212, %v1213
      %1215 = vrot.lane.b32.xlu0 %v1193, 64
      %v1216 = vpop.permute.xlu0 %1215
      %1217 = vrot.lane.b32.xlu0 %v1196, 64
      %v1218 = vpop.permute.xlu0 %1217
      %1219 = vrot.lane.b32.xlu0 %v1199, 64
      %v1220 = vpop.permute.xlu0 %1219
      %1221 = vrot.lane.b32.xlu0 %v1202, 64
      %v1222 = vpop.permute.xlu0 %1221
      %1223 = vrot.lane.b32.xlu0 %v1205, 64
      %v1224 = vpop.permute.xlu0 %1223
      %1225 = vrot.lane.b32.xlu0 %v1208, 64
      %v1226 = vpop.permute.xlu0 %1225
      %1227 = vrot.lane.b32.xlu0 %v1211, 64
      %v1228 = vpop.permute.xlu0 %1227
      %1229 = vrot.lane.b32.xlu0 %v1214, 64
      %v1230 = vpop.permute.xlu0 %1229
      %1240 = vrot.lane.b32.xlu0 %v1108, 96
      %v1241 = vpop.permute.xlu0 %1240
      %1242 = vrot.lane.b32.xlu0 %v1109, 96
      %v1243 = vpop.permute.xlu0 %1242
      %1244 = vrot.lane.b32.xlu0 %v1110, 96
      %v1245 = vpop.permute.xlu0 %1244
      %1246 = vrot.lane.b32.xlu0 %v1111, 96
      %v1247 = vpop.permute.xlu0 %1246
      %1248 = vrot.lane.b32.xlu0 %v1112, 96
      %v1249 = vpop.permute.xlu0 %1248
      %1250 = vrot.lane.b32.xlu0 %v1113, 96
      %v1251 = vpop.permute.xlu0 %1250
      %1252 = vrot.lane.b32.xlu0 %v1114, 96
      %v1253 = vpop.permute.xlu0 %1252
      %1254 = vrot.lane.b32.xlu0 %v1115, 96
      %v1255 = vpop.permute.xlu0 %1254
      %v1265 = vrot.slane %v1115, 1
      %v1266 = vrot.slane %v1124, 1
      %v1267 = vsel %vm1141, %v1265, %v1266
      %v1276 = vrot.slane %v1115, 2
      %v1277 = vrot.slane %v1124, 2
      %v1278 = vsel %vm1190, %v1276, %v1277
      %1279 = vrot.lane.b32.xlu0 %v1196, 32
      %v1280 = vpop.permute.xlu0 %1279
      %1281 = vrot.lane.b32.xlu0 %v1199, 32
      %v1282 = vpop.permute.xlu0 %1281
      %1283 = vrot.lane.b32.xlu0 %v1202, 32
      %v1284 = vpop.permute.xlu0 %1283
      %1285 = vrot.lane.b32.xlu0 %v1205, 32
      %v1286 = vpop.permute.xlu0 %1285
      %1287 = vrot.lane.b32.xlu0 %v1208, 32
      %v1288 = vpop.permute.xlu0 %1287
      %1289 = vrot.lane.b32.xlu0 %v1211, 32
      %v1290 = vpop.permute.xlu0 %1289
      %1291 = vrot.lane.b32.xlu0 %v1214, 32
      %v1292 = vpop.permute.xlu0 %1291
      %1293 = vrot.lane.b32.xlu0 %v1278, 32
      %v1294 = vpop.permute.xlu0 %1293
      %1303 = vrot.lane.b32.xlu0 %v1109, 64
      %v1304 = vpop.permute.xlu0 %1303
      %1305 = vrot.lane.b32.xlu0 %v1110, 64
      %v1306 = vpop.permute.xlu0 %1305
      %1307 = vrot.lane.b32.xlu0 %v1111, 64
      %v1308 = vpop.permute.xlu0 %1307
      %1309 = vrot.lane.b32.xlu0 %v1112, 64
      %v1310 = vpop.permute.xlu0 %1309
      %1311 = vrot.lane.b32.xlu0 %v1113, 64
      %v1312 = vpop.permute.xlu0 %1311
      %1313 = vrot.lane.b32.xlu0 %v1114, 64
      %v1314 = vpop.permute.xlu0 %1313
      %1315 = vrot.lane.b32.xlu0 %v1115, 64
      %v1316 = vpop.permute.xlu0 %1315
      %1317 = vrot.lane.b32.xlu0 %v1107, 64
      %v1318 = vpop.permute.xlu0 %1317
      %1327 = vrot.lane.b32.xlu0 %v1150, 96
      %v1328 = vpop.permute.xlu0 %1327
      %1329 = vrot.lane.b32.xlu0 %v1153, 96
      %v1330 = vpop.permute.xlu0 %1329
      %1331 = vrot.lane.b32.xlu0 %v1156, 96
      %v1332 = vpop.permute.xlu0 %1331
      %1333 = vrot.lane.b32.xlu0 %v1159, 96
      %v1334 = vpop.permute.xlu0 %1333
      %1335 = vrot.lane.b32.xlu0 %v1162, 96
      %v1336 = vpop.permute.xlu0 %1335
      %1337 = vrot.lane.b32.xlu0 %v1165, 96
      %v1338 = vpop.permute.xlu0 %1337
      %1339 = vrot.lane.b32.xlu0 %v1267, 96
      %v1340 = vpop.permute.xlu0 %1339
      %1341 = vrot.lane.b32.xlu0 %v1144, 96
      %v1342 = vpop.permute.xlu0 %1341
      %vm1351 = vcmask 261120
      %v1352 = vsel %vm1351, %v1107, %v1167
      %v1353 = vsel %vm1351, %v1108, %v1169
      %v1354 = vsel %vm1351, %v1109, %v1171
      %v1355 = vsel %vm1351, %v1110, %v1173
      %v1356 = vsel %vm1351, %v1111, %v1175
      %v1357 = vsel %vm1351, %v1112, %v1177
      %v1358 = vsel %vm1351, %v1113, %v1179
      %v1359 = vsel %vm1351, %v1114, %v1181
      %v1360 = vsel %vm748, %v1352, %v1216
      %v1361 = vsel %vm748, %v1353, %v1218
      %v1362 = vsel %vm748, %v1354, %v1220
      %v1363 = vsel %vm748, %v1355, %v1222
      %v1364 = vsel %vm748, %v1356, %v1224
      %v1365 = vsel %vm748, %v1357, %v1226
      %v1366 = vsel %vm748, %v1358, %v1228
      %v1367 = vsel %vm748, %v1359, %v1230
      %vm1368 = vcmask 785408
      %v1369 = vsel %vm1368, %v1360, %v1241
      %v1370 = vsel %vm1368, %v1361, %v1243
      %v1371 = vsel %vm1368, %v1362, %v1245
      %v1372 = vsel %vm1368, %v1363, %v1247
      %v1373 = vsel %vm1368, %v1364, %v1249
      %v1374 = vsel %vm1368, %v1365, %v1251
      %v1375 = vsel %vm1368, %v1366, %v1253
      %v1376 = vsel %vm1368, %v1367, %v1255
      %v1377 = vsel %vm1351, %v1147, %v1280
      %v1378 = vsel %vm1351, %v1150, %v1282
      %v1379 = vsel %vm1351, %v1153, %v1284
      %v1380 = vsel %vm1351, %v1156, %v1286
      %v1381 = vsel %vm1351, %v1159, %v1288
      %v1382 = vsel %vm1351, %v1162, %v1290
      %v1383 = vsel %vm1351, %v1165, %v1292
      %v1384 = vsel %vm1351, %v1267, %v1294
      %v1385 = vsel %vm748, %v1377, %v1304
      %v1386 = vsel %vm748, %v1378, %v1306
      %v1387 = vsel %vm748, %v1379, %v1308
      %v1388 = vsel %vm748, %v1380, %v1310
      %v1389 = vsel %vm748, %v1381, %v1312
      %v1390 = vsel %vm748, %v1382, %v1314
      %v1391 = vsel %vm748, %v1383, %v1316
      %v1392 = vsel %vm748, %v1384, %v1318
      %v1393 = vsel %vm1368, %v1385, %v1328
      %v1394 = vsel %vm1368, %v1386, %v1330
      %v1395 = vsel %vm1368, %v1387, %v1332
      %v1396 = vsel %vm1368, %v1388, %v1334
      %v1397 = vsel %vm1368, %v1389, %v1336
      %v1398 = vsel %vm1368, %v1390, %v1338
      %v1399 = vsel %vm1368, %v1391, %v1340
      %v1400 = vsel %vm1368, %v1392, %v1342
      %v1401 = vld [vmem:[%s5] sm:$0xff]
      %v1402 = vld [vmem:[%s5 + $0x8] sm:$0xff]
      %v1403 = vld [vmem:[%s5 + $0x10] sm:$0xff]
      %v1404 = vld [vmem:[%s5 + $0x18] sm:$0xff]
      %v1405 = vld [vmem:[%s5 + $0x20] sm:$0xff]
      %v1406 = vld [vmem:[%s5 + $0x28] sm:$0xff]
      %v1407 = vld [vmem:[%s5 + $0x30] sm:$0xff]
      %v1408 = vld [vmem:[%s5 + $0x38] sm:$0xff]
      %v1409 = vld [vmem:[%s5 + $0x40] sm:$0xff]
      %v1410 = vld [vmem:[%s5 + $0x48] sm:$0xff]
      %v1411 = vld [vmem:[%s5 + $0x50] sm:$0xff]
      %v1412 = vld [vmem:[%s5 + $0x58] sm:$0xff]
      %v1413 = vld [vmem:[%s5 + $0x60] sm:$0xff]
      %v1414 = vld [vmem:[%s5 + $0x68] sm:$0xff]
      %v1415 = vld [vmem:[%s5 + $0x70] sm:$0xff]
      %v1416 = vld [vmem:[%s5 + $0x78] sm:$0xff]
      %v1417 = vld [vmem:[%s5 + $0x80] sm:$0xff]
      %v1418 = vld [vmem:[%s5 + $0x88] sm:$0xff]
      %v1419 = vld [vmem:[%s5 + $0x90] sm:$0xff]
      %v1420 = vld [vmem:[%s5 + $0x98] sm:$0xff]
      %v1421 = vld [vmem:[%s5 + $0xa0] sm:$0xff]
      %v1422 = vld [vmem:[%s5 + $0xa8] sm:$0xff]
      %v1423 = vld [vmem:[%s5 + $0xb0] sm:$0xff]
      %v1424 = vld [vmem:[%s5 + $0xb8] sm:$0xff]
      %v1425 = vld [vmem:[%s5 + $0xc0] sm:$0xff]
      %v1426 = vld [vmem:[%s5 + $0xc8] sm:$0xff]
      %v1427 = vld [vmem:[%s5 + $0xd0] sm:$0xff]
      %v1428 = vld [vmem:[%s5 + $0xd8] sm:$0xff]
      %v1429 = vld [vmem:[%s5 + $0xe0] sm:$0xff]
      %v1430 = vld [vmem:[%s5 + $0xe8] sm:$0xff]
      %v1431 = vld [vmem:[%s5 + $0xf0] sm:$0xff]
      %v1432 = vld [vmem:[%s5 + $0xf8] sm:$0xff]
      %v1433 = vld [vmem:[%s5 + $0x100] sm:$0xff]
      %v1434 = vld [vmem:[%s5 + $0x108] sm:$0xff]
      %v1435 = vld [vmem:[%s5 + $0x110] sm:$0xff]
      %v1436 = vld [vmem:[%s5 + $0x118] sm:$0xff]
      %v1437 = vld [vmem:[%s6] sm:$0x1]
      %v1439 = vlaneseq
      %v1440 = vshrl.u32 %v1439, 7
      %v1441 = vsub.s32 0, %v1440
      %v1442 = vrot.slane %v1437, %v1441
      %v1444 = vsel %vm1351, %v1199, 0
      %v1446 = vsel %vm1351, %v1202, 0
      %v1448 = vsel %vm1351, %v1205, 0
      %v1450 = vsel %vm1351, %v1208, 0
      %v1452 = vsel %vm1351, %v1211, 0
      %v1454 = vsel %vm1351, %v1214, 0
      %v1456 = vsel %vm1351, %v1278, 0
      %v1458 = vsel %vm1351, %v1193, 0
      %1460 = vmatprep.subr.mxu0 0.0
      %1461 = vmatpush1.msra.mxu0 %v1416
      %1462 = vmatprep.subr.mxu0 0.0
      %1463 = vmatpush1.msra.mxu0 %v1415
      %1464 = vmatprep.subr.mxu0 0.0
      %1465 = vmatpush1.msra.mxu0 %v1414
      %1466 = vmatprep.subr.mxu0 0.0
      %1467 = vmatpush1.msra.mxu0 %v1413
      %1468 = vmatprep.subr.mxu0 0.0
      %1469 = vmatpush1.msra.mxu0 %v1412
      %1470 = vmatprep.subr.mxu0 0.0
      %1471 = vmatpush1.msra.mxu0 %v1411
      %1472 = vmatprep.subr.mxu0 0.0
      %1473 = vmatpush1.msra.mxu0 %v1410
      %1474 = vmatprep.subr.mxu0 0.0
      %1475 = vmatpush1.msra.mxu0 %v1409
      %1476 = vmatprep.subr.mxu0 0.0
      %1477 = vmatpush1.msra.mxu0 %v1408
      %1478 = vmatprep.subr.mxu0 0.0
      %1479 = vmatpush1.msra.mxu0 %v1407
      %1480 = vmatprep.subr.mxu0 0.0
      %1481 = vmatpush1.msra.mxu0 %v1406
      %1482 = vmatprep.subr.mxu0 0.0
      %1483 = vmatpush1.msra.mxu0 %v1405
      %1484 = vmatprep.subr.mxu0 0.0
      %1485 = vmatpush1.msra.mxu0 %v1404
      %1486 = vmatprep.subr.mxu0 0.0
      %1487 = vmatpush1.msra.mxu0 %v1403
      %1488 = vmatprep.subr.mxu0 0.0
      %1489 = vmatpush1.msra.mxu0 %v1402
      %1490 = vmatprep.subr.mxu0 0.0
      %1491 = vmatpush1.msra.mxu0 %v1401
      %1492 = vmatprep.subr.mxu0 0.0
      %1493 = vmatpush2.msra.mxu0 %v1432
      %1494 = vmatprep.subr.mxu0 0.0
      %1495 = vmatpush2.msra.mxu0 %v1431
      %1496 = vmatprep.subr.mxu0 0.0
      %1497 = vmatpush2.msra.mxu0 %v1430
      %1498 = vmatprep.subr.mxu0 0.0
      %1499 = vmatpush2.msra.mxu0 %v1429
      %1500 = vmatprep.subr.mxu0 0.0
      %1501 = vmatpush2.msra.mxu0 %v1428
      %1502 = vmatprep.subr.mxu0 0.0
      %1503 = vmatpush2.msra.mxu0 %v1427
      %1504 = vmatprep.subr.mxu0 0.0
      %1505 = vmatpush2.msra.mxu0 %v1426
      %1506 = vmatprep.subr.mxu0 0.0
      %1507 = vmatpush2.msra.mxu0 %v1425
      %1508 = vmatprep.subr.mxu0 0.0
      %1509 = vmatpush2.msra.mxu0 %v1424
      %1510 = vmatprep.subr.mxu0 0.0
      %1511 = vmatpush2.msra.mxu0 %v1423
      %1512 = vmatprep.subr.mxu0 0.0
      %1513 = vmatpush2.msra.mxu0 %v1422
      %1514 = vmatprep.subr.mxu0 0.0
      %1515 = vmatpush2.msra.mxu0 %v1421
      %1516 = vmatprep.subr.mxu0 0.0
      %1517 = vmatpush2.msra.mxu0 %v1420
      %1518 = vmatprep.subr.mxu0 0.0
      %1519 = vmatpush2.msra.mxu0 %v1419
      %1520 = vmatprep.subr.mxu0 0.0
      %1521 = vmatpush2.msra.mxu0 %v1418
      %1522 = vmatprep.subr.mxu0 0.0
      %1523 = vmatpush2.msra.mxu0 %v1417
      %1524 = vmatprep.mubr.f32.mxu0 %v1393
      %1525 = vmatmul.mubr.f32.gmra.mxu0 %v1369
      %v1526 = vpop.f32.mrf.mxu0
      %v1527 = vadd.f32 %v1442, %v1526
      %v1528 = vpop.f32.mrf.mxu0
      %1529 = vmatprep.mubr.f32.mxu0 %v1394
      %1530 = vmatmul.mubr.f32.gmra.mxu0 %v1370
      %v1531 = vpop.f32.mrf.mxu0
      %v1532 = vadd.f32 %v1442, %v1531
      %v1533 = vpop.f32.mrf.mxu0
      %1534 = vmatprep.mubr.f32.mxu0 %v1395
      %1535 = vmatmul.mubr.f32.gmra.mxu0 %v1371
      %v1536 = vpop.f32.mrf.mxu0
      %v1537 = vadd.f32 %v1442, %v1536
      %v1538 = vpop.f32.mrf.mxu0
      %1539 = vmatprep.mubr.f32.mxu0 %v1396
      %1540 = vmatmul.mubr.f32.gmra.mxu0 %v1372
      %v1541 = vpop.f32.mrf.mxu0
      %v1542 = vadd.f32 %v1442, %v1541
      %v1543 = vpop.f32.mrf.mxu0
      %1544 = vmatprep.mubr.f32.mxu0 %v1397
      %1545 = vmatmul.mubr.f32.gmra.mxu0 %v1373
      %v1546 = vpop.f32.mrf.mxu0
      %v1547 = vadd.f32 %v1442, %v1546
      %v1548 = vpop.f32.mrf.mxu0
      %1549 = vmatprep.mubr.f32.mxu0 %v1398
      %1550 = vmatmul.mubr.f32.gmra.mxu0 %v1374
      %v1551 = vpop.f32.mrf.mxu0
      %v1552 = vadd.f32 %v1442, %v1551
      %v1553 = vpop.f32.mrf.mxu0
      %1554 = vmatprep.mubr.f32.mxu0 %v1399
      %1555 = vmatmul.mubr.f32.gmra.mxu0 %v1375
      %v1556 = vpop.f32.mrf.mxu0
      %v1557 = vadd.f32 %v1442, %v1556
      %v1558 = vpop.f32.mrf.mxu0
      %1559 = vmatprep.mubr.f32.mxu0 %v1400
      %1560 = vmatmul.mubr.f32.gmra.mxu0 %v1376
      %v1561 = vpop.f32.mrf.mxu0
      %v1562 = vadd.f32 %v1442, %v1561
      %v1563 = vpop.f32.mrf.mxu0
      %1564 = vdwg.mxu0
      %1565 = vmatprep.subr.mxu0 0.0
      %1566 = vmatpush1.msra.mxu0 0.0
      %1567 = vmatprep.subr.mxu0 0.0
      %1568 = vmatpush1.msra.mxu0 0.0
      %1569 = vmatprep.subr.mxu0 0.0
      %1570 = vmatpush1.msra.mxu0 0.0
      %1571 = vmatprep.subr.mxu0 0.0
      %1572 = vmatpush1.msra.mxu0 0.0
      %1573 = vmatprep.subr.mxu0 0.0
      %1574 = vmatpush1.msra.mxu0 0.0
      %1575 = vmatprep.subr.mxu0 0.0
      %1576 = vmatpush1.msra.mxu0 0.0
      %1577 = vmatprep.subr.mxu0 0.0
      %1578 = vmatpush1.msra.mxu0 0.0
      %1579 = vmatprep.subr.mxu0 0.0
      %1580 = vmatpush1.msra.mxu0 0.0
      %1581 = vmatprep.subr.mxu0 0.0
      %1582 = vmatpush1.msra.mxu0 0.0
      %1583 = vmatprep.subr.mxu0 0.0
      %1584 = vmatpush1.msra.mxu0 0.0
      %1585 = vmatprep.subr.mxu0 0.0
      %1586 = vmatpush1.msra.mxu0 0.0
      %1587 = vmatprep.subr.mxu0 0.0
      %1588 = vmatpush1.msra.mxu0 0.0
      %1589 = vmatprep.subr.mxu0 0.0
      %1590 = vmatpush1.msra.mxu0 %v1436
      %1591 = vmatprep.subr.mxu0 0.0
      %1592 = vmatpush1.msra.mxu0 %v1435
      %1593 = vmatprep.subr.mxu0 0.0
      %1594 = vmatpush1.msra.mxu0 %v1434
      %1595 = vmatprep.subr.mxu0 0.0
      %1596 = vmatpush1.msra.mxu0 %v1433
      %1597 = vmatprep.subr.mxu0 0.0
      %1598 = vmatpush2.msra.mxu0 0.0
      %1599 = vmatprep.subr.mxu0 0.0
      %1600 = vmatpush2.msra.mxu0 0.0
      %1601 = vmatprep.subr.mxu0 0.0
      %1602 = vmatpush2.msra.mxu0 0.0
      %1603 = vmatprep.subr.mxu0 0.0
      %1604 = vmatpush2.msra.mxu0 0.0
      %1605 = vmatprep.subr.mxu0 0.0
      %1606 = vmatpush2.msra.mxu0 0.0
      %1607 = vmatprep.subr.mxu0 0.0
      %1608 = vmatpush2.msra.mxu0 0.0
      %1609 = vmatprep.subr.mxu0 0.0
      %1610 = vmatpush2.msra.mxu0 0.0
      %1611 = vmatprep.subr.mxu0 0.0
      %1612 = vmatpush2.msra.mxu0 0.0
      %1613 = vmatprep.subr.mxu0 0.0
      %1614 = vmatpush2.msra.mxu0 0.0
      %1615 = vmatprep.subr.mxu0 0.0
      %1616 = vmatpush2.msra.mxu0 0.0
      %1617 = vmatprep.subr.mxu0 0.0
      %1618 = vmatpush2.msra.mxu0 0.0
      %1619 = vmatprep.subr.mxu0 0.0
      %1620 = vmatpush2.msra.mxu0 0.0
      %1621 = vmatprep.subr.mxu0 0.0
      %1622 = vmatpush2.msra.mxu0 0.0
      %1623 = vmatprep.subr.mxu0 0.0
      %1624 = vmatpush2.msra.mxu0 0.0
      %1625 = vmatprep.subr.mxu0 0.0
      %1626 = vmatpush2.msra.mxu0 0.0
      %1627 = vmatprep.subr.mxu0 0.0
      %1628 = vmatpush2.msra.mxu0 0.0
      %1629 = vmatprep.mubr.f32.mxu0 0.0
      %1630 = vmatmul.mubr.f32.gmra.mxu0 %v1444
      %v1631 = vpop.f32.mrf.mxu0
      %v1632 = vadd.f32 %v1527, %v1631
      %v1633 = vpop.f32.mrf.mxu0
      %1634 = vmatprep.mubr.f32.mxu0 0.0
      %1635 = vmatmul.mubr.f32.gmra.mxu0 %v1446
      %v1636 = vpop.f32.mrf.mxu0
      %v1637 = vadd.f32 %v1532, %v1636
      %v1638 = vpop.f32.mrf.mxu0
      %1639 = vmatprep.mubr.f32.mxu0 0.0
      %1640 = vmatmul.mubr.f32.gmra.mxu0 %v1448
      %v1641 = vpop.f32.mrf.mxu0
      %v1642 = vadd.f32 %v1537, %v1641
      %v1643 = vpop.f32.mrf.mxu0
      %1644 = vmatprep.mubr.f32.mxu0 0.0
      %1645 = vmatmul.mubr.f32.gmra.mxu0 %v1450
      %v1646 = vpop.f32.mrf.mxu0
      %v1647 = vadd.f32 %v1542, %v1646
      %v1648 = vpop.f32.mrf.mxu0
      %1649 = vmatprep.mubr.f32.mxu0 0.0
      %1650 = vmatmul.mubr.f32.gmra.mxu0 %v1452
      %v1651 = vpop.f32.mrf.mxu0
      %v1652 = vadd.f32 %v1547, %v1651
      %v1653 = vpop.f32.mrf.mxu0
      %1654 = vmatprep.mubr.f32.mxu0 0.0
      %1655 = vmatmul.mubr.f32.gmra.mxu0 %v1454
      %v1656 = vpop.f32.mrf.mxu0
      %v1657 = vadd.f32 %v1552, %v1656
      %v1658 = vpop.f32.mrf.mxu0
      %1659 = vmatprep.mubr.f32.mxu0 0.0
      %1660 = vmatmul.mubr.f32.gmra.mxu0 %v1456
      %v1661 = vpop.f32.mrf.mxu0
      %v1662 = vadd.f32 %v1557, %v1661
      %v1663 = vpop.f32.mrf.mxu0
      %1664 = vmatprep.mubr.f32.mxu0 0.0
      %1665 = vmatmul.mubr.f32.gmra.mxu0 %v1458
      %v1666 = vpop.f32.mrf.mxu0
      %v1667 = vadd.f32 %v1562, %v1666
      %v1668 = vpop.f32.mrf.mxu0
      %1669 = vdwg.mxu0
      %v1670 = vmax.f32 %v1632, 0.0
      %v1671 = vmax.f32 %v1637, 0.0
      %v1672 = vmax.f32 %v1642, 0.0
      %v1673 = vmax.f32 %v1647, 0.0
      %v1674 = vmax.f32 %v1652, 0.0
      %v1675 = vmax.f32 %v1657, 0.0
      %v1676 = vmax.f32 %v1662, 0.0
      %v1677 = vmax.f32 %v1667, 0.0
      %v1678 = vld [vmem:[%s7] sm:$0xff]
      %v1679 = vld [vmem:[%s7 + $0x8] sm:$0xff]
      %v1680 = vld [vmem:[%s7 + $0x10] sm:$0xff]
      %v1681 = vld [vmem:[%s7 + $0x18] sm:$0xff]
      %v1682 = vld [vmem:[%s8] sm:$0x1]
      %v1684 = vlaneseq
      %v1685 = vshrl.u32 %v1684, 7
      %v1686 = vsub.s32 0, %v1685
      %v1687 = vrot.slane %v1682, %v1686
      %v1690 = vsel %vm1351, %v1670, 0
      %v1693 = vsel %vm1351, %v1671, 0
      %v1696 = vsel %vm1351, %v1672, 0
      %v1699 = vsel %vm1351, %v1673, 0
      %v1702 = vsel %vm1351, %v1674, 0
      %v1705 = vsel %vm1351, %v1675, 0
      %v1708 = vsel %vm1351, %v1676, 0
      %v1711 = vsel %vm1351, %v1677, 0
      %1713 = vmatprep.subr.mxu0 0.0
      %1714 = vmatpush1.msra.mxu0 0.0
      %1715 = vmatprep.subr.mxu0 0.0
      %1716 = vmatpush1.msra.mxu0 0.0
      %1717 = vmatprep.subr.mxu0 0.0
      %1718 = vmatpush1.msra.mxu0 0.0
      %1719 = vmatprep.subr.mxu0 0.0
      %1720 = vmatpush1.msra.mxu0 0.0
      %1721 = vmatprep.subr.mxu0 0.0
      %1722 = vmatpush1.msra.mxu0 0.0
      %1723 = vmatprep.subr.mxu0 0.0
      %1724 = vmatpush1.msra.mxu0 0.0
      %1725 = vmatprep.subr.mxu0 0.0
      %1726 = vmatpush1.msra.mxu0 0.0
      %1727 = vmatprep.subr.mxu0 0.0
      %1728 = vmatpush1.msra.mxu0 0.0
      %1729 = vmatprep.subr.mxu0 0.0
      %1730 = vmatpush1.msra.mxu0 0.0
      %1731 = vmatprep.subr.mxu0 0.0
      %1732 = vmatpush1.msra.mxu0 0.0
      %1733 = vmatprep.subr.mxu0 0.0
      %1734 = vmatpush1.msra.mxu0 0.0
      %1735 = vmatprep.subr.mxu0 0.0
      %1736 = vmatpush1.msra.mxu0 0.0
      %1737 = vmatprep.subr.mxu0 0.0
      %1738 = vmatpush1.msra.mxu0 %v1681
      %1739 = vmatprep.subr.mxu0 0.0
      %1740 = vmatpush1.msra.mxu0 %v1680
      %1741 = vmatprep.subr.mxu0 0.0
      %1742 = vmatpush1.msra.mxu0 %v1679
      %1743 = vmatprep.subr.mxu0 0.0
      %1744 = vmatpush1.msra.mxu0 %v1678
      %1745 = vmatprep.subr.mxu0 0.0
      %1746 = vmatpush2.msra.mxu0 0.0
      %1747 = vmatprep.subr.mxu0 0.0
      %1748 = vmatpush2.msra.mxu0 0.0
      %1749 = vmatprep.subr.mxu0 0.0
      %1750 = vmatpush2.msra.mxu0 0.0
      %1751 = vmatprep.subr.mxu0 0.0
      %1752 = vmatpush2.msra.mxu0 0.0
      %1753 = vmatprep.subr.mxu0 0.0
      %1754 = vmatpush2.msra.mxu0 0.0
      %1755 = vmatprep.subr.mxu0 0.0
      %1756 = vmatpush2.msra.mxu0 0.0
      %1757 = vmatprep.subr.mxu0 0.0
      %1758 = vmatpush2.msra.mxu0 0.0
      %1759 = vmatprep.subr.mxu0 0.0
      %1760 = vmatpush2.msra.mxu0 0.0
      %1761 = vmatprep.subr.mxu0 0.0
      %1762 = vmatpush2.msra.mxu0 0.0
      %1763 = vmatprep.subr.mxu0 0.0
      %1764 = vmatpush2.msra.mxu0 0.0
      %1765 = vmatprep.subr.mxu0 0.0
      %1766 = vmatpush2.msra.mxu0 0.0
      %1767 = vmatprep.subr.mxu0 0.0
      %1768 = vmatpush2.msra.mxu0 0.0
      %1769 = vmatprep.subr.mxu0 0.0
      %1770 = vmatpush2.msra.mxu0 0.0
      %1771 = vmatprep.subr.mxu0 0.0
      %1772 = vmatpush2.msra.mxu0 0.0
      %1773 = vmatprep.subr.mxu0 0.0
      %1774 = vmatpush2.msra.mxu0 0.0
      %1775 = vmatprep.subr.mxu0 0.0
      %1776 = vmatpush2.msra.mxu0 0.0
      %1777 = vmatprep.mubr.f32.mxu0 0.0
      %1778 = vmatmul.mubr.f32.gmra.mxu0 %v1690
      %v1779 = vpop.f32.mrf.mxu0
      %v1780 = vadd.f32 %v1687, %v1779
      %v1781 = vpop.f32.mrf.mxu0
      %1782 = vmatprep.mubr.f32.mxu0 0.0
      %1783 = vmatmul.mubr.f32.gmra.mxu0 %v1693
      %v1784 = vpop.f32.mrf.mxu0
      %v1785 = vadd.f32 %v1687, %v1784
      %v1786 = vpop.f32.mrf.mxu0
      %1787 = vmatprep.mubr.f32.mxu0 0.0
      %1788 = vmatmul.mubr.f32.gmra.mxu0 %v1696
      %v1789 = vpop.f32.mrf.mxu0
      %v1790 = vadd.f32 %v1687, %v1789
      %v1791 = vpop.f32.mrf.mxu0
      %1792 = vmatprep.mubr.f32.mxu0 0.0
      %1793 = vmatmul.mubr.f32.gmra.mxu0 %v1699
      %v1794 = vpop.f32.mrf.mxu0
      %v1795 = vadd.f32 %v1687, %v1794
      %v1796 = vpop.f32.mrf.mxu0
      %1797 = vmatprep.mubr.f32.mxu0 0.0
      %1798 = vmatmul.mubr.f32.gmra.mxu0 %v1702
      %v1799 = vpop.f32.mrf.mxu0
      %v1800 = vadd.f32 %v1687, %v1799
      %v1801 = vpop.f32.mrf.mxu0
      %1802 = vmatprep.mubr.f32.mxu0 0.0
      %1803 = vmatmul.mubr.f32.gmra.mxu0 %v1705
      %v1804 = vpop.f32.mrf.mxu0
      %v1805 = vadd.f32 %v1687, %v1804
      %v1806 = vpop.f32.mrf.mxu0
      %1807 = vmatprep.mubr.f32.mxu0 0.0
      %1808 = vmatmul.mubr.f32.gmra.mxu0 %v1708
      %v1809 = vpop.f32.mrf.mxu0
      %v1810 = vadd.f32 %v1687, %v1809
      %v1811 = vpop.f32.mrf.mxu0
      %1812 = vmatprep.mubr.f32.mxu0 0.0
      %1813 = vmatmul.mubr.f32.gmra.mxu0 %v1711
      %v1814 = vpop.f32.mrf.mxu0
      %v1815 = vadd.f32 %v1687, %v1814
      %v1816 = vpop.f32.mrf.mxu0
      %1817 = vdwg.mxu0
      %v1818 = vmax.f32 %v1780, 0.0
      %v1819 = vmax.f32 %v1785, 0.0
      %v1820 = vmax.f32 %v1790, 0.0
      %v1821 = vmax.f32 %v1795, 0.0
      %v1822 = vmax.f32 %v1800, 0.0
      %v1823 = vmax.f32 %v1805, 0.0
      %v1824 = vmax.f32 %v1810, 0.0
      %v1825 = vmax.f32 %v1815, 0.0
      %v1834 = vrot.slane %v1818, 7
      %v1835 = vrot.slane %v1819, 7
      %v1836 = vrot.slane %v1820, 7
      %v1837 = vrot.slane %v1821, 7
      %v1838 = vrot.slane %v1822, 7
      %v1839 = vrot.slane %v1823, 7
      %v1840 = vrot.slane %v1824, 7
      %v1841 = vrot.slane %v1825, 7
      %v1850 = vsel %vm1106, 0.0, %v1834
      %v1851 = vsel %vm1106, 0.0, %v1835
      %v1852 = vsel %vm1106, 0.0, %v1836
      %v1853 = vsel %vm1106, 0.0, %v1837
      %v1854 = vsel %vm1106, 0.0, %v1838
      %v1855 = vsel %vm1106, 0.0, %v1839
      %v1856 = vsel %vm1106, 0.0, %v1840
      %v1857 = vsel %vm1106, 0.0, %v1841
      %v1858 = vsel %vm1106, %v1834, 0.0
      %v1859 = vsel %vm1106, %v1835, 0.0
      %v1860 = vsel %vm1106, %v1836, 0.0
      %v1861 = vsel %vm1106, %v1837, 0.0
      %v1862 = vsel %vm1106, %v1838, 0.0
      %v1863 = vsel %vm1106, %v1839, 0.0
      %v1864 = vsel %vm1106, %v1840, 0.0
      %v1865 = vsel %vm1106, %v1841, 0.0
      %v1880 = vrot.slane %v1850, 1
      %v1881 = vrot.slane %v1858, 1
      %v1882 = vsel %vm1141, %v1880, %v1881
      %v1883 = vrot.slane %v1851, 1
      %v1884 = vrot.slane %v1859, 1
      %v1885 = vsel %vm1141, %v1883, %v1884
      %v1886 = vrot.slane %v1852, 1
      %v1887 = vrot.slane %v1860, 1
      %v1888 = vsel %vm1141, %v1886, %v1887
      %v1889 = vrot.slane %v1853, 1
      %v1890 = vrot.slane %v1861, 1
      %v1891 = vsel %vm1141, %v1889, %v1890
      %v1892 = vrot.slane %v1854, 1
      %v1893 = vrot.slane %v1862, 1
      %v1894 = vsel %vm1141, %v1892, %v1893
      %v1895 = vrot.slane %v1855, 1
      %v1896 = vrot.slane %v1863, 1
      %v1897 = vsel %vm1141, %v1895, %v1896
      %v1898 = vrot.slane %v1856, 1
      %v1899 = vrot.slane %v1864, 1
      %v1900 = vsel %vm1141, %v1898, %v1899
      %1901 = vrot.lane.b32.xlu0 %v1882, 32
      %v1902 = vpop.permute.xlu0 %1901
      %1903 = vrot.lane.b32.xlu0 %v1885, 32
      %v1904 = vpop.permute.xlu0 %1903
      %1905 = vrot.lane.b32.xlu0 %v1888, 32
      %v1906 = vpop.permute.xlu0 %1905
      %1907 = vrot.lane.b32.xlu0 %v1891, 32
      %v1908 = vpop.permute.xlu0 %1907
      %1909 = vrot.lane.b32.xlu0 %v1894, 32
      %v1910 = vpop.permute.xlu0 %1909
      %1911 = vrot.lane.b32.xlu0 %v1897, 32
      %v1912 = vpop.permute.xlu0 %1911
      %1913 = vrot.lane.b32.xlu0 %v1900, 32
      %v1914 = vpop.permute.xlu0 %1913
      %v1922 = vrot.slane %v1850, 2
      %v1923 = vrot.slane %v1858, 2
      %v1924 = vsel %vm1190, %v1922, %v1923
      %v1925 = vrot.slane %v1851, 2
      %v1926 = vrot.slane %v1859, 2
      %v1927 = vsel %vm1190, %v1925, %v1926
      %v1928 = vrot.slane %v1852, 2
      %v1929 = vrot.slane %v1860, 2
      %v1930 = vsel %vm1190, %v1928, %v1929
      %v1931 = vrot.slane %v1853, 2
      %v1932 = vrot.slane %v1861, 2
      %v1933 = vsel %vm1190, %v1931, %v1932
      %v1934 = vrot.slane %v1854, 2
      %v1935 = vrot.slane %v1862, 2
      %v1936 = vsel %vm1190, %v1934, %v1935
      %v1937 = vrot.slane %v1855, 2
      %v1938 = vrot.slane %v1863, 2
      %v1939 = vsel %vm1190, %v1937, %v1938
      %v1940 = vrot.slane %v1856, 2
      %v1941 = vrot.slane %v1864, 2
      %v1942 = vsel %vm1190, %v1940, %v1941
      %1943 = vrot.lane.b32.xlu0 %v1924, 64
      %v1944 = vpop.permute.xlu0 %1943
      %1945 = vrot.lane.b32.xlu0 %v1927, 64
      %v1946 = vpop.permute.xlu0 %1945
      %1947 = vrot.lane.b32.xlu0 %v1930, 64
      %v1948 = vpop.permute.xlu0 %1947
      %1949 = vrot.lane.b32.xlu0 %v1933, 64
      %v1950 = vpop.permute.xlu0 %1949
      %1951 = vrot.lane.b32.xlu0 %v1936, 64
      %v1952 = vpop.permute.xlu0 %1951
      %1953 = vrot.lane.b32.xlu0 %v1939, 64
      %v1954 = vpop.permute.xlu0 %1953
      %1955 = vrot.lane.b32.xlu0 %v1942, 64
      %v1956 = vpop.permute.xlu0 %1955
      %1965 = vrot.lane.b32.xlu0 %v1850, 96
      %v1966 = vpop.permute.xlu0 %1965
      %1967 = vrot.lane.b32.xlu0 %v1851, 96
      %v1968 = vpop.permute.xlu0 %1967
      %1969 = vrot.lane.b32.xlu0 %v1852, 96
      %v1970 = vpop.permute.xlu0 %1969
      %1971 = vrot.lane.b32.xlu0 %v1853, 96
      %v1972 = vpop.permute.xlu0 %1971
      %1973 = vrot.lane.b32.xlu0 %v1854, 96
      %v1974 = vpop.permute.xlu0 %1973
      %1975 = vrot.lane.b32.xlu0 %v1855, 96
      %v1976 = vpop.permute.xlu0 %1975
      %1977 = vrot.lane.b32.xlu0 %v1856, 96
      %v1978 = vpop.permute.xlu0 %1977
      %1979 = vrot.lane.b32.xlu0 %v1857, 96
      %v1980 = vpop.permute.xlu0 %1979
      %v1990 = vrot.slane %v1857, 1
      %v1991 = vrot.slane %v1865, 1
      %v1992 = vsel %vm1141, %v1990, %v1991
      %v2001 = vrot.slane %v1857, 2
      %v2002 = vrot.slane %v1865, 2
      %v2003 = vsel %vm1190, %v2001, %v2002
      %2004 = vrot.lane.b32.xlu0 %v1924, 32
      %v2005 = vpop.permute.xlu0 %2004
      %2006 = vrot.lane.b32.xlu0 %v1927, 32
      %v2007 = vpop.permute.xlu0 %2006
      %2008 = vrot.lane.b32.xlu0 %v1930, 32
      %v2009 = vpop.permute.xlu0 %2008
      %2010 = vrot.lane.b32.xlu0 %v1933, 32
      %v2011 = vpop.permute.xlu0 %2010
      %2012 = vrot.lane.b32.xlu0 %v1936, 32
      %v2013 = vpop.permute.xlu0 %2012
      %2014 = vrot.lane.b32.xlu0 %v1939, 32
      %v2015 = vpop.permute.xlu0 %2014
      %2016 = vrot.lane.b32.xlu0 %v1942, 32
      %v2017 = vpop.permute.xlu0 %2016
      %2018 = vrot.lane.b32.xlu0 %v2003, 32
      %v2019 = vpop.permute.xlu0 %2018
      %2028 = vrot.lane.b32.xlu0 %v1851, 64
      %v2029 = vpop.permute.xlu0 %2028
      %2030 = vrot.lane.b32.xlu0 %v1852, 64
      %v2031 = vpop.permute.xlu0 %2030
      %2032 = vrot.lane.b32.xlu0 %v1853, 64
      %v2033 = vpop.permute.xlu0 %2032
      %2034 = vrot.lane.b32.xlu0 %v1854, 64
      %v2035 = vpop.permute.xlu0 %2034
      %2036 = vrot.lane.b32.xlu0 %v1855, 64
      %v2037 = vpop.permute.xlu0 %2036
      %2038 = vrot.lane.b32.xlu0 %v1856, 64
      %v2039 = vpop.permute.xlu0 %2038
      %2040 = vrot.lane.b32.xlu0 %v1857, 64
      %v2041 = vpop.permute.xlu0 %2040
      %2049 = vrot.lane.b32.xlu0 %v1885, 96
      %v2050 = vpop.permute.xlu0 %2049
      %2051 = vrot.lane.b32.xlu0 %v1888, 96
      %v2052 = vpop.permute.xlu0 %2051
      %2053 = vrot.lane.b32.xlu0 %v1891, 96
      %v2054 = vpop.permute.xlu0 %2053
      %2055 = vrot.lane.b32.xlu0 %v1894, 96
      %v2056 = vpop.permute.xlu0 %2055
      %2057 = vrot.lane.b32.xlu0 %v1897, 96
      %v2058 = vpop.permute.xlu0 %2057
      %2059 = vrot.lane.b32.xlu0 %v1900, 96
      %v2060 = vpop.permute.xlu0 %2059
      %2061 = vrot.lane.b32.xlu0 %v1992, 96
      %v2062 = vpop.permute.xlu0 %2061
      %v2070 = vsel %vm1351, %v1850, %v1902
      %v2071 = vsel %vm1351, %v1851, %v1904
      %v2072 = vsel %vm1351, %v1852, %v1906
      %v2073 = vsel %vm1351, %v1853, %v1908
      %v2074 = vsel %vm1351, %v1854, %v1910
      %v2075 = vsel %vm1351, %v1855, %v1912
      %v2076 = vsel %vm1351, %v1856, %v1914
      %v2077 = vsel %vm748, %v2070, %v1944
      %v2078 = vsel %vm748, %v2071, %v1946
      %v2079 = vsel %vm748, %v2072, %v1948
      %v2080 = vsel %vm748, %v2073, %v1950
      %v2081 = vsel %vm748, %v2074, %v1952
      %v2082 = vsel %vm748, %v2075, %v1954
      %v2083 = vsel %vm748, %v2076, %v1956
      %v2084 = vsel %vm1368, %v1360, %v1966
      %v2085 = vsel %vm1368, %v2077, %v1968
      %v2086 = vsel %vm1368, %v2078, %v1970
      %v2087 = vsel %vm1368, %v2079, %v1972
      %v2088 = vsel %vm1368, %v2080, %v1974
      %v2089 = vsel %vm1368, %v2081, %v1976
      %v2090 = vsel %vm1368, %v2082, %v1978
      %v2091 = vsel %vm1368, %v2083, %v1980
      %v2092 = vsel %vm1351, %v1882, %v2005
      %v2093 = vsel %vm1351, %v1885, %v2007
      %v2094 = vsel %vm1351, %v1888, %v2009
      %v2095 = vsel %vm1351, %v1891, %v2011
      %v2096 = vsel %vm1351, %v1894, %v2013
      %v2097 = vsel %vm1351, %v1897, %v2015
      %v2098 = vsel %vm1351, %v1900, %v2017
      %v2099 = vsel %vm1351, %v1992, %v2019
      %v2100 = vsel %vm748, %v2092, %v2029
      %v2101 = vsel %vm748, %v2093, %v2031
      %v2102 = vsel %vm748, %v2094, %v2033
      %v2103 = vsel %vm748, %v2095, %v2035
      %v2104 = vsel %vm748, %v2096, %v2037
      %v2105 = vsel %vm748, %v2097, %v2039
      %v2106 = vsel %vm748, %v2098, %v2041
      %v2107 = vsel %vm748, %v2099, %v1318
      %v2108 = vsel %vm1368, %v2100, %v2050
      %v2109 = vsel %vm1368, %v2101, %v2052
      %v2110 = vsel %vm1368, %v2102, %v2054
      %v2111 = vsel %vm1368, %v2103, %v2056
      %v2112 = vsel %vm1368, %v2104, %v2058
      %v2113 = vsel %vm1368, %v2105, %v2060
      %v2114 = vsel %vm1368, %v2106, %v2062
      %v2115 = vsel %vm1368, %v2107, %v1342
      %v2116 = vld [vmem:[%s9] sm:$0xff]
      %v2117 = vld [vmem:[%s9 + $0x8] sm:$0xff]
      %v2118 = vld [vmem:[%s9 + $0x10] sm:$0xff]
      %v2119 = vld [vmem:[%s9 + $0x18] sm:$0xff]
      %v2120 = vld [vmem:[%s9 + $0x20] sm:$0xff]
      %v2121 = vld [vmem:[%s9 + $0x28] sm:$0xff]
      %v2122 = vld [vmem:[%s9 + $0x30] sm:$0xff]
      %v2123 = vld [vmem:[%s9 + $0x38] sm:$0xff]
      %v2124 = vld [vmem:[%s9 + $0x40] sm:$0xff]
      %v2125 = vld [vmem:[%s9 + $0x48] sm:$0xff]
      %v2126 = vld [vmem:[%s9 + $0x50] sm:$0xff]
      %v2127 = vld [vmem:[%s9 + $0x58] sm:$0xff]
      %v2128 = vld [vmem:[%s9 + $0x60] sm:$0xff]
      %v2129 = vld [vmem:[%s9 + $0x68] sm:$0xff]
      %v2130 = vld [vmem:[%s9 + $0x70] sm:$0xff]
      %v2131 = vld [vmem:[%s9 + $0x78] sm:$0xff]
      %v2132 = vld [vmem:[%s9 + $0x80] sm:$0xff]
      %v2133 = vld [vmem:[%s9 + $0x88] sm:$0xff]
      %v2134 = vld [vmem:[%s9 + $0x90] sm:$0xff]
      %v2135 = vld [vmem:[%s9 + $0x98] sm:$0xff]
      %v2136 = vld [vmem:[%s9 + $0xa0] sm:$0xff]
      %v2137 = vld [vmem:[%s9 + $0xa8] sm:$0xff]
      %v2138 = vld [vmem:[%s9 + $0xb0] sm:$0xff]
      %v2139 = vld [vmem:[%s9 + $0xb8] sm:$0xff]
      %v2140 = vld [vmem:[%s9 + $0xc0] sm:$0xff]
      %v2141 = vld [vmem:[%s9 + $0xc8] sm:$0xff]
      %v2142 = vld [vmem:[%s9 + $0xd0] sm:$0xff]
      %v2143 = vld [vmem:[%s9 + $0xd8] sm:$0xff]
      %v2144 = vld [vmem:[%s9 + $0xe0] sm:$0xff]
      %v2145 = vld [vmem:[%s9 + $0xe8] sm:$0xff]
      %v2146 = vld [vmem:[%s9 + $0xf0] sm:$0xff]
      %v2147 = vld [vmem:[%s9 + $0xf8] sm:$0xff]
      %v2148 = vld [vmem:[%s9 + $0x100] sm:$0xff]
      %v2149 = vld [vmem:[%s9 + $0x108] sm:$0xff]
      %v2150 = vld [vmem:[%s9 + $0x110] sm:$0xff]
      %v2151 = vld [vmem:[%s9 + $0x118] sm:$0xff]
      %v2152 = vld [vmem:[%s10] sm:$0x1]
      %v2154 = vlaneseq
      %v2155 = vshrl.u32 %v2154, 7
      %v2156 = vsub.s32 0, %v2155
      %v2157 = vrot.slane %v2152, %v2156
      %v2159 = vsel %vm1351, %v1927, 0
      %v2161 = vsel %vm1351, %v1930, 0
      %v2163 = vsel %vm1351, %v1933, 0
      %v2165 = vsel %vm1351, %v1936, 0
      %v2167 = vsel %vm1351, %v1939, 0
      %v2169 = vsel %vm1351, %v1942, 0
      %v2171 = vsel %vm1351, %v2003, 0
      %2173 = vmatprep.subr.mxu0 0.0
      %2174 = vmatpush1.msra.mxu0 %v2131
      %2175 = vmatprep.subr.mxu0 0.0
      %2176 = vmatpush1.msra.mxu0 %v2130
      %2177 = vmatprep.subr.mxu0 0.0
      %2178 = vmatpush1.msra.mxu0 %v2129
      %2179 = vmatprep.subr.mxu0 0.0
      %2180 = vmatpush1.msra.mxu0 %v2128
      %2181 = vmatprep.subr.mxu0 0.0
      %2182 = vmatpush1.msra.mxu0 %v2127
      %2183 = vmatprep.subr.mxu0 0.0
      %2184 = vmatpush1.msra.mxu0 %v2126
      %2185 = vmatprep.subr.mxu0 0.0
      %2186 = vmatpush1.msra.mxu0 %v2125
      %2187 = vmatprep.subr.mxu0 0.0
      %2188 = vmatpush1.msra.mxu0 %v2124
      %2189 = vmatprep.subr.mxu0 0.0
      %2190 = vmatpush1.msra.mxu0 %v2123
      %2191 = vmatprep.subr.mxu0 0.0
      %2192 = vmatpush1.msra.mxu0 %v2122
      %2193 = vmatprep.subr.mxu0 0.0
      %2194 = vmatpush1.msra.mxu0 %v2121
      %2195 = vmatprep.subr.mxu0 0.0
      %2196 = vmatpush1.msra.mxu0 %v2120
      %2197 = vmatprep.subr.mxu0 0.0
      %2198 = vmatpush1.msra.mxu0 %v2119
      %2199 = vmatprep.subr.mxu0 0.0
      %2200 = vmatpush1.msra.mxu0 %v2118
      %2201 = vmatprep.subr.mxu0 0.0
      %2202 = vmatpush1.msra.mxu0 %v2117
      %2203 = vmatprep.subr.mxu0 0.0
      %2204 = vmatpush1.msra.mxu0 %v2116
      %2205 = vmatprep.subr.mxu0 0.0
      %2206 = vmatpush2.msra.mxu0 %v2147
      %2207 = vmatprep.subr.mxu0 0.0
      %2208 = vmatpush2.msra.mxu0 %v2146
      %2209 = vmatprep.subr.mxu0 0.0
      %2210 = vmatpush2.msra.mxu0 %v2145
      %2211 = vmatprep.subr.mxu0 0.0
      %2212 = vmatpush2.msra.mxu0 %v2144
      %2213 = vmatprep.subr.mxu0 0.0
      %2214 = vmatpush2.msra.mxu0 %v2143
      %2215 = vmatprep.subr.mxu0 0.0
      %2216 = vmatpush2.msra.mxu0 %v2142
      %2217 = vmatprep.subr.mxu0 0.0
      %2218 = vmatpush2.msra.mxu0 %v2141
      %2219 = vmatprep.subr.mxu0 0.0
      %2220 = vmatpush2.msra.mxu0 %v2140
      %2221 = vmatprep.subr.mxu0 0.0
      %2222 = vmatpush2.msra.mxu0 %v2139
      %2223 = vmatprep.subr.mxu0 0.0
      %2224 = vmatpush2.msra.mxu0 %v2138
      %2225 = vmatprep.subr.mxu0 0.0
      %2226 = vmatpush2.msra.mxu0 %v2137
      %2227 = vmatprep.subr.mxu0 0.0
      %2228 = vmatpush2.msra.mxu0 %v2136
      %2229 = vmatprep.subr.mxu0 0.0
      %2230 = vmatpush2.msra.mxu0 %v2135
      %2231 = vmatprep.subr.mxu0 0.0
      %2232 = vmatpush2.msra.mxu0 %v2134
      %2233 = vmatprep.subr.mxu0 0.0
      %2234 = vmatpush2.msra.mxu0 %v2133
      %2235 = vmatprep.subr.mxu0 0.0
      %2236 = vmatpush2.msra.mxu0 %v2132
      %2237 = vmatprep.mubr.f32.mxu0 %v2108
      %2238 = vmatmul.mubr.f32.gmra.mxu0 %v2084
      %v2239 = vpop.f32.mrf.mxu0
      %v2240 = vadd.f32 %v2157, %v2239
      %v2241 = vpop.f32.mrf.mxu0
      %2242 = vmatprep.mubr.f32.mxu0 %v2109
      %2243 = vmatmul.mubr.f32.gmra.mxu0 %v2085
      %v2244 = vpop.f32.mrf.mxu0
      %v2245 = vadd.f32 %v2157, %v2244
      %v2246 = vpop.f32.mrf.mxu0
      %2247 = vmatprep.mubr.f32.mxu0 %v2110
      %2248 = vmatmul.mubr.f32.gmra.mxu0 %v2086
      %v2249 = vpop.f32.mrf.mxu0
      %v2250 = vadd.f32 %v2157, %v2249
      %v2251 = vpop.f32.mrf.mxu0
      %2252 = vmatprep.mubr.f32.mxu0 %v2111
      %2253 = vmatmul.mubr.f32.gmra.mxu0 %v2087
      %v2254 = vpop.f32.mrf.mxu0
      %v2255 = vadd.f32 %v2157, %v2254
      %v2256 = vpop.f32.mrf.mxu0
      %2257 = vmatprep.mubr.f32.mxu0 %v2112
      %2258 = vmatmul.mubr.f32.gmra.mxu0 %v2088
      %v2259 = vpop.f32.mrf.mxu0
      %v2260 = vadd.f32 %v2157, %v2259
      %v2261 = vpop.f32.mrf.mxu0
      %2262 = vmatprep.mubr.f32.mxu0 %v2113
      %2263 = vmatmul.mubr.f32.gmra.mxu0 %v2089
      %v2264 = vpop.f32.mrf.mxu0
      %v2265 = vadd.f32 %v2157, %v2264
      %v2266 = vpop.f32.mrf.mxu0
      %2267 = vmatprep.mubr.f32.mxu0 %v2114
      %2268 = vmatmul.mubr.f32.gmra.mxu0 %v2090
      %v2269 = vpop.f32.mrf.mxu0
      %v2270 = vadd.f32 %v2157, %v2269
      %v2271 = vpop.f32.mrf.mxu0
      %2272 = vmatprep.mubr.f32.mxu0 %v2115
      %2273 = vmatmul.mubr.f32.gmra.mxu0 %v2091
      %v2274 = vpop.f32.mrf.mxu0
      %v2275 = vadd.f32 %v2157, %v2274
      %v2276 = vpop.f32.mrf.mxu0
      %2277 = vdwg.mxu0
      %2278 = vmatprep.subr.mxu0 0.0
      %2279 = vmatpush1.msra.mxu0 0.0
      %2280 = vmatprep.subr.mxu0 0.0
      %2281 = vmatpush1.msra.mxu0 0.0
      %2282 = vmatprep.subr.mxu0 0.0
      %2283 = vmatpush1.msra.mxu0 0.0
      %2284 = vmatprep.subr.mxu0 0.0
      %2285 = vmatpush1.msra.mxu0 0.0
      %2286 = vmatprep.subr.mxu0 0.0
      %2287 = vmatpush1.msra.mxu0 0.0
      %2288 = vmatprep.subr.mxu0 0.0
      %2289 = vmatpush1.msra.mxu0 0.0
      %2290 = vmatprep.subr.mxu0 0.0
      %2291 = vmatpush1.msra.mxu0 0.0
      %2292 = vmatprep.subr.mxu0 0.0
      %2293 = vmatpush1.msra.mxu0 0.0
      %2294 = vmatprep.subr.mxu0 0.0
      %2295 = vmatpush1.msra.mxu0 0.0
      %2296 = vmatprep.subr.mxu0 0.0
      %2297 = vmatpush1.msra.mxu0 0.0
      %2298 = vmatprep.subr.mxu0 0.0
      %2299 = vmatpush1.msra.mxu0 0.0
      %2300 = vmatprep.subr.mxu0 0.0
      %2301 = vmatpush1.msra.mxu0 0.0
      %2302 = vmatprep.subr.mxu0 0.0
      %2303 = vmatpush1.msra.mxu0 %v2151
      %2304 = vmatprep.subr.mxu0 0.0
      %2305 = vmatpush1.msra.mxu0 %v2150
      %2306 = vmatprep.subr.mxu0 0.0
      %2307 = vmatpush1.msra.mxu0 %v2149
      %2308 = vmatprep.subr.mxu0 0.0
      %2309 = vmatpush1.msra.mxu0 %v2148
      %2310 = vmatprep.subr.mxu0 0.0
      %2311 = vmatpush2.msra.mxu0 0.0
      %2312 = vmatprep.subr.mxu0 0.0
      %2313 = vmatpush2.msra.mxu0 0.0
      %2314 = vmatprep.subr.mxu0 0.0
      %2315 = vmatpush2.msra.mxu0 0.0
      %2316 = vmatprep.subr.mxu0 0.0
      %2317 = vmatpush2.msra.mxu0 0.0
      %2318 = vmatprep.subr.mxu0 0.0
      %2319 = vmatpush2.msra.mxu0 0.0
      %2320 = vmatprep.subr.mxu0 0.0
      %2321 = vmatpush2.msra.mxu0 0.0
      %2322 = vmatprep.subr.mxu0 0.0
      %2323 = vmatpush2.msra.mxu0 0.0
      %2324 = vmatprep.subr.mxu0 0.0
      %2325 = vmatpush2.msra.mxu0 0.0
      %2326 = vmatprep.subr.mxu0 0.0
      %2327 = vmatpush2.msra.mxu0 0.0
      %2328 = vmatprep.subr.mxu0 0.0
      %2329 = vmatpush2.msra.mxu0 0.0
      %2330 = vmatprep.subr.mxu0 0.0
      %2331 = vmatpush2.msra.mxu0 0.0
      %2332 = vmatprep.subr.mxu0 0.0
      %2333 = vmatpush2.msra.mxu0 0.0
      %2334 = vmatprep.subr.mxu0 0.0
      %2335 = vmatpush2.msra.mxu0 0.0
      %2336 = vmatprep.subr.mxu0 0.0
      %2337 = vmatpush2.msra.mxu0 0.0
      %2338 = vmatprep.subr.mxu0 0.0
      %2339 = vmatpush2.msra.mxu0 0.0
      %2340 = vmatprep.subr.mxu0 0.0
      %2341 = vmatpush2.msra.mxu0 0.0
      %2342 = vmatprep.mubr.f32.mxu0 0.0
      %2343 = vmatmul.mubr.f32.gmra.mxu0 %v2159
      %v2344 = vpop.f32.mrf.mxu0
      %v2345 = vadd.f32 %v2240, %v2344
      %v2346 = vpop.f32.mrf.mxu0
      %2347 = vmatprep.mubr.f32.mxu0 0.0
      %2348 = vmatmul.mubr.f32.gmra.mxu0 %v2161
      %v2349 = vpop.f32.mrf.mxu0
      %v2350 = vadd.f32 %v2245, %v2349
      %v2351 = vpop.f32.mrf.mxu0
      %2352 = vmatprep.mubr.f32.mxu0 0.0
      %2353 = vmatmul.mubr.f32.gmra.mxu0 %v2163
      %v2354 = vpop.f32.mrf.mxu0
      %v2355 = vadd.f32 %v2250, %v2354
      %v2356 = vpop.f32.mrf.mxu0
      %2357 = vmatprep.mubr.f32.mxu0 0.0
      %2358 = vmatmul.mubr.f32.gmra.mxu0 %v2165
      %v2359 = vpop.f32.mrf.mxu0
      %v2360 = vadd.f32 %v2255, %v2359
      %v2361 = vpop.f32.mrf.mxu0
      %2362 = vmatprep.mubr.f32.mxu0 0.0
      %2363 = vmatmul.mubr.f32.gmra.mxu0 %v2167
      %v2364 = vpop.f32.mrf.mxu0
      %v2365 = vadd.f32 %v2260, %v2364
      %v2366 = vpop.f32.mrf.mxu0
      %2367 = vmatprep.mubr.f32.mxu0 0.0
      %2368 = vmatmul.mubr.f32.gmra.mxu0 %v2169
      %v2369 = vpop.f32.mrf.mxu0
      %v2370 = vadd.f32 %v2265, %v2369
      %v2371 = vpop.f32.mrf.mxu0
      %2372 = vmatprep.mubr.f32.mxu0 0.0
      %2373 = vmatmul.mubr.f32.gmra.mxu0 %v2171
      %v2374 = vpop.f32.mrf.mxu0
      %v2375 = vadd.f32 %v2270, %v2374
      %v2376 = vpop.f32.mrf.mxu0
      %2377 = vmatprep.mubr.f32.mxu0 0.0
      %2378 = vmatmul.mubr.f32.gmra.mxu0 %v1458
      %v2379 = vpop.f32.mrf.mxu0
      %v2380 = vadd.f32 %v2275, %v2379
      %v2381 = vpop.f32.mrf.mxu0
      %2382 = vdwg.mxu0
      %v2383 = vmax.f32 %v2345, 0.0
      %v2384 = vmax.f32 %v2350, 0.0
      %v2385 = vmax.f32 %v2355, 0.0
      %v2386 = vmax.f32 %v2360, 0.0
      %v2387 = vmax.f32 %v2365, 0.0
      %v2388 = vmax.f32 %v2370, 0.0
      %v2389 = vmax.f32 %v2375, 0.0
      %v2390 = vmax.f32 %v2380, 0.0
      %v2391 = vld [vmem:[%s11] sm:$0xff]
      %v2392 = vld [vmem:[%s11 + $0x8] sm:$0xff]
      %v2393 = vld [vmem:[%s11 + $0x10] sm:$0xff]
      %v2394 = vld [vmem:[%s11 + $0x18] sm:$0xff]
      %v2395 = vld [vmem:[%s12] sm:$0x1]
      %v2397 = vlaneseq
      %v2398 = vshrl.u32 %v2397, 7
      %v2399 = vsub.s32 0, %v2398
      %v2400 = vrot.slane %v2395, %v2399
      %v2403 = vsel %vm1351, %v2383, 0
      %v2406 = vsel %vm1351, %v2384, 0
      %v2409 = vsel %vm1351, %v2385, 0
      %v2412 = vsel %vm1351, %v2386, 0
      %v2415 = vsel %vm1351, %v2387, 0
      %v2418 = vsel %vm1351, %v2388, 0
      %v2421 = vsel %vm1351, %v2389, 0
      %v2424 = vsel %vm1351, %v2390, 0
      %2426 = vmatprep.subr.mxu0 0.0
      %2427 = vmatpush1.msra.mxu0 0.0
      %2428 = vmatprep.subr.mxu0 0.0
      %2429 = vmatpush1.msra.mxu0 0.0
      %2430 = vmatprep.subr.mxu0 0.0
      %2431 = vmatpush1.msra.mxu0 0.0
      %2432 = vmatprep.subr.mxu0 0.0
      %2433 = vmatpush1.msra.mxu0 0.0
      %2434 = vmatprep.subr.mxu0 0.0
      %2435 = vmatpush1.msra.mxu0 0.0
      %2436 = vmatprep.subr.mxu0 0.0
      %2437 = vmatpush1.msra.mxu0 0.0
      %2438 = vmatprep.subr.mxu0 0.0
      %2439 = vmatpush1.msra.mxu0 0.0
      %2440 = vmatprep.subr.mxu0 0.0
      %2441 = vmatpush1.msra.mxu0 0.0
      %2442 = vmatprep.subr.mxu0 0.0
      %2443 = vmatpush1.msra.mxu0 0.0
      %2444 = vmatprep.subr.mxu0 0.0
      %2445 = vmatpush1.msra.mxu0 0.0
      %2446 = vmatprep.subr.mxu0 0.0
      %2447 = vmatpush1.msra.mxu0 0.0
      %2448 = vmatprep.subr.mxu0 0.0
      %2449 = vmatpush1.msra.mxu0 0.0
      %2450 = vmatprep.subr.mxu0 0.0
      %2451 = vmatpush1.msra.mxu0 %v2394
      %2452 = vmatprep.subr.mxu0 0.0
      %2453 = vmatpush1.msra.mxu0 %v2393
      %2454 = vmatprep.subr.mxu0 0.0
      %2455 = vmatpush1.msra.mxu0 %v2392
      %2456 = vmatprep.subr.mxu0 0.0
      %2457 = vmatpush1.msra.mxu0 %v2391
      %2458 = vmatprep.subr.mxu0 0.0
      %2459 = vmatpush2.msra.mxu0 0.0
      %2460 = vmatprep.subr.mxu0 0.0
      %2461 = vmatpush2.msra.mxu0 0.0
      %2462 = vmatprep.subr.mxu0 0.0
      %2463 = vmatpush2.msra.mxu0 0.0
      %2464 = vmatprep.subr.mxu0 0.0
      %2465 = vmatpush2.msra.mxu0 0.0
      %2466 = vmatprep.subr.mxu0 0.0
      %2467 = vmatpush2.msra.mxu0 0.0
      %2468 = vmatprep.subr.mxu0 0.0
      %2469 = vmatpush2.msra.mxu0 0.0
      %2470 = vmatprep.subr.mxu0 0.0
      %2471 = vmatpush2.msra.mxu0 0.0
      %2472 = vmatprep.subr.mxu0 0.0
      %2473 = vmatpush2.msra.mxu0 0.0
      %2474 = vmatprep.subr.mxu0 0.0
      %2475 = vmatpush2.msra.mxu0 0.0
      %2476 = vmatprep.subr.mxu0 0.0
      %2477 = vmatpush2.msra.mxu0 0.0
      %2478 = vmatprep.subr.mxu0 0.0
      %2479 = vmatpush2.msra.mxu0 0.0
      %2480 = vmatprep.subr.mxu0 0.0
      %2481 = vmatpush2.msra.mxu0 0.0
      %2482 = vmatprep.subr.mxu0 0.0
      %2483 = vmatpush2.msra.mxu0 0.0
      %2484 = vmatprep.subr.mxu0 0.0
      %2485 = vmatpush2.msra.mxu0 0.0
      %2486 = vmatprep.subr.mxu0 0.0
      %2487 = vmatpush2.msra.mxu0 0.0
      %2488 = vmatprep.subr.mxu0 0.0
      %2489 = vmatpush2.msra.mxu0 0.0
      %2490 = vmatprep.mubr.f32.mxu0 0.0
      %2491 = vmatmul.mubr.f32.gmra.mxu0 %v2403
      %v2492 = vpop.f32.mrf.mxu0
      %v2493 = vadd.f32 %v2400, %v2492
      %v2494 = vpop.f32.mrf.mxu0
      %2495 = vmatprep.mubr.f32.mxu0 0.0
      %2496 = vmatmul.mubr.f32.gmra.mxu0 %v2406
      %v2497 = vpop.f32.mrf.mxu0
      %v2498 = vadd.f32 %v2400, %v2497
      %v2499 = vpop.f32.mrf.mxu0
      %2500 = vmatprep.mubr.f32.mxu0 0.0
      %2501 = vmatmul.mubr.f32.gmra.mxu0 %v2409
      %v2502 = vpop.f32.mrf.mxu0
      %v2503 = vadd.f32 %v2400, %v2502
      %v2504 = vpop.f32.mrf.mxu0
      %2505 = vmatprep.mubr.f32.mxu0 0.0
      %2506 = vmatmul.mubr.f32.gmra.mxu0 %v2412
      %v2507 = vpop.f32.mrf.mxu0
      %v2508 = vadd.f32 %v2400, %v2507
      %v2509 = vpop.f32.mrf.mxu0
      %2510 = vmatprep.mubr.f32.mxu0 0.0
      %2511 = vmatmul.mubr.f32.gmra.mxu0 %v2415
      %v2512 = vpop.f32.mrf.mxu0
      %v2513 = vadd.f32 %v2400, %v2512
      %v2514 = vpop.f32.mrf.mxu0
      %2515 = vmatprep.mubr.f32.mxu0 0.0
      %2516 = vmatmul.mubr.f32.gmra.mxu0 %v2418
      %v2517 = vpop.f32.mrf.mxu0
      %v2518 = vadd.f32 %v2400, %v2517
      %v2519 = vpop.f32.mrf.mxu0
      %2520 = vmatprep.mubr.f32.mxu0 0.0
      %2521 = vmatmul.mubr.f32.gmra.mxu0 %v2421
      %v2522 = vpop.f32.mrf.mxu0
      %v2523 = vadd.f32 %v2400, %v2522
      %v2524 = vpop.f32.mrf.mxu0
      %2525 = vmatprep.mubr.f32.mxu0 0.0
      %2526 = vmatmul.mubr.f32.gmra.mxu0 %v2424
      %v2527 = vpop.f32.mrf.mxu0
      %v2528 = vadd.f32 %v2400, %v2527
      %v2529 = vpop.f32.mrf.mxu0
      %2530 = vdwg.mxu0
      %v2531 = vmax.f32 %v2493, 0.0
      %v2532 = vmax.f32 %v2498, 0.0
      %v2533 = vmax.f32 %v2503, 0.0
      %v2534 = vmax.f32 %v2508, 0.0
      %v2535 = vmax.f32 %v2513, 0.0
      %v2536 = vmax.f32 %v2518, 0.0
      %v2537 = vmax.f32 %v2523, 0.0
      %v2538 = vmax.f32 %v2528, 0.0
      %v2539 = vld [vmem:[%s13] sm:$0xff]
      %v2540 = vld [vmem:[%s13 + $0x8] sm:$0xff]
      %v2541 = vld [vmem:[%s13 + $0x10] sm:$0xff]
      %v2542 = vld [vmem:[%s13 + $0x18] sm:$0xff]
      %v2543 = vld [vmem:[%s14] sm:$0x1]
      %v2545 = vlaneseq
      %v2546 = vshrl.u32 %v2545, 7
      %v2547 = vsub.s32 0, %v2546
      %v2548 = vrot.slane %v2543, %v2547
      %v2550 = vsel %vm1351, %v1818, 0
      %v2552 = vsel %vm1351, %v1819, 0
      %v2554 = vsel %vm1351, %v1820, 0
      %v2556 = vsel %vm1351, %v1821, 0
      %v2558 = vsel %vm1351, %v1822, 0
      %v2560 = vsel %vm1351, %v1823, 0
      %v2562 = vsel %vm1351, %v1824, 0
      %v2564 = vsel %vm1351, %v1825, 0
      %2566 = vmatprep.subr.mxu0 0.0
      %2567 = vmatpush1.msra.mxu0 0.0
      %2568 = vmatprep.subr.mxu0 0.0
      %2569 = vmatpush1.msra.mxu0 0.0
      %2570 = vmatprep.subr.mxu0 0.0
      %2571 = vmatpush1.msra.mxu0 0.0
      %2572 = vmatprep.subr.mxu0 0.0
      %2573 = vmatpush1.msra.mxu0 0.0
      %2574 = vmatprep.subr.mxu0 0.0
      %2575 = vmatpush1.msra.mxu0 0.0
      %2576 = vmatprep.subr.mxu0 0.0
      %2577 = vmatpush1.msra.mxu0 0.0
      %2578 = vmatprep.subr.mxu0 0.0
      %2579 = vmatpush1.msra.mxu0 0.0
      %2580 = vmatprep.subr.mxu0 0.0
      %2581 = vmatpush1.msra.mxu0 0.0
      %2582 = vmatprep.subr.mxu0 0.0
      %2583 = vmatpush1.msra.mxu0 0.0
      %2584 = vmatprep.subr.mxu0 0.0
      %2585 = vmatpush1.msra.mxu0 0.0
      %2586 = vmatprep.subr.mxu0 0.0
      %2587 = vmatpush1.msra.mxu0 0.0
      %2588 = vmatprep.subr.mxu0 0.0
      %2589 = vmatpush1.msra.mxu0 0.0
      %2590 = vmatprep.subr.mxu0 0.0
      %2591 = vmatpush1.msra.mxu0 %v2542
      %2592 = vmatprep.subr.mxu0 0.0
      %2593 = vmatpush1.msra.mxu0 %v2541
      %2594 = vmatprep.subr.mxu0 0.0
      %2595 = vmatpush1.msra.mxu0 %v2540
      %2596 = vmatprep.subr.mxu0 0.0
      %2597 = vmatpush1.msra.mxu0 %v2539
      %2598 = vmatprep.subr.mxu0 0.0
      %2599 = vmatpush2.msra.mxu0 0.0
      %2600 = vmatprep.subr.mxu0 0.0
      %2601 = vmatpush2.msra.mxu0 0.0
      %2602 = vmatprep.subr.mxu0 0.0
      %2603 = vmatpush2.msra.mxu0 0.0
      %2604 = vmatprep.subr.mxu0 0.0
      %2605 = vmatpush2.msra.mxu0 0.0
      %2606 = vmatprep.subr.mxu0 0.0
      %2607 = vmatpush2.msra.mxu0 0.0
      %2608 = vmatprep.subr.mxu0 0.0
      %2609 = vmatpush2.msra.mxu0 0.0
      %2610 = vmatprep.subr.mxu0 0.0
      %2611 = vmatpush2.msra.mxu0 0.0
      %2612 = vmatprep.subr.mxu0 0.0
      %2613 = vmatpush2.msra.mxu0 0.0
      %2614 = vmatprep.subr.mxu0 0.0
      %2615 = vmatpush2.msra.mxu0 0.0
      %2616 = vmatprep.subr.mxu0 0.0
      %2617 = vmatpush2.msra.mxu0 0.0
      %2618 = vmatprep.subr.mxu0 0.0
      %2619 = vmatpush2.msra.mxu0 0.0
      %2620 = vmatprep.subr.mxu0 0.0
      %2621 = vmatpush2.msra.mxu0 0.0
      %2622 = vmatprep.subr.mxu0 0.0
      %2623 = vmatpush2.msra.mxu0 0.0
      %2624 = vmatprep.subr.mxu0 0.0
      %2625 = vmatpush2.msra.mxu0 0.0
      %2626 = vmatprep.subr.mxu0 0.0
      %2627 = vmatpush2.msra.mxu0 0.0
      %2628 = vmatprep.subr.mxu0 0.0
      %2629 = vmatpush2.msra.mxu0 0.0
      %2630 = vmatprep.mubr.f32.mxu0 0.0
      %2631 = vmatmul.mubr.f32.gmra.mxu0 %v2550
      %v2632 = vpop.f32.mrf.mxu0
      %v2633 = vadd.f32 %v2548, %v2632
      %v2634 = vpop.f32.mrf.mxu0
      %2635 = vmatprep.mubr.f32.mxu0 0.0
      %2636 = vmatmul.mubr.f32.gmra.mxu0 %v2552
      %v2637 = vpop.f32.mrf.mxu0
      %v2638 = vadd.f32 %v2548, %v2637
      %v2639 = vpop.f32.mrf.mxu0
      %2640 = vmatprep.mubr.f32.mxu0 0.0
      %2641 = vmatmul.mubr.f32.gmra.mxu0 %v2554
      %v2642 = vpop.f32.mrf.mxu0
      %v2643 = vadd.f32 %v2548, %v2642
      %v2644 = vpop.f32.mrf.mxu0
      %2645 = vmatprep.mubr.f32.mxu0 0.0
      %2646 = vmatmul.mubr.f32.gmra.mxu0 %v2556
      %v2647 = vpop.f32.mrf.mxu0
      %v2648 = vadd.f32 %v2548, %v2647
      %v2649 = vpop.f32.mrf.mxu0
      %2650 = vmatprep.mubr.f32.mxu0 0.0
      %2651 = vmatmul.mubr.f32.gmra.mxu0 %v2558
      %v2652 = vpop.f32.mrf.mxu0
      %v2653 = vadd.f32 %v2548, %v2652
      %v2654 = vpop.f32.mrf.mxu0
      %2655 = vmatprep.mubr.f32.mxu0 0.0
      %2656 = vmatmul.mubr.f32.gmra.mxu0 %v2560
      %v2657 = vpop.f32.mrf.mxu0
      %v2658 = vadd.f32 %v2548, %v2657
      %v2659 = vpop.f32.mrf.mxu0
      %2660 = vmatprep.mubr.f32.mxu0 0.0
      %2661 = vmatmul.mubr.f32.gmra.mxu0 %v2562
      %v2662 = vpop.f32.mrf.mxu0
      %v2663 = vadd.f32 %v2548, %v2662
      %v2664 = vpop.f32.mrf.mxu0
      %2665 = vmatprep.mubr.f32.mxu0 0.0
      %2666 = vmatmul.mubr.f32.gmra.mxu0 %v2564
      %v2667 = vpop.f32.mrf.mxu0
      %v2668 = vadd.f32 %v2548, %v2667
      %v2669 = vpop.f32.mrf.mxu0
      %2670 = vdwg.mxu0
      %v2671 = vld [vmem:[%s15] sm:$0xff]
      %v2672 = vld [vmem:[%s15 + $0x8] sm:$0xff]
      %v2673 = vld [vmem:[%s15 + $0x10] sm:$0xff]
      %v2674 = vld [vmem:[%s15 + $0x18] sm:$0xff]
      %v2675 = vld [vmem:[%s16] sm:$0x1]
      %v2677 = vlaneseq
      %v2678 = vshrl.u32 %v2677, 7
      %v2679 = vsub.s32 0, %v2678
      %v2680 = vrot.slane %v2675, %v2679
      %v2682 = vsel %vm1351, %v1071, 0
      %v2684 = vsel %vm1351, %v1072, 0
      %v2686 = vsel %vm1351, %v1073, 0
      %v2688 = vsel %vm1351, %v1074, 0
      %v2690 = vsel %vm1351, %v1075, 0
      %v2692 = vsel %vm1351, %v1076, 0
      %v2694 = vsel %vm1351, %v1077, 0
      %v2696 = vsel %vm1351, %v1078, 0
      %2698 = vmatprep.subr.mxu0 0.0
      %2699 = vmatpush1.msra.mxu0 0.0
      %2700 = vmatprep.subr.mxu0 0.0
      %2701 = vmatpush1.msra.mxu0 0.0
      %2702 = vmatprep.subr.mxu0 0.0
      %2703 = vmatpush1.msra.mxu0 0.0
      %2704 = vmatprep.subr.mxu0 0.0
      %2705 = vmatpush1.msra.mxu0 0.0
      %2706 = vmatprep.subr.mxu0 0.0
      %2707 = vmatpush1.msra.mxu0 0.0
      %2708 = vmatprep.subr.mxu0 0.0
      %2709 = vmatpush1.msra.mxu0 0.0
      %2710 = vmatprep.subr.mxu0 0.0
      %2711 = vmatpush1.msra.mxu0 0.0
      %2712 = vmatprep.subr.mxu0 0.0
      %2713 = vmatpush1.msra.mxu0 0.0
      %2714 = vmatprep.subr.mxu0 0.0
      %2715 = vmatpush1.msra.mxu0 0.0
      %2716 = vmatprep.subr.mxu0 0.0
      %2717 = vmatpush1.msra.mxu0 0.0
      %2718 = vmatprep.subr.mxu0 0.0
      %2719 = vmatpush1.msra.mxu0 0.0
      %2720 = vmatprep.subr.mxu0 0.0
      %2721 = vmatpush1.msra.mxu0 0.0
      %2722 = vmatprep.subr.mxu0 0.0
      %2723 = vmatpush1.msra.mxu0 %v2674
      %2724 = vmatprep.subr.mxu0 0.0
      %2725 = vmatpush1.msra.mxu0 %v2673
      %2726 = vmatprep.subr.mxu0 0.0
      %2727 = vmatpush1.msra.mxu0 %v2672
      %2728 = vmatprep.subr.mxu0 0.0
      %2729 = vmatpush1.msra.mxu0 %v2671
      %2730 = vmatprep.subr.mxu0 0.0
      %2731 = vmatpush2.msra.mxu0 0.0
      %2732 = vmatprep.subr.mxu0 0.0
      %2733 = vmatpush2.msra.mxu0 0.0
      %2734 = vmatprep.subr.mxu0 0.0
      %2735 = vmatpush2.msra.mxu0 0.0
      %2736 = vmatprep.subr.mxu0 0.0
      %2737 = vmatpush2.msra.mxu0 0.0
      %2738 = vmatprep.subr.mxu0 0.0
      %2739 = vmatpush2.msra.mxu0 0.0
      %2740 = vmatprep.subr.mxu0 0.0
      %2741 = vmatpush2.msra.mxu0 0.0
      %2742 = vmatprep.subr.mxu0 0.0
      %2743 = vmatpush2.msra.mxu0 0.0
      %2744 = vmatprep.subr.mxu0 0.0
      %2745 = vmatpush2.msra.mxu0 0.0
      %2746 = vmatprep.subr.mxu0 0.0
      %2747 = vmatpush2.msra.mxu0 0.0
      %2748 = vmatprep.subr.mxu0 0.0
      %2749 = vmatpush2.msra.mxu0 0.0
      %2750 = vmatprep.subr.mxu0 0.0
      %2751 = vmatpush2.msra.mxu0 0.0
      %2752 = vmatprep.subr.mxu0 0.0
      %2753 = vmatpush2.msra.mxu0 0.0
      %2754 = vmatprep.subr.mxu0 0.0
      %2755 = vmatpush2.msra.mxu0 0.0
      %2756 = vmatprep.subr.mxu0 0.0
      %2757 = vmatpush2.msra.mxu0 0.0
      %2758 = vmatprep.subr.mxu0 0.0
      %2759 = vmatpush2.msra.mxu0 0.0
      %2760 = vmatprep.subr.mxu0 0.0
      %2761 = vmatpush2.msra.mxu0 0.0
      %2762 = vmatprep.mubr.f32.mxu0 0.0
      %2763 = vmatmul.mubr.f32.gmra.mxu0 %v2682
      %v2764 = vpop.f32.mrf.mxu0
      %v2765 = vadd.f32 %v2680, %v2764
      %v2766 = vpop.f32.mrf.mxu0
      %2767 = vmatprep.mubr.f32.mxu0 0.0
      %2768 = vmatmul.mubr.f32.gmra.mxu0 %v2684
      %v2769 = vpop.f32.mrf.mxu0
      %v2770 = vadd.f32 %v2680, %v2769
      %v2771 = vpop.f32.mrf.mxu0
      %2772 = vmatprep.mubr.f32.mxu0 0.0
      %2773 = vmatmul.mubr.f32.gmra.mxu0 %v2686
      %v2774 = vpop.f32.mrf.mxu0
      %v2775 = vadd.f32 %v2680, %v2774
      %v2776 = vpop.f32.mrf.mxu0
      %2777 = vmatprep.mubr.f32.mxu0 0.0
      %2778 = vmatmul.mubr.f32.gmra.mxu0 %v2688
      %v2779 = vpop.f32.mrf.mxu0
      %v2780 = vadd.f32 %v2680, %v2779
      %v2781 = vpop.f32.mrf.mxu0
      %2782 = vmatprep.mubr.f32.mxu0 0.0
      %2783 = vmatmul.mubr.f32.gmra.mxu0 %v2690
      %v2784 = vpop.f32.mrf.mxu0
      %v2785 = vadd.f32 %v2680, %v2784
      %v2786 = vpop.f32.mrf.mxu0
      %2787 = vmatprep.mubr.f32.mxu0 0.0
      %2788 = vmatmul.mubr.f32.gmra.mxu0 %v2692
      %v2789 = vpop.f32.mrf.mxu0
      %v2790 = vadd.f32 %v2680, %v2789
      %v2791 = vpop.f32.mrf.mxu0
      %2792 = vmatprep.mubr.f32.mxu0 0.0
      %2793 = vmatmul.mubr.f32.gmra.mxu0 %v2694
      %v2794 = vpop.f32.mrf.mxu0
      %v2795 = vadd.f32 %v2680, %v2794
      %v2796 = vpop.f32.mrf.mxu0
      %2797 = vmatprep.mubr.f32.mxu0 0.0
      %2798 = vmatmul.mubr.f32.gmra.mxu0 %v2696
      %v2799 = vpop.f32.mrf.mxu0
      %v2800 = vadd.f32 %v2680, %v2799
      %v2801 = vpop.f32.mrf.mxu0
      %2802 = vdwg.mxu0
      %v2803 = vld [vmem:[%s17] sm:$0xff]
      %v2804 = vld [vmem:[%s17 + $0x8] sm:$0xff]
      %v2805 = vld [vmem:[%s17 + $0x10] sm:$0xff]
      %v2806 = vld [vmem:[%s17 + $0x18] sm:$0xff]
      %v2807 = vld [vmem:[%s18] sm:$0x1]
      %v2809 = vlaneseq
      %v2810 = vshrl.u32 %v2809, 7
      %v2811 = vsub.s32 0, %v2810
      %v2812 = vrot.slane %v2807, %v2811
      %v2815 = vsel %vm1351, %v2531, 0
      %v2818 = vsel %vm1351, %v2532, 0
      %v2821 = vsel %vm1351, %v2533, 0
      %v2824 = vsel %vm1351, %v2534, 0
      %v2827 = vsel %vm1351, %v2535, 0
      %v2830 = vsel %vm1351, %v2536, 0
      %v2833 = vsel %vm1351, %v2537, 0
      %v2836 = vsel %vm1351, %v2538, 0
      %2838 = vmatprep.subr.mxu0 0.0
      %2839 = vmatpush1.msra.mxu0 0.0
      %2840 = vmatprep.subr.mxu0 0.0
      %2841 = vmatpush1.msra.mxu0 0.0
      %2842 = vmatprep.subr.mxu0 0.0
      %2843 = vmatpush1.msra.mxu0 0.0
      %2844 = vmatprep.subr.mxu0 0.0
      %2845 = vmatpush1.msra.mxu0 0.0
      %2846 = vmatprep.subr.mxu0 0.0
      %2847 = vmatpush1.msra.mxu0 0.0
      %2848 = vmatprep.subr.mxu0 0.0
      %2849 = vmatpush1.msra.mxu0 0.0
      %2850 = vmatprep.subr.mxu0 0.0
      %2851 = vmatpush1.msra.mxu0 0.0
      %2852 = vmatprep.subr.mxu0 0.0
      %2853 = vmatpush1.msra.mxu0 0.0
      %2854 = vmatprep.subr.mxu0 0.0
      %2855 = vmatpush1.msra.mxu0 0.0
      %2856 = vmatprep.subr.mxu0 0.0
      %2857 = vmatpush1.msra.mxu0 0.0
      %2858 = vmatprep.subr.mxu0 0.0
      %2859 = vmatpush1.msra.mxu0 0.0
      %2860 = vmatprep.subr.mxu0 0.0
      %2861 = vmatpush1.msra.mxu0 0.0
      %2862 = vmatprep.subr.mxu0 0.0
      %2863 = vmatpush1.msra.mxu0 %v2806
      %2864 = vmatprep.subr.mxu0 0.0
      %2865 = vmatpush1.msra.mxu0 %v2805
      %2866 = vmatprep.subr.mxu0 0.0
      %2867 = vmatpush1.msra.mxu0 %v2804
      %2868 = vmatprep.subr.mxu0 0.0
      %2869 = vmatpush1.msra.mxu0 %v2803
      %2870 = vmatprep.subr.mxu0 0.0
      %2871 = vmatpush2.msra.mxu0 0.0
      %2872 = vmatprep.subr.mxu0 0.0
      %2873 = vmatpush2.msra.mxu0 0.0
      %2874 = vmatprep.subr.mxu0 0.0
      %2875 = vmatpush2.msra.mxu0 0.0
      %2876 = vmatprep.subr.mxu0 0.0
      %2877 = vmatpush2.msra.mxu0 0.0
      %2878 = vmatprep.subr.mxu0 0.0
      %2879 = vmatpush2.msra.mxu0 0.0
      %2880 = vmatprep.subr.mxu0 0.0
      %2881 = vmatpush2.msra.mxu0 0.0
      %2882 = vmatprep.subr.mxu0 0.0
      %2883 = vmatpush2.msra.mxu0 0.0
      %2884 = vmatprep.subr.mxu0 0.0
      %2885 = vmatpush2.msra.mxu0 0.0
      %2886 = vmatprep.subr.mxu0 0.0
      %2887 = vmatpush2.msra.mxu0 0.0
      %2888 = vmatprep.subr.mxu0 0.0
      %2889 = vmatpush2.msra.mxu0 0.0
      %2890 = vmatprep.subr.mxu0 0.0
      %2891 = vmatpush2.msra.mxu0 0.0
      %2892 = vmatprep.subr.mxu0 0.0
      %2893 = vmatpush2.msra.mxu0 0.0
      %2894 = vmatprep.subr.mxu0 0.0
      %2895 = vmatpush2.msra.mxu0 0.0
      %2896 = vmatprep.subr.mxu0 0.0
      %2897 = vmatpush2.msra.mxu0 0.0
      %2898 = vmatprep.subr.mxu0 0.0
      %2899 = vmatpush2.msra.mxu0 0.0
      %2900 = vmatprep.subr.mxu0 0.0
      %2901 = vmatpush2.msra.mxu0 0.0
      %2902 = vmatprep.mubr.f32.mxu0 0.0
      %2903 = vmatmul.mubr.f32.gmra.mxu0 %v2815
      %v2904 = vpop.f32.mrf.mxu0
      %v2905 = vadd.f32 %v2812, %v2904
      %v2906 = vpop.f32.mrf.mxu0
      %2907 = vmatprep.mubr.f32.mxu0 0.0
      %2908 = vmatmul.mubr.f32.gmra.mxu0 %v2818
      %v2909 = vpop.f32.mrf.mxu0
      %v2910 = vadd.f32 %v2812, %v2909
      %v2911 = vpop.f32.mrf.mxu0
      %2912 = vmatprep.mubr.f32.mxu0 0.0
      %2913 = vmatmul.mubr.f32.gmra.mxu0 %v2821
      %v2914 = vpop.f32.mrf.mxu0
      %v2915 = vadd.f32 %v2812, %v2914
      %v2916 = vpop.f32.mrf.mxu0
      %2917 = vmatprep.mubr.f32.mxu0 0.0
      %2918 = vmatmul.mubr.f32.gmra.mxu0 %v2824
      %v2919 = vpop.f32.mrf.mxu0
      %v2920 = vadd.f32 %v2812, %v2919
      %v2921 = vpop.f32.mrf.mxu0
      %2922 = vmatprep.mubr.f32.mxu0 0.0
      %2923 = vmatmul.mubr.f32.gmra.mxu0 %v2827
      %v2924 = vpop.f32.mrf.mxu0
      %v2925 = vadd.f32 %v2812, %v2924
      %v2926 = vpop.f32.mrf.mxu0
      %2927 = vmatprep.mubr.f32.mxu0 0.0
      %2928 = vmatmul.mubr.f32.gmra.mxu0 %v2830
      %v2929 = vpop.f32.mrf.mxu0
      %v2930 = vadd.f32 %v2812, %v2929
      %v2931 = vpop.f32.mrf.mxu0
      %2932 = vmatprep.mubr.f32.mxu0 0.0
      %2933 = vmatmul.mubr.f32.gmra.mxu0 %v2833
      %v2934 = vpop.f32.mrf.mxu0
      %v2935 = vadd.f32 %v2812, %v2934
      %v2936 = vpop.f32.mrf.mxu0
      %2937 = vmatprep.mubr.f32.mxu0 0.0
      %2938 = vmatmul.mubr.f32.gmra.mxu0 %v2836
      %v2939 = vpop.f32.mrf.mxu0
      %v2940 = vadd.f32 %v2812, %v2939
      %v2941 = vpop.f32.mrf.mxu0
      %2942 = vdwg.mxu0
      %vm2943 = vcmask 31744
      %v2945 = vsel %vm2943, %v2765, 0
      %v2948 = vsel %vm2943, %v2770, 0
      %v2951 = vsel %vm2943, %v2775, 0
      %v2954 = vsel %vm2943, %v2780, 0
      %v2957 = vsel %vm2943, %v2785, 0
      %v2960 = vsel %vm2943, %v2790, 0
      %v2963 = vsel %vm2943, %v2795, 0
      %v2966 = vsel %vm2943, %v2800, 0
      %v2969 = vsel %vm2943, %v2633, 0
      %v2972 = vsel %vm2943, %v2638, 0
      %v2975 = vsel %vm2943, %v2643, 0
      %v2978 = vsel %vm2943, %v2648, 0
      %v2981 = vsel %vm2943, %v2653, 0
      %v2984 = vsel %vm2943, %v2658, 0
      %v2987 = vsel %vm2943, %v2663, 0
      %v2990 = vsel %vm2943, %v2668, 0
      %2992 = vmatprep.subr.mxu0 0.0
      %2993 = vmatpush1.xpose.msra.mxu0 0.0
      %2994 = vmatprep.subr.mxu0 0.0
      %2995 = vmatpush1.xpose.msra.mxu0 0.0
      %2996 = vmatprep.subr.mxu0 0.0
      %2997 = vmatpush1.xpose.msra.mxu0 0.0
      %2998 = vmatprep.subr.mxu0 0.0
      %2999 = vmatpush1.xpose.msra.mxu0 0.0
      %3000 = vmatprep.subr.mxu0 0.0
      %3001 = vmatpush1.xpose.msra.mxu0 0.0
      %3002 = vmatprep.subr.mxu0 0.0
      %3003 = vmatpush1.xpose.msra.mxu0 0.0
      %3004 = vmatprep.subr.mxu0 0.0
      %3005 = vmatpush1.xpose.msra.mxu0 0.0
      %3006 = vmatprep.subr.mxu0 0.0
      %3007 = vmatpush1.xpose.msra.mxu0 0.0
      %3008 = vmatprep.subr.mxu0 0.0
      %3009 = vmatpush1.xpose.msra.mxu0 %v2990
      %3010 = vmatprep.subr.mxu0 0.0
      %3011 = vmatpush1.xpose.msra.mxu0 %v2987
      %3012 = vmatprep.subr.mxu0 0.0
      %3013 = vmatpush1.xpose.msra.mxu0 %v2984
      %3014 = vmatprep.subr.mxu0 0.0
      %3015 = vmatpush1.xpose.msra.mxu0 %v2981
      %3016 = vmatprep.subr.mxu0 0.0
      %3017 = vmatpush1.xpose.msra.mxu0 %v2978
      %3018 = vmatprep.subr.mxu0 0.0
      %3019 = vmatpush1.xpose.msra.mxu0 %v2975
      %3020 = vmatprep.subr.mxu0 0.0
      %3021 = vmatpush1.xpose.msra.mxu0 %v2972
      %3022 = vmatprep.subr.mxu0 0.0
      %3023 = vmatpush1.xpose.msra.mxu0 %v2969
      %3024 = vmatprep.subr.mxu0 0.0
      %3025 = vmatpush2.xpose.msra.mxu0 0.0
      %3026 = vmatprep.subr.mxu0 0.0
      %3027 = vmatpush2.xpose.msra.mxu0 0.0
      %3028 = vmatprep.subr.mxu0 0.0
      %3029 = vmatpush2.xpose.msra.mxu0 0.0
      %3030 = vmatprep.subr.mxu0 0.0
      %3031 = vmatpush2.xpose.msra.mxu0 0.0
      %3032 = vmatprep.subr.mxu0 0.0
      %3033 = vmatpush2.xpose.msra.mxu0 0.0
      %3034 = vmatprep.subr.mxu0 0.0
      %3035 = vmatpush2.xpose.msra.mxu0 0.0
      %3036 = vmatprep.subr.mxu0 0.0
      %3037 = vmatpush2.xpose.msra.mxu0 0.0
      %3038 = vmatprep.subr.mxu0 0.0
      %3039 = vmatpush2.xpose.msra.mxu0 0.0
      %3040 = vmatprep.subr.mxu0 0.0
      %3041 = vmatpush2.xpose.msra.mxu0 0.0
      %3042 = vmatprep.subr.mxu0 0.0
      %3043 = vmatpush2.xpose.msra.mxu0 0.0
      %3044 = vmatprep.subr.mxu0 0.0
      %3045 = vmatpush2.xpose.msra.mxu0 0.0
      %3046 = vmatprep.subr.mxu0 0.0
      %3047 = vmatpush2.xpose.msra.mxu0 0.0
      %3048 = vmatprep.subr.mxu0 0.0
      %3049 = vmatpush2.xpose.msra.mxu0 0.0
      %3050 = vmatprep.subr.mxu0 0.0
      %3051 = vmatpush2.xpose.msra.mxu0 0.0
      %3052 = vmatprep.subr.mxu0 0.0
      %3053 = vmatpush2.xpose.msra.mxu0 0.0
      %3054 = vmatprep.subr.mxu0 0.0
      %3055 = vmatpush2.xpose.msra.mxu0 0.0
      %3056 = vmatprep.mubr.f32.mxu0 0.0
      %3057 = vmatmul.mubr.f32.gmra.mxu0 %v2945
      %v3058 = vpop.f32.mrf.mxu0
      %v3059 = vadd.f32 0.0, %v3058
      %v3060 = vpop.f32.mrf.mxu0
      %3061 = vmatprep.mubr.f32.mxu0 0.0
      %3062 = vmatmul.mubr.f32.gmra.mxu0 %v2948
      %v3063 = vpop.f32.mrf.mxu0
      %v3064 = vadd.f32 0.0, %v3063
      %v3065 = vpop.f32.mrf.mxu0
      %3066 = vmatprep.mubr.f32.mxu0 0.0
      %3067 = vmatmul.mubr.f32.gmra.mxu0 %v2951
      %v3068 = vpop.f32.mrf.mxu0
      %v3069 = vadd.f32 0.0, %v3068
      %v3070 = vpop.f32.mrf.mxu0
      %3071 = vmatprep.mubr.f32.mxu0 0.0
      %3072 = vmatmul.mubr.f32.gmra.mxu0 %v2954
      %v3073 = vpop.f32.mrf.mxu0
      %v3074 = vadd.f32 0.0, %v3073
      %v3075 = vpop.f32.mrf.mxu0
      %3076 = vmatprep.mubr.f32.mxu0 0.0
      %3077 = vmatmul.mubr.f32.gmra.mxu0 %v2957
      %v3078 = vpop.f32.mrf.mxu0
      %v3079 = vadd.f32 0.0, %v3078
      %v3080 = vpop.f32.mrf.mxu0
      %3081 = vmatprep.mubr.f32.mxu0 0.0
      %3082 = vmatmul.mubr.f32.gmra.mxu0 %v2960
      %v3083 = vpop.f32.mrf.mxu0
      %v3084 = vadd.f32 0.0, %v3083
      %v3085 = vpop.f32.mrf.mxu0
      %3086 = vmatprep.mubr.f32.mxu0 0.0
      %3087 = vmatmul.mubr.f32.gmra.mxu0 %v2963
      %v3088 = vpop.f32.mrf.mxu0
      %v3089 = vadd.f32 0.0, %v3088
      %v3090 = vpop.f32.mrf.mxu0
      %3091 = vmatprep.mubr.f32.mxu0 0.0
      %3092 = vmatmul.mubr.f32.gmra.mxu0 %v2966
      %v3093 = vpop.f32.mrf.mxu0
      %v3094 = vadd.f32 0.0, %v3093
      %v3095 = vpop.f32.mrf.mxu0
      %3096 = vdwg.mxu0
      %v3097 = vsel %vm748, %v3059, -inf
      %3098 = vmax.xlane.f32.xlu0 %v3097
      %v3099 = vpop.xlane.xlu0 %3098
      %v3100 = vsel %vm748, %v3064, -inf
      %3101 = vmax.xlane.f32.xlu0 %v3100
      %v3102 = vpop.xlane.xlu0 %3101
      %v3103 = vsel %vm748, %v3069, -inf
      %3104 = vmax.xlane.f32.xlu0 %v3103
      %v3105 = vpop.xlane.xlu0 %3104
      %v3106 = vsel %vm748, %v3074, -inf
      %3107 = vmax.xlane.f32.xlu0 %v3106
      %v3108 = vpop.xlane.xlu0 %3107
      %v3109 = vsel %vm748, %v3079, -inf
      %3110 = vmax.xlane.f32.xlu0 %v3109
      %v3111 = vpop.xlane.xlu0 %3110
      %v3112 = vsel %vm748, %v3084, -inf
      %3113 = vmax.xlane.f32.xlu0 %v3112
      %v3114 = vpop.xlane.xlu0 %3113
      %v3115 = vsel %vm748, %v3089, -inf
      %3116 = vmax.xlane.f32.xlu0 %v3115
      %v3117 = vpop.xlane.xlu0 %3116
      %v3118 = vsel %vm748, %v3094, -inf
      %3119 = vmax.xlane.f32.xlu0 %v3118
      %v3120 = vpop.xlane.xlu0 %3119
      %v3121 = vlaneseq
      %v3122 = vand.u32 %v3121, 127
      %v3123 = vcvt.s32.f32 %v3122
      %vm3124 = vcmp.ge.f32.partialorder %v3059, %v3099
      %vm3125 = vcmp.ge.f32.partialorder %v3064, %v3102
      %vm3126 = vcmp.ge.f32.partialorder %v3069, %v3105
      %vm3127 = vcmp.ge.f32.partialorder %v3074, %v3108
      %vm3128 = vcmp.ge.f32.partialorder %v3079, %v3111
      %vm3129 = vcmp.ge.f32.partialorder %v3084, %v3114
      %vm3130 = vcmp.ge.f32.partialorder %v3089, %v3117
      %vm3131 = vcmp.ge.f32.partialorder %v3094, %v3120
      %v3132 = vsel %vm3124, %v3123, 64.0
      %v3133 = vsel %vm3125, %v3123, 64.0
      %v3134 = vsel %vm3126, %v3123, 64.0
      %v3135 = vsel %vm3127, %v3123, 64.0
      %v3136 = vsel %vm3128, %v3123, 64.0
      %v3137 = vsel %vm3129, %v3123, 64.0
      %v3138 = vsel %vm3130, %v3123, 64.0
      %v3139 = vsel %vm3131, %v3123, 64.0
      %v3140 = vsel %vm748, %v3132, inf
      %3141 = vmin.xlane.f32.xlu0 %v3140
      %v3142 = vpop.xlane.xlu0 %3141
      %v3143 = vsel %vm748, %v3133, inf
      %3144 = vmin.xlane.f32.xlu0 %v3143
      %v3145 = vpop.xlane.xlu0 %3144
      %v3146 = vsel %vm748, %v3134, inf
      %3147 = vmin.xlane.f32.xlu0 %v3146
      %v3148 = vpop.xlane.xlu0 %3147
      %v3149 = vsel %vm748, %v3135, inf
      %3150 = vmin.xlane.f32.xlu0 %v3149
      %v3151 = vpop.xlane.xlu0 %3150
      %v3152 = vsel %vm748, %v3136, inf
      %3153 = vmin.xlane.f32.xlu0 %v3152
      %v3154 = vpop.xlane.xlu0 %3153
      %v3155 = vsel %vm748, %v3137, inf
      %3156 = vmin.xlane.f32.xlu0 %v3155
      %v3157 = vpop.xlane.xlu0 %3156
      %v3158 = vsel %vm748, %v3138, inf
      %3159 = vmin.xlane.f32.xlu0 %v3158
      %v3160 = vpop.xlane.xlu0 %3159
      %v3161 = vsel %vm748, %v3139, inf
      %3162 = vmin.xlane.f32.xlu0 %v3161
      %v3163 = vpop.xlane.xlu0 %3162
      %vm3164 = vcmp.eq.f32.partialorder %v3123, %v3142
      %vm3165 = vcmp.eq.f32.partialorder %v3123, %v3145
      %vm3166 = vcmp.eq.f32.partialorder %v3123, %v3148
      %vm3167 = vcmp.eq.f32.partialorder %v3123, %v3151
      %vm3168 = vcmp.eq.f32.partialorder %v3123, %v3154
      %vm3169 = vcmp.eq.f32.partialorder %v3123, %v3157
      %vm3170 = vcmp.eq.f32.partialorder %v3123, %v3160
      %vm3171 = vcmp.eq.f32.partialorder %v3123, %v3163
      %v3172 = vsel %vm3164, 1, 0
      %v3173 = vsel %vm3165, 1, 0
      %v3174 = vsel %vm3166, 1, 0
      %v3175 = vsel %vm3167, 1, 0
      %v3176 = vsel %vm3168, 1, 0
      %v3177 = vsel %vm3169, 1, 0
      %v3178 = vsel %vm3170, 1, 0
      %v3179 = vsel %vm3171, 1, 0
      %v3180 = vcvt.s32.f32 %v3172
      %v3181 = vcvt.s32.f32 %v3173
      %v3182 = vcvt.s32.f32 %v3174
      %v3183 = vcvt.s32.f32 %v3175
      %v3184 = vcvt.s32.f32 %v3176
      %v3185 = vcvt.s32.f32 %v3177
      %v3186 = vcvt.s32.f32 %v3178
      %v3187 = vcvt.s32.f32 %v3179
      %v3189 = vsel %vm748, %v3180, 0
      %v3192 = vsel %vm748, %v3181, 0
      %v3195 = vsel %vm748, %v3182, 0
      %v3198 = vsel %vm748, %v3183, 0
      %v3201 = vsel %vm748, %v3184, 0
      %v3204 = vsel %vm748, %v3185, 0
      %v3207 = vsel %vm748, %v3186, 0
      %v3210 = vsel %vm748, %v3187, 0
      %3212 = vmatprep.subr.mxu0 0.0
      %3213 = vmatpush1.msra.mxu0 0.0
      %3214 = vmatprep.subr.mxu0 0.0
      %3215 = vmatpush1.msra.mxu0 0.0
      %3216 = vmatprep.subr.mxu0 0.0
      %3217 = vmatpush1.msra.mxu0 0.0
      %3218 = vmatprep.subr.mxu0 0.0
      %3219 = vmatpush1.msra.mxu0 0.0
      %3220 = vmatprep.subr.mxu0 0.0
      %3221 = vmatpush1.msra.mxu0 0.0
      %3222 = vmatprep.subr.mxu0 0.0
      %3223 = vmatpush1.msra.mxu0 0.0
      %3224 = vmatprep.subr.mxu0 0.0
      %3225 = vmatpush1.msra.mxu0 0.0
      %3226 = vmatprep.subr.mxu0 0.0
      %3227 = vmatpush1.msra.mxu0 0.0
      %3228 = vmatprep.subr.mxu0 0.0
      %3229 = vmatpush1.msra.mxu0 %v2940
      %3230 = vmatprep.subr.mxu0 0.0
      %3231 = vmatpush1.msra.mxu0 %v2935
      %3232 = vmatprep.subr.mxu0 0.0
      %3233 = vmatpush1.msra.mxu0 %v2930
      %3234 = vmatprep.subr.mxu0 0.0
      %3235 = vmatpush1.msra.mxu0 %v2925
      %3236 = vmatprep.subr.mxu0 0.0
      %3237 = vmatpush1.msra.mxu0 %v2920
      %3238 = vmatprep.subr.mxu0 0.0
      %3239 = vmatpush1.msra.mxu0 %v2915
      %3240 = vmatprep.subr.mxu0 0.0
      %3241 = vmatpush1.msra.mxu0 %v2910
      %3242 = vmatprep.subr.mxu0 0.0
      %3243 = vmatpush1.msra.mxu0 %v2905
      %3244 = vmatprep.subr.mxu0 0.0
      %3245 = vmatpush2.msra.mxu0 0.0
      %3246 = vmatprep.subr.mxu0 0.0
      %3247 = vmatpush2.msra.mxu0 0.0
      %3248 = vmatprep.subr.mxu0 0.0
      %3249 = vmatpush2.msra.mxu0 0.0
      %3250 = vmatprep.subr.mxu0 0.0
      %3251 = vmatpush2.msra.mxu0 0.0
      %3252 = vmatprep.subr.mxu0 0.0
      %3253 = vmatpush2.msra.mxu0 0.0
      %3254 = vmatprep.subr.mxu0 0.0
      %3255 = vmatpush2.msra.mxu0 0.0
      %3256 = vmatprep.subr.mxu0 0.0
      %3257 = vmatpush2.msra.mxu0 0.0
      %3258 = vmatprep.subr.mxu0 0.0
      %3259 = vmatpush2.msra.mxu0 0.0
      %3260 = vmatprep.subr.mxu0 0.0
      %3261 = vmatpush2.msra.mxu0 0.0
      %3262 = vmatprep.subr.mxu0 0.0
      %3263 = vmatpush2.msra.mxu0 0.0
      %3264 = vmatprep.subr.mxu0 0.0
      %3265 = vmatpush2.msra.mxu0 0.0
      %3266 = vmatprep.subr.mxu0 0.0
      %3267 = vmatpush2.msra.mxu0 0.0
      %3268 = vmatprep.subr.mxu0 0.0
      %3269 = vmatpush2.msra.mxu0 0.0
      %3270 = vmatprep.subr.mxu0 0.0
      %3271 = vmatpush2.msra.mxu0 0.0
      %3272 = vmatprep.subr.mxu0 0.0
      %3273 = vmatpush2.msra.mxu0 0.0
      %3274 = vmatprep.subr.mxu0 0.0
      %3275 = vmatpush2.msra.mxu0 0.0
      %3276 = vmatprep.mubr.f32.mxu0 0.0
      %3277 = vmatmul.mubr.f32.gmra.mxu0 %v3189
      %v3278 = vpop.f32.mrf.mxu0
      %v3279 = vadd.f32 0.0, %v3278
      %v3280 = vpop.f32.mrf.mxu0
      %3281 = vmatprep.mubr.f32.mxu0 0.0
      %3282 = vmatmul.mubr.f32.gmra.mxu0 %v3192
      %v3283 = vpop.f32.mrf.mxu0
      %v3284 = vadd.f32 0.0, %v3283
      %v3285 = vpop.f32.mrf.mxu0
      %3286 = vmatprep.mubr.f32.mxu0 0.0
      %3287 = vmatmul.mubr.f32.gmra.mxu0 %v3195
      %v3288 = vpop.f32.mrf.mxu0
      %v3289 = vadd.f32 0.0, %v3288
      %v3290 = vpop.f32.mrf.mxu0
      %3291 = vmatprep.mubr.f32.mxu0 0.0
      %3292 = vmatmul.mubr.f32.gmra.mxu0 %v3198
      %v3293 = vpop.f32.mrf.mxu0
      %v3294 = vadd.f32 0.0, %v3293
      %v3295 = vpop.f32.mrf.mxu0
      %3296 = vmatprep.mubr.f32.mxu0 0.0
      %3297 = vmatmul.mubr.f32.gmra.mxu0 %v3201
      %v3298 = vpop.f32.mrf.mxu0
      %v3299 = vadd.f32 0.0, %v3298
      %v3300 = vpop.f32.mrf.mxu0
      %3301 = vmatprep.mubr.f32.mxu0 0.0
      %3302 = vmatmul.mubr.f32.gmra.mxu0 %v3204
      %v3303 = vpop.f32.mrf.mxu0
      %v3304 = vadd.f32 0.0, %v3303
      %v3305 = vpop.f32.mrf.mxu0
      %3306 = vmatprep.mubr.f32.mxu0 0.0
      %3307 = vmatmul.mubr.f32.gmra.mxu0 %v3207
      %v3308 = vpop.f32.mrf.mxu0
      %v3309 = vadd.f32 0.0, %v3308
      %v3310 = vpop.f32.mrf.mxu0
      %3311 = vmatprep.mubr.f32.mxu0 0.0
      %3312 = vmatmul.mubr.f32.gmra.mxu0 %v3210
      %v3313 = vpop.f32.mrf.mxu0
      %v3314 = vadd.f32 0.0, %v3313
      %v3315 = vpop.f32.mrf.mxu0
      %3316 = vdwg.mxu0
      %v3317 = vld [vmem:[%s19] sm:$0xff]
      %v3318 = vld [vmem:[%s19 + $0x8] sm:$0xff]
      %v3319 = vld [vmem:[%s19 + $0x10] sm:$0xff]
      %v3320 = vld [vmem:[%s19 + $0x18] sm:$0xff]
      %v3321 = vld [vmem:[%s19 + $0x20] sm:$0xff]
      %v3322 = vld [vmem:[%s19 + $0x28] sm:$0xff]
      %v3323 = vld [vmem:[%s19 + $0x30] sm:$0xff]
      %v3324 = vld [vmem:[%s19 + $0x38] sm:$0xff]
      %v3325 = vld [vmem:[%s19 + $0x40] sm:$0xff]
      %v3326 = vld [vmem:[%s19 + $0x48] sm:$0xff]
      %v3327 = vld [vmem:[%s19 + $0x50] sm:$0xff]
      %v3328 = vld [vmem:[%s19 + $0x58] sm:$0xff]
      %v3329 = vld [vmem:[%s19 + $0x60] sm:$0xff]
      %v3330 = vld [vmem:[%s19 + $0x68] sm:$0xff]
      %v3331 = vld [vmem:[%s19 + $0x70] sm:$0xff]
      %v3332 = vld [vmem:[%s19 + $0x78] sm:$0xff]
      %v3333 = vld [vmem:[%s19 + $0x80] sm:$0xff]
      %v3334 = vld [vmem:[%s19 + $0x88] sm:$0xff]
      %v3335 = vld [vmem:[%s19 + $0x90] sm:$0xff]
      %v3336 = vld [vmem:[%s19 + $0x98] sm:$0xff]
      %v3337 = vld [vmem:[%s19 + $0xa0] sm:$0xff]
      %v3338 = vld [vmem:[%s19 + $0xa8] sm:$0xff]
      %v3339 = vld [vmem:[%s19 + $0xb0] sm:$0xff]
      %v3340 = vld [vmem:[%s19 + $0xb8] sm:$0xff]
      %v3341 = vld [vmem:[%s19 + $0xc0] sm:$0xff]
      %v3342 = vld [vmem:[%s19 + $0xc8] sm:$0xff]
      %v3343 = vld [vmem:[%s19 + $0xd0] sm:$0xff]
      %v3344 = vld [vmem:[%s19 + $0xd8] sm:$0xff]
      %v3345 = vld [vmem:[%s19 + $0xe0] sm:$0xff]
      %v3346 = vld [vmem:[%s19 + $0xe8] sm:$0xff]
      %v3347 = vld [vmem:[%s19 + $0xf0] sm:$0xff]
      %v3348 = vld [vmem:[%s19 + $0xf8] sm:$0xff]
      %v3349 = vld [vmem:[%s19 + $0x100] sm:$0xff]
      %v3350 = vld [vmem:[%s19 + $0x108] sm:$0xff]
      %v3351 = vld [vmem:[%s19 + $0x110] sm:$0xff]
      %v3352 = vld [vmem:[%s19 + $0x118] sm:$0xff]
      %v3361 = vrot.slane %v3279, 7
      %v3362 = vrot.slane %v3284, 7
      %v3363 = vrot.slane %v3289, 7
      %v3364 = vrot.slane %v3294, 7
      %v3365 = vrot.slane %v3299, 7
      %v3366 = vrot.slane %v3304, 7
      %v3367 = vrot.slane %v3309, 7
      %v3368 = vrot.slane %v3314, 7
      %v3377 = vsel %vm1106, 0.0, %v3361
      %v3378 = vsel %vm1106, 0.0, %v3362
      %v3379 = vsel %vm1106, 0.0, %v3363
      %v3380 = vsel %vm1106, 0.0, %v3364
      %v3381 = vsel %vm1106, 0.0, %v3365
      %v3382 = vsel %vm1106, 0.0, %v3366
      %v3383 = vsel %vm1106, 0.0, %v3367
      %v3384 = vsel %vm1106, 0.0, %v3368
      %v3385 = vsel %vm1106, %v3361, 0.0
      %v3386 = vsel %vm1106, %v3362, 0.0
      %v3387 = vsel %vm1106, %v3363, 0.0
      %v3388 = vsel %vm1106, %v3364, 0.0
      %v3389 = vsel %vm1106, %v3365, 0.0
      %v3390 = vsel %vm1106, %v3366, 0.0
      %v3391 = vsel %vm1106, %v3367, 0.0
      %v3392 = vsel %vm1106, %v3368, 0.0
      %v3407 = vrot.slane %v3377, 1
      %v3408 = vrot.slane %v3385, 1
      %v3409 = vsel %vm1141, %v3407, %v3408
      %v3410 = vrot.slane %v3378, 1
      %v3411 = vrot.slane %v3386, 1
      %v3412 = vsel %vm1141, %v3410, %v3411
      %v3413 = vrot.slane %v3379, 1
      %v3414 = vrot.slane %v3387, 1
      %v3415 = vsel %vm1141, %v3413, %v3414
      %v3416 = vrot.slane %v3380, 1
      %v3417 = vrot.slane %v3388, 1
      %v3418 = vsel %vm1141, %v3416, %v3417
      %v3419 = vrot.slane %v3381, 1
      %v3420 = vrot.slane %v3389, 1
      %v3421 = vsel %vm1141, %v3419, %v3420
      %v3422 = vrot.slane %v3382, 1
      %v3423 = vrot.slane %v3390, 1
      %v3424 = vsel %vm1141, %v3422, %v3423
      %v3425 = vrot.slane %v3383, 1
      %v3426 = vrot.slane %v3391, 1
      %v3427 = vsel %vm1141, %v3425, %v3426
      %3428 = vrot.lane.b32.xlu0 %v3409, 32
      %v3429 = vpop.permute.xlu0 %3428
      %3430 = vrot.lane.b32.xlu0 %v3412, 32
      %v3431 = vpop.permute.xlu0 %3430
      %3432 = vrot.lane.b32.xlu0 %v3415, 32
      %v3433 = vpop.permute.xlu0 %3432
      %3434 = vrot.lane.b32.xlu0 %v3418, 32
      %v3435 = vpop.permute.xlu0 %3434
      %3436 = vrot.lane.b32.xlu0 %v3421, 32
      %v3437 = vpop.permute.xlu0 %3436
      %3438 = vrot.lane.b32.xlu0 %v3424, 32
      %v3439 = vpop.permute.xlu0 %3438
      %3440 = vrot.lane.b32.xlu0 %v3427, 32
      %v3441 = vpop.permute.xlu0 %3440
      %v3449 = vrot.slane %v3377, 2
      %v3450 = vrot.slane %v3385, 2
      %v3451 = vsel %vm1190, %v3449, %v3450
      %v3452 = vrot.slane %v3378, 2
      %v3453 = vrot.slane %v3386, 2
      %v3454 = vsel %vm1190, %v3452, %v3453
      %v3455 = vrot.slane %v3379, 2
      %v3456 = vrot.slane %v3387, 2
      %v3457 = vsel %vm1190, %v3455, %v3456
      %v3458 = vrot.slane %v3380, 2
      %v3459 = vrot.slane %v3388, 2
      %v3460 = vsel %vm1190, %v3458, %v3459
      %v3461 = vrot.slane %v3381, 2
      %v3462 = vrot.slane %v3389, 2
      %v3463 = vsel %vm1190, %v3461, %v3462
      %v3464 = vrot.slane %v3382, 2
      %v3465 = vrot.slane %v3390, 2
      %v3466 = vsel %vm1190, %v3464, %v3465
      %v3467 = vrot.slane %v3383, 2
      %v3468 = vrot.slane %v3391, 2
      %v3469 = vsel %vm1190, %v3467, %v3468
      %3470 = vrot.lane.b32.xlu0 %v3451, 64
      %v3471 = vpop.permute.xlu0 %3470
      %3472 = vrot.lane.b32.xlu0 %v3454, 64
      %v3473 = vpop.permute.xlu0 %3472
      %3474 = vrot.lane.b32.xlu0 %v3457, 64
      %v3475 = vpop.permute.xlu0 %3474
      %3476 = vrot.lane.b32.xlu0 %v3460, 64
      %v3477 = vpop.permute.xlu0 %3476
      %3478 = vrot.lane.b32.xlu0 %v3463, 64
      %v3479 = vpop.permute.xlu0 %3478
      %3480 = vrot.lane.b32.xlu0 %v3466, 64
      %v3481 = vpop.permute.xlu0 %3480
      %3482 = vrot.lane.b32.xlu0 %v3469, 64
      %v3483 = vpop.permute.xlu0 %3482
      %3492 = vrot.lane.b32.xlu0 %v3377, 96
      %v3493 = vpop.permute.xlu0 %3492
      %3494 = vrot.lane.b32.xlu0 %v3378, 96
      %v3495 = vpop.permute.xlu0 %3494
      %3496 = vrot.lane.b32.xlu0 %v3379, 96
      %v3497 = vpop.permute.xlu0 %3496
      %3498 = vrot.lane.b32.xlu0 %v3380, 96
      %v3499 = vpop.permute.xlu0 %3498
      %3500 = vrot.lane.b32.xlu0 %v3381, 96
      %v3501 = vpop.permute.xlu0 %3500
      %3502 = vrot.lane.b32.xlu0 %v3382, 96
      %v3503 = vpop.permute.xlu0 %3502
      %3504 = vrot.lane.b32.xlu0 %v3383, 96
      %v3505 = vpop.permute.xlu0 %3504
      %3506 = vrot.lane.b32.xlu0 %v3384, 96
      %v3507 = vpop.permute.xlu0 %3506
      %v3517 = vrot.slane %v3384, 1
      %v3518 = vrot.slane %v3392, 1
      %v3519 = vsel %vm1141, %v3517, %v3518
      %v3528 = vrot.slane %v3384, 2
      %v3529 = vrot.slane %v3392, 2
      %v3530 = vsel %vm1190, %v3528, %v3529
      %3531 = vrot.lane.b32.xlu0 %v3451, 32
      %v3532 = vpop.permute.xlu0 %3531
      %3533 = vrot.lane.b32.xlu0 %v3454, 32
      %v3534 = vpop.permute.xlu0 %3533
      %3535 = vrot.lane.b32.xlu0 %v3457, 32
      %v3536 = vpop.permute.xlu0 %3535
      %3537 = vrot.lane.b32.xlu0 %v3460, 32
      %v3538 = vpop.permute.xlu0 %3537
      %3539 = vrot.lane.b32.xlu0 %v3463, 32
      %v3540 = vpop.permute.xlu0 %3539
      %3541 = vrot.lane.b32.xlu0 %v3466, 32
      %v3542 = vpop.permute.xlu0 %3541
      %3543 = vrot.lane.b32.xlu0 %v3469, 32
      %v3544 = vpop.permute.xlu0 %3543
      %3545 = vrot.lane.b32.xlu0 %v3530, 32
      %v3546 = vpop.permute.xlu0 %3545
      %3555 = vrot.lane.b32.xlu0 %v3378, 64
      %v3556 = vpop.permute.xlu0 %3555
      %3557 = vrot.lane.b32.xlu0 %v3379, 64
      %v3558 = vpop.permute.xlu0 %3557
      %3559 = vrot.lane.b32.xlu0 %v3380, 64
      %v3560 = vpop.permute.xlu0 %3559
      %3561 = vrot.lane.b32.xlu0 %v3381, 64
      %v3562 = vpop.permute.xlu0 %3561
      %3563 = vrot.lane.b32.xlu0 %v3382, 64
      %v3564 = vpop.permute.xlu0 %3563
      %3565 = vrot.lane.b32.xlu0 %v3383, 64
      %v3566 = vpop.permute.xlu0 %3565
      %3567 = vrot.lane.b32.xlu0 %v3384, 64
      %v3568 = vpop.permute.xlu0 %3567
      %3576 = vrot.lane.b32.xlu0 %v3412, 96
      %v3577 = vpop.permute.xlu0 %3576
      %3578 = vrot.lane.b32.xlu0 %v3415, 96
      %v3579 = vpop.permute.xlu0 %3578
      %3580 = vrot.lane.b32.xlu0 %v3418, 96
      %v3581 = vpop.permute.xlu0 %3580
      %3582 = vrot.lane.b32.xlu0 %v3421, 96
      %v3583 = vpop.permute.xlu0 %3582
      %3584 = vrot.lane.b32.xlu0 %v3424, 96
      %v3585 = vpop.permute.xlu0 %3584
      %3586 = vrot.lane.b32.xlu0 %v3427, 96
      %v3587 = vpop.permute.xlu0 %3586
      %3588 = vrot.lane.b32.xlu0 %v3519, 96
      %v3589 = vpop.permute.xlu0 %3588
      %v3597 = vsel %vm1351, %v3377, %v3429
      %v3598 = vsel %vm1351, %v3378, %v3431
      %v3599 = vsel %vm1351, %v3379, %v3433
      %v3600 = vsel %vm1351, %v3380, %v3435
      %v3601 = vsel %vm1351, %v3381, %v3437
      %v3602 = vsel %vm1351, %v3382, %v3439
      %v3603 = vsel %vm1351, %v3383, %v3441
      %v3604 = vsel %vm748, %v3597, %v3471
      %v3605 = vsel %vm748, %v3598, %v3473
      %v3606 = vsel %vm748, %v3599, %v3475
      %v3607 = vsel %vm748, %v3600, %v3477
      %v3608 = vsel %vm748, %v3601, %v3479
      %v3609 = vsel %vm748, %v3602, %v3481
      %v3610 = vsel %vm748, %v3603, %v3483
      %v3611 = vsel %vm1368, %v1360, %v3493
      %v3612 = vsel %vm1368, %v3604, %v3495
      %v3613 = vsel %vm1368, %v3605, %v3497
      %v3614 = vsel %vm1368, %v3606, %v3499
      %v3615 = vsel %vm1368, %v3607, %v3501
      %v3616 = vsel %vm1368, %v3608, %v3503
      %v3617 = vsel %vm1368, %v3609, %v3505
      %v3618 = vsel %vm1368, %v3610, %v3507
      %v3619 = vsel %vm1351, %v3409, %v3532
      %v3620 = vsel %vm1351, %v3412, %v3534
      %v3621 = vsel %vm1351, %v3415, %v3536
      %v3622 = vsel %vm1351, %v3418, %v3538
      %v3623 = vsel %vm1351, %v3421, %v3540
      %v3624 = vsel %vm1351, %v3424, %v3542
      %v3625 = vsel %vm1351, %v3427, %v3544
      %v3626 = vsel %vm1351, %v3519, %v3546
      %v3627 = vsel %vm748, %v3619, %v3556
      %v3628 = vsel %vm748, %v3620, %v3558
      %v3629 = vsel %vm748, %v3621, %v3560
      %v3630 = vsel %vm748, %v3622, %v3562
      %v3631 = vsel %vm748, %v3623, %v3564
      %v3632 = vsel %vm748, %v3624, %v3566
      %v3633 = vsel %vm748, %v3625, %v3568
      %v3634 = vsel %vm748, %v3626, %v1318
      %v3635 = vsel %vm1368, %v3627, %v3577
      %v3636 = vsel %vm1368, %v3628, %v3579
      %v3637 = vsel %vm1368, %v3629, %v3581
      %v3638 = vsel %vm1368, %v3630, %v3583
      %v3639 = vsel %vm1368, %v3631, %v3585
      %v3640 = vsel %vm1368, %v3632, %v3587
      %v3641 = vsel %vm1368, %v3633, %v3589
      %v3642 = vsel %vm1368, %v3634, %v1342
      %v3643 = vld [vmem:[%s20] sm:$0xff]
      %v3644 = vld [vmem:[%s20 + $0x8] sm:$0xff]
      %v3645 = vld [vmem:[%s20 + $0x10] sm:$0xff]
      %v3646 = vld [vmem:[%s20 + $0x18] sm:$0xff]
      %v3647 = vld [vmem:[%s20 + $0x20] sm:$0xff]
      %v3648 = vld [vmem:[%s20 + $0x28] sm:$0xff]
      %v3649 = vld [vmem:[%s20 + $0x30] sm:$0xff]
      %v3650 = vld [vmem:[%s20 + $0x38] sm:$0xff]
      %v3651 = vld [vmem:[%s20 + $0x40] sm:$0xff]
      %v3652 = vld [vmem:[%s20 + $0x48] sm:$0xff]
      %v3653 = vld [vmem:[%s20 + $0x50] sm:$0xff]
      %v3654 = vld [vmem:[%s20 + $0x58] sm:$0xff]
      %v3655 = vld [vmem:[%s20 + $0x60] sm:$0xff]
      %v3656 = vld [vmem:[%s20 + $0x68] sm:$0xff]
      %v3657 = vld [vmem:[%s20 + $0x70] sm:$0xff]
      %v3658 = vld [vmem:[%s20 + $0x78] sm:$0xff]
      %v3659 = vld [vmem:[%s20 + $0x80] sm:$0xff]
      %v3660 = vld [vmem:[%s20 + $0x88] sm:$0xff]
      %v3661 = vld [vmem:[%s20 + $0x90] sm:$0xff]
      %v3662 = vld [vmem:[%s20 + $0x98] sm:$0xff]
      %v3663 = vld [vmem:[%s20 + $0xa0] sm:$0xff]
      %v3664 = vld [vmem:[%s20 + $0xa8] sm:$0xff]
      %v3665 = vld [vmem:[%s20 + $0xb0] sm:$0xff]
      %v3666 = vld [vmem:[%s20 + $0xb8] sm:$0xff]
      %v3667 = vld [vmem:[%s20 + $0xc0] sm:$0xff]
      %v3668 = vld [vmem:[%s20 + $0xc8] sm:$0xff]
      %v3669 = vld [vmem:[%s20 + $0xd0] sm:$0xff]
      %v3670 = vld [vmem:[%s20 + $0xd8] sm:$0xff]
      %v3671 = vld [vmem:[%s20 + $0xe0] sm:$0xff]
      %v3672 = vld [vmem:[%s20 + $0xe8] sm:$0xff]
      %v3673 = vld [vmem:[%s20 + $0xf0] sm:$0xff]
      %v3674 = vld [vmem:[%s20 + $0xf8] sm:$0xff]
      %v3675 = vld [vmem:[%s20 + $0x100] sm:$0xff]
      %v3676 = vld [vmem:[%s20 + $0x108] sm:$0xff]
      %v3677 = vld [vmem:[%s20 + $0x110] sm:$0xff]
      %v3678 = vld [vmem:[%s20 + $0x118] sm:$0xff]
      %v3679 = vsel %vm1351, %v3454, 0
      %v3681 = vsel %vm1351, %v3457, 0
      %v3683 = vsel %vm1351, %v3460, 0
      %v3685 = vsel %vm1351, %v3463, 0
      %v3687 = vsel %vm1351, %v3466, 0
      %v3689 = vsel %vm1351, %v3469, 0
      %v3691 = vsel %vm1351, %v3530, 0
      %3693 = vmatprep.subr.mxu0 0.0
      %3694 = vmatpush1.msra.mxu0 %v3658
      %3695 = vmatprep.subr.mxu0 0.0
      %3696 = vmatpush1.msra.mxu0 %v3657
      %3697 = vmatprep.subr.mxu0 0.0
      %3698 = vmatpush1.msra.mxu0 %v3656
      %3699 = vmatprep.subr.mxu0 0.0
      %3700 = vmatpush1.msra.mxu0 %v3655
      %3701 = vmatprep.subr.mxu0 0.0
      %3702 = vmatpush1.msra.mxu0 %v3654
      %3703 = vmatprep.subr.mxu0 0.0
      %3704 = vmatpush1.msra.mxu0 %v3653
      %3705 = vmatprep.subr.mxu0 0.0
      %3706 = vmatpush1.msra.mxu0 %v3652
      %3707 = vmatprep.subr.mxu0 0.0
      %3708 = vmatpush1.msra.mxu0 %v3651
      %3709 = vmatprep.subr.mxu0 0.0
      %3710 = vmatpush1.msra.mxu0 %v3650
      %3711 = vmatprep.subr.mxu0 0.0
      %3712 = vmatpush1.msra.mxu0 %v3649
      %3713 = vmatprep.subr.mxu0 0.0
      %3714 = vmatpush1.msra.mxu0 %v3648
      %3715 = vmatprep.subr.mxu0 0.0
      %3716 = vmatpush1.msra.mxu0 %v3647
      %3717 = vmatprep.subr.mxu0 0.0
      %3718 = vmatpush1.msra.mxu0 %v3646
      %3719 = vmatprep.subr.mxu0 0.0
      %3720 = vmatpush1.msra.mxu0 %v3645
      %3721 = vmatprep.subr.mxu0 0.0
      %3722 = vmatpush1.msra.mxu0 %v3644
      %3723 = vmatprep.subr.mxu0 0.0
      %3724 = vmatpush1.msra.mxu0 %v3643
      %3725 = vmatprep.subr.mxu0 0.0
      %3726 = vmatpush2.msra.mxu0 %v3674
      %3727 = vmatprep.subr.mxu0 0.0
      %3728 = vmatpush2.msra.mxu0 %v3673
      %3729 = vmatprep.subr.mxu0 0.0
      %3730 = vmatpush2.msra.mxu0 %v3672
      %3731 = vmatprep.subr.mxu0 0.0
      %3732 = vmatpush2.msra.mxu0 %v3671
      %3733 = vmatprep.subr.mxu0 0.0
      %3734 = vmatpush2.msra.mxu0 %v3670
      %3735 = vmatprep.subr.mxu0 0.0
      %3736 = vmatpush2.msra.mxu0 %v3669
      %3737 = vmatprep.subr.mxu0 0.0
      %3738 = vmatpush2.msra.mxu0 %v3668
      %3739 = vmatprep.subr.mxu0 0.0
      %3740 = vmatpush2.msra.mxu0 %v3667
      %3741 = vmatprep.subr.mxu0 0.0
      %3742 = vmatpush2.msra.mxu0 %v3666
      %3743 = vmatprep.subr.mxu0 0.0
      %3744 = vmatpush2.msra.mxu0 %v3665
      %3745 = vmatprep.subr.mxu0 0.0
      %3746 = vmatpush2.msra.mxu0 %v3664
      %3747 = vmatprep.subr.mxu0 0.0
      %3748 = vmatpush2.msra.mxu0 %v3663
      %3749 = vmatprep.subr.mxu0 0.0
      %3750 = vmatpush2.msra.mxu0 %v3662
      %3751 = vmatprep.subr.mxu0 0.0
      %3752 = vmatpush2.msra.mxu0 %v3661
      %3753 = vmatprep.subr.mxu0 0.0
      %3754 = vmatpush2.msra.mxu0 %v3660
      %3755 = vmatprep.subr.mxu0 0.0
      %3756 = vmatpush2.msra.mxu0 %v3659
      %3757 = vmatprep.mubr.f32.mxu0 %v3635
      %3758 = vmatmul.mubr.f32.gmra.mxu0 %v3611
      %v3759 = vpop.f32.mrf.mxu0
      %v3760 = vadd.f32 0.0, %v3759
      %v3761 = vpop.f32.mrf.mxu0
      %3762 = vmatprep.mubr.f32.mxu0 %v3636
      %3763 = vmatmul.mubr.f32.gmra.mxu0 %v3612
      %v3764 = vpop.f32.mrf.mxu0
      %v3765 = vadd.f32 0.0, %v3764
      %v3766 = vpop.f32.mrf.mxu0
      %3767 = vmatprep.mubr.f32.mxu0 %v3637
      %3768 = vmatmul.mubr.f32.gmra.mxu0 %v3613
      %v3769 = vpop.f32.mrf.mxu0
      %v3770 = vadd.f32 0.0, %v3769
      %v3771 = vpop.f32.mrf.mxu0
      %3772 = vmatprep.mubr.f32.mxu0 %v3638
      %3773 = vmatmul.mubr.f32.gmra.mxu0 %v3614
      %v3774 = vpop.f32.mrf.mxu0
      %v3775 = vadd.f32 0.0, %v3774
      %v3776 = vpop.f32.mrf.mxu0
      %3777 = vmatprep.mubr.f32.mxu0 %v3639
      %3778 = vmatmul.mubr.f32.gmra.mxu0 %v3615
      %v3779 = vpop.f32.mrf.mxu0
      %v3780 = vadd.f32 0.0, %v3779
      %v3781 = vpop.f32.mrf.mxu0
      %3782 = vmatprep.mubr.f32.mxu0 %v3640
      %3783 = vmatmul.mubr.f32.gmra.mxu0 %v3616
      %v3784 = vpop.f32.mrf.mxu0
      %v3785 = vadd.f32 0.0, %v3784
      %v3786 = vpop.f32.mrf.mxu0
      %3787 = vmatprep.mubr.f32.mxu0 %v3641
      %3788 = vmatmul.mubr.f32.gmra.mxu0 %v3617
      %v3789 = vpop.f32.mrf.mxu0
      %v3790 = vadd.f32 0.0, %v3789
      %v3791 = vpop.f32.mrf.mxu0
      %3792 = vmatprep.mubr.f32.mxu0 %v3642
      %3793 = vmatmul.mubr.f32.gmra.mxu0 %v3618
      %v3794 = vpop.f32.mrf.mxu0
      %v3795 = vadd.f32 0.0, %v3794
      %v3796 = vpop.f32.mrf.mxu0
      %3797 = vdwg.mxu0
      %3798 = vmatprep.subr.mxu0 0.0
      %3799 = vmatpush1.msra.mxu0 0.0
      %3800 = vmatprep.subr.mxu0 0.0
      %3801 = vmatpush1.msra.mxu0 0.0
      %3802 = vmatprep.subr.mxu0 0.0
      %3803 = vmatpush1.msra.mxu0 0.0
      %3804 = vmatprep.subr.mxu0 0.0
      %3805 = vmatpush1.msra.mxu0 0.0
      %3806 = vmatprep.subr.mxu0 0.0
      %3807 = vmatpush1.msra.mxu0 0.0
      %3808 = vmatprep.subr.mxu0 0.0
      %3809 = vmatpush1.msra.mxu0 0.0
      %3810 = vmatprep.subr.mxu0 0.0
      %3811 = vmatpush1.msra.mxu0 0.0
      %3812 = vmatprep.subr.mxu0 0.0
      %3813 = vmatpush1.msra.mxu0 0.0
      %3814 = vmatprep.subr.mxu0 0.0
      %3815 = vmatpush1.msra.mxu0 0.0
      %3816 = vmatprep.subr.mxu0 0.0
      %3817 = vmatpush1.msra.mxu0 0.0
      %3818 = vmatprep.subr.mxu0 0.0
      %3819 = vmatpush1.msra.mxu0 0.0
      %3820 = vmatprep.subr.mxu0 0.0
      %3821 = vmatpush1.msra.mxu0 0.0
      %3822 = vmatprep.subr.mxu0 0.0
      %3823 = vmatpush1.msra.mxu0 %v3678
      %3824 = vmatprep.subr.mxu0 0.0
      %3825 = vmatpush1.msra.mxu0 %v3677
      %3826 = vmatprep.subr.mxu0 0.0
      %3827 = vmatpush1.msra.mxu0 %v3676
      %3828 = vmatprep.subr.mxu0 0.0
      %3829 = vmatpush1.msra.mxu0 %v3675
      %3830 = vmatprep.subr.mxu0 0.0
      %3831 = vmatpush2.msra.mxu0 0.0
      %3832 = vmatprep.subr.mxu0 0.0
      %3833 = vmatpush2.msra.mxu0 0.0
      %3834 = vmatprep.subr.mxu0 0.0
      %3835 = vmatpush2.msra.mxu0 0.0
      %3836 = vmatprep.subr.mxu0 0.0
      %3837 = vmatpush2.msra.mxu0 0.0
      %3838 = vmatprep.subr.mxu0 0.0
      %3839 = vmatpush2.msra.mxu0 0.0
      %3840 = vmatprep.subr.mxu0 0.0
      %3841 = vmatpush2.msra.mxu0 0.0
      %3842 = vmatprep.subr.mxu0 0.0
      %3843 = vmatpush2.msra.mxu0 0.0
      %3844 = vmatprep.subr.mxu0 0.0
      %3845 = vmatpush2.msra.mxu0 0.0
      %3846 = vmatprep.subr.mxu0 0.0
      %3847 = vmatpush2.msra.mxu0 0.0
      %3848 = vmatprep.subr.mxu0 0.0
      %3849 = vmatpush2.msra.mxu0 0.0
      %3850 = vmatprep.subr.mxu0 0.0
      %3851 = vmatpush2.msra.mxu0 0.0
      %3852 = vmatprep.subr.mxu0 0.0
      %3853 = vmatpush2.msra.mxu0 0.0
      %3854 = vmatprep.subr.mxu0 0.0
      %3855 = vmatpush2.msra.mxu0 0.0
      %3856 = vmatprep.subr.mxu0 0.0
      %3857 = vmatpush2.msra.mxu0 0.0
      %3858 = vmatprep.subr.mxu0 0.0
      %3859 = vmatpush2.msra.mxu0 0.0
      %3860 = vmatprep.subr.mxu0 0.0
      %3861 = vmatpush2.msra.mxu0 0.0
      %3862 = vmatprep.mubr.f32.mxu0 0.0
      %3863 = vmatmul.mubr.f32.gmra.mxu0 %v3679
      %v3864 = vpop.f32.mrf.mxu0
      %v3865 = vadd.f32 %v3760, %v3864
      %v3866 = vpop.f32.mrf.mxu0
      %3867 = vmatprep.mubr.f32.mxu0 0.0
      %3868 = vmatmul.mubr.f32.gmra.mxu0 %v3681
      %v3869 = vpop.f32.mrf.mxu0
      %v3870 = vadd.f32 %v3765, %v3869
      %v3871 = vpop.f32.mrf.mxu0
      %3872 = vmatprep.mubr.f32.mxu0 0.0
      %3873 = vmatmul.mubr.f32.gmra.mxu0 %v3683
      %v3874 = vpop.f32.mrf.mxu0
      %v3875 = vadd.f32 %v3770, %v3874
      %v3876 = vpop.f32.mrf.mxu0
      %3877 = vmatprep.mubr.f32.mxu0 0.0
      %3878 = vmatmul.mubr.f32.gmra.mxu0 %v3685
      %v3879 = vpop.f32.mrf.mxu0
      %v3880 = vadd.f32 %v3775, %v3879
      %v3881 = vpop.f32.mrf.mxu0
      %3882 = vmatprep.mubr.f32.mxu0 0.0
      %3883 = vmatmul.mubr.f32.gmra.mxu0 %v3687
      %v3884 = vpop.f32.mrf.mxu0
      %v3885 = vadd.f32 %v3780, %v3884
      %v3886 = vpop.f32.mrf.mxu0
      %3887 = vmatprep.mubr.f32.mxu0 0.0
      %3888 = vmatmul.mubr.f32.gmra.mxu0 %v3689
      %v3889 = vpop.f32.mrf.mxu0
      %v3890 = vadd.f32 %v3785, %v3889
      %v3891 = vpop.f32.mrf.mxu0
      %3892 = vmatprep.mubr.f32.mxu0 0.0
      %3893 = vmatmul.mubr.f32.gmra.mxu0 %v3691
      %v3894 = vpop.f32.mrf.mxu0
      %v3895 = vadd.f32 %v3790, %v3894
      %v3896 = vpop.f32.mrf.mxu0
      %3897 = vmatprep.mubr.f32.mxu0 0.0
      %3898 = vmatmul.mubr.f32.gmra.mxu0 %v1458
      %v3899 = vpop.f32.mrf.mxu0
      %v3900 = vadd.f32 %v3795, %v3899
      %v3901 = vpop.f32.mrf.mxu0
      %3902 = vdwg.mxu0
      %3903 = vmatprep.subr.mxu0 0.0
      %3904 = vmatpush1.msra.mxu0 %v3332
      %3905 = vmatprep.subr.mxu0 0.0
      %3906 = vmatpush1.msra.mxu0 %v3331
      %3907 = vmatprep.subr.mxu0 0.0
      %3908 = vmatpush1.msra.mxu0 %v3330
      %3909 = vmatprep.subr.mxu0 0.0
      %3910 = vmatpush1.msra.mxu0 %v3329
      %3911 = vmatprep.subr.mxu0 0.0
      %3912 = vmatpush1.msra.mxu0 %v3328
      %3913 = vmatprep.subr.mxu0 0.0
      %3914 = vmatpush1.msra.mxu0 %v3327
      %3915 = vmatprep.subr.mxu0 0.0
      %3916 = vmatpush1.msra.mxu0 %v3326
      %3917 = vmatprep.subr.mxu0 0.0
      %3918 = vmatpush1.msra.mxu0 %v3325
      %3919 = vmatprep.subr.mxu0 0.0
      %3920 = vmatpush1.msra.mxu0 %v3324
      %3921 = vmatprep.subr.mxu0 0.0
      %3922 = vmatpush1.msra.mxu0 %v3323
      %3923 = vmatprep.subr.mxu0 0.0
      %3924 = vmatpush1.msra.mxu0 %v3322
      %3925 = vmatprep.subr.mxu0 0.0
      %3926 = vmatpush1.msra.mxu0 %v3321
      %3927 = vmatprep.subr.mxu0 0.0
      %3928 = vmatpush1.msra.mxu0 %v3320
      %3929 = vmatprep.subr.mxu0 0.0
      %3930 = vmatpush1.msra.mxu0 %v3319
      %3931 = vmatprep.subr.mxu0 0.0
      %3932 = vmatpush1.msra.mxu0 %v3318
      %3933 = vmatprep.subr.mxu0 0.0
      %3934 = vmatpush1.msra.mxu0 %v3317
      %3935 = vmatprep.subr.mxu0 0.0
      %3936 = vmatpush2.msra.mxu0 %v3348
      %3937 = vmatprep.subr.mxu0 0.0
      %3938 = vmatpush2.msra.mxu0 %v3347
      %3939 = vmatprep.subr.mxu0 0.0
      %3940 = vmatpush2.msra.mxu0 %v3346
      %3941 = vmatprep.subr.mxu0 0.0
      %3942 = vmatpush2.msra.mxu0 %v3345
      %3943 = vmatprep.subr.mxu0 0.0
      %3944 = vmatpush2.msra.mxu0 %v3344
      %3945 = vmatprep.subr.mxu0 0.0
      %3946 = vmatpush2.msra.mxu0 %v3343
      %3947 = vmatprep.subr.mxu0 0.0
      %3948 = vmatpush2.msra.mxu0 %v3342
      %3949 = vmatprep.subr.mxu0 0.0
      %3950 = vmatpush2.msra.mxu0 %v3341
      %3951 = vmatprep.subr.mxu0 0.0
      %3952 = vmatpush2.msra.mxu0 %v3340
      %3953 = vmatprep.subr.mxu0 0.0
      %3954 = vmatpush2.msra.mxu0 %v3339
      %3955 = vmatprep.subr.mxu0 0.0
      %3956 = vmatpush2.msra.mxu0 %v3338
      %3957 = vmatprep.subr.mxu0 0.0
      %3958 = vmatpush2.msra.mxu0 %v3337
      %3959 = vmatprep.subr.mxu0 0.0
      %3960 = vmatpush2.msra.mxu0 %v3336
      %3961 = vmatprep.subr.mxu0 0.0
      %3962 = vmatpush2.msra.mxu0 %v3335
      %3963 = vmatprep.subr.mxu0 0.0
      %3964 = vmatpush2.msra.mxu0 %v3334
      %3965 = vmatprep.subr.mxu0 0.0
      %3966 = vmatpush2.msra.mxu0 %v3333
      %3967 = vmatprep.mubr.f32.mxu0 %v2108
      %3968 = vmatmul.mubr.f32.gmra.mxu0 %v2084
      %v3969 = vpop.f32.mrf.mxu0
      %v3970 = vadd.f32 %v3865, %v3969
      %v3971 = vpop.f32.mrf.mxu0
      %3972 = vmatprep.mubr.f32.mxu0 %v2109
      %3973 = vmatmul.mubr.f32.gmra.mxu0 %v2085
      %v3974 = vpop.f32.mrf.mxu0
      %v3975 = vadd.f32 %v3870, %v3974
      %v3976 = vpop.f32.mrf.mxu0
      %3977 = vmatprep.mubr.f32.mxu0 %v2110
      %3978 = vmatmul.mubr.f32.gmra.mxu0 %v2086
      %v3979 = vpop.f32.mrf.mxu0
      %v3980 = vadd.f32 %v3875, %v3979
      %v3981 = vpop.f32.mrf.mxu0
      %3982 = vmatprep.mubr.f32.mxu0 %v2111
      %3983 = vmatmul.mubr.f32.gmra.mxu0 %v2087
      %v3984 = vpop.f32.mrf.mxu0
      %v3985 = vadd.f32 %v3880, %v3984
      %v3986 = vpop.f32.mrf.mxu0
      %3987 = vmatprep.mubr.f32.mxu0 %v2112
      %3988 = vmatmul.mubr.f32.gmra.mxu0 %v2088
      %v3989 = vpop.f32.mrf.mxu0
      %v3990 = vadd.f32 %v3885, %v3989
      %v3991 = vpop.f32.mrf.mxu0
      %3992 = vmatprep.mubr.f32.mxu0 %v2113
      %3993 = vmatmul.mubr.f32.gmra.mxu0 %v2089
      %v3994 = vpop.f32.mrf.mxu0
      %v3995 = vadd.f32 %v3890, %v3994
      %v3996 = vpop.f32.mrf.mxu0
      %3997 = vmatprep.mubr.f32.mxu0 %v2114
      %3998 = vmatmul.mubr.f32.gmra.mxu0 %v2090
      %v3999 = vpop.f32.mrf.mxu0
      %v4000 = vadd.f32 %v3895, %v3999
      %v4001 = vpop.f32.mrf.mxu0
      %4002 = vmatprep.mubr.f32.mxu0 %v2115
      %4003 = vmatmul.mubr.f32.gmra.mxu0 %v2091
      %v4004 = vpop.f32.mrf.mxu0
      %v4005 = vadd.f32 %v3900, %v4004
      %v4006 = vpop.f32.mrf.mxu0
      %4007 = vdwg.mxu0
      %4008 = vmatprep.subr.mxu0 0.0
      %4009 = vmatpush1.msra.mxu0 0.0
      %4010 = vmatprep.subr.mxu0 0.0
      %4011 = vmatpush1.msra.mxu0 0.0
      %4012 = vmatprep.subr.mxu0 0.0
      %4013 = vmatpush1.msra.mxu0 0.0
      %4014 = vmatprep.subr.mxu0 0.0
      %4015 = vmatpush1.msra.mxu0 0.0
      %4016 = vmatprep.subr.mxu0 0.0
      %4017 = vmatpush1.msra.mxu0 0.0
      %4018 = vmatprep.subr.mxu0 0.0
      %4019 = vmatpush1.msra.mxu0 0.0
      %4020 = vmatprep.subr.mxu0 0.0
      %4021 = vmatpush1.msra.mxu0 0.0
      %4022 = vmatprep.subr.mxu0 0.0
      %4023 = vmatpush1.msra.mxu0 0.0
      %4024 = vmatprep.subr.mxu0 0.0
      %4025 = vmatpush1.msra.mxu0 0.0
      %4026 = vmatprep.subr.mxu0 0.0
      %4027 = vmatpush1.msra.mxu0 0.0
      %4028 = vmatprep.subr.mxu0 0.0
      %4029 = vmatpush1.msra.mxu0 0.0
      %4030 = vmatprep.subr.mxu0 0.0
      %4031 = vmatpush1.msra.mxu0 0.0
      %4032 = vmatprep.subr.mxu0 0.0
      %4033 = vmatpush1.msra.mxu0 %v3352
      %4034 = vmatprep.subr.mxu0 0.0
      %4035 = vmatpush1.msra.mxu0 %v3351
      %4036 = vmatprep.subr.mxu0 0.0
      %4037 = vmatpush1.msra.mxu0 %v3350
      %4038 = vmatprep.subr.mxu0 0.0
      %4039 = vmatpush1.msra.mxu0 %v3349
      %4040 = vmatprep.subr.mxu0 0.0
      %4041 = vmatpush2.msra.mxu0 0.0
      %4042 = vmatprep.subr.mxu0 0.0
      %4043 = vmatpush2.msra.mxu0 0.0
      %4044 = vmatprep.subr.mxu0 0.0
      %4045 = vmatpush2.msra.mxu0 0.0
      %4046 = vmatprep.subr.mxu0 0.0
      %4047 = vmatpush2.msra.mxu0 0.0
      %4048 = vmatprep.subr.mxu0 0.0
      %4049 = vmatpush2.msra.mxu0 0.0
      %4050 = vmatprep.subr.mxu0 0.0
      %4051 = vmatpush2.msra.mxu0 0.0
      %4052 = vmatprep.subr.mxu0 0.0
      %4053 = vmatpush2.msra.mxu0 0.0
      %4054 = vmatprep.subr.mxu0 0.0
      %4055 = vmatpush2.msra.mxu0 0.0
      %4056 = vmatprep.subr.mxu0 0.0
      %4057 = vmatpush2.msra.mxu0 0.0
      %4058 = vmatprep.subr.mxu0 0.0
      %4059 = vmatpush2.msra.mxu0 0.0
      %4060 = vmatprep.subr.mxu0 0.0
      %4061 = vmatpush2.msra.mxu0 0.0
      %4062 = vmatprep.subr.mxu0 0.0
      %4063 = vmatpush2.msra.mxu0 0.0
      %4064 = vmatprep.subr.mxu0 0.0
      %4065 = vmatpush2.msra.mxu0 0.0
      %4066 = vmatprep.subr.mxu0 0.0
      %4067 = vmatpush2.msra.mxu0 0.0
      %4068 = vmatprep.subr.mxu0 0.0
      %4069 = vmatpush2.msra.mxu0 0.0
      %4070 = vmatprep.subr.mxu0 0.0
      %4071 = vmatpush2.msra.mxu0 0.0
      %4072 = vmatprep.mubr.f32.mxu0 0.0
      %4073 = vmatmul.mubr.f32.gmra.mxu0 %v2159
      %v4074 = vpop.f32.mrf.mxu0
      %v4075 = vadd.f32 %v3970, %v4074
      %v4076 = vpop.f32.mrf.mxu0
      %4077 = vmatprep.mubr.f32.mxu0 0.0
      %4078 = vmatmul.mubr.f32.gmra.mxu0 %v2161
      %v4079 = vpop.f32.mrf.mxu0
      %v4080 = vadd.f32 %v3975, %v4079
      %v4081 = vpop.f32.mrf.mxu0
      %4082 = vmatprep.mubr.f32.mxu0 0.0
      %4083 = vmatmul.mubr.f32.gmra.mxu0 %v2163
      %v4084 = vpop.f32.mrf.mxu0
      %v4085 = vadd.f32 %v3980, %v4084
      %v4086 = vpop.f32.mrf.mxu0
      %4087 = vmatprep.mubr.f32.mxu0 0.0
      %4088 = vmatmul.mubr.f32.gmra.mxu0 %v2165
      %v4089 = vpop.f32.mrf.mxu0
      %v4090 = vadd.f32 %v3985, %v4089
      %v4091 = vpop.f32.mrf.mxu0
      %4092 = vmatprep.mubr.f32.mxu0 0.0
      %4093 = vmatmul.mubr.f32.gmra.mxu0 %v2167
      %v4094 = vpop.f32.mrf.mxu0
      %v4095 = vadd.f32 %v3990, %v4094
      %v4096 = vpop.f32.mrf.mxu0
      %4097 = vmatprep.mubr.f32.mxu0 0.0
      %4098 = vmatmul.mubr.f32.gmra.mxu0 %v2169
      %v4099 = vpop.f32.mrf.mxu0
      %v4100 = vadd.f32 %v3995, %v4099
      %v4101 = vpop.f32.mrf.mxu0
      %4102 = vmatprep.mubr.f32.mxu0 0.0
      %4103 = vmatmul.mubr.f32.gmra.mxu0 %v2171
      %v4104 = vpop.f32.mrf.mxu0
      %v4105 = vadd.f32 %v4000, %v4104
      %v4106 = vpop.f32.mrf.mxu0
      %4107 = vmatprep.mubr.f32.mxu0 0.0
      %4108 = vmatmul.mubr.f32.gmra.mxu0 %v1458
      %v4109 = vpop.f32.mrf.mxu0
      %v4110 = vadd.f32 %v4005, %v4109
      %v4111 = vpop.f32.mrf.mxu0
      %4112 = vdwg.mxu0
      %v4113 = vld [vmem:[%s21] sm:$0x1]
      %v4115 = vlaneseq
      %v4116 = vshrl.u32 %v4115, 7
      %v4117 = vsub.s32 0, %v4116
      %v4118 = vrot.slane %v4113, %v4117
      %v4120 = vadd.f32 %v4075, %v4118
      %v4121 = vadd.f32 %v4080, %v4118
      %v4122 = vadd.f32 %v4085, %v4118
      %v4123 = vadd.f32 %v4090, %v4118
      %v4124 = vadd.f32 %v4095, %v4118
      %v4125 = vadd.f32 %v4100, %v4118
      %v4126 = vadd.f32 %v4105, %v4118
      %v4127 = vadd.f32 %v4110, %v4118
      %v4128 = vmul.f32 %v4120, %v3099
      %v4129 = vmul.f32 %v4121, %v3102
      %v4130 = vmul.f32 %v4122, %v3105
      %v4131 = vmul.f32 %v4123, %v3108
      %v4132 = vmul.f32 %v4124, %v3111
      %v4133 = vmul.f32 %v4125, %v3114
      %v4134 = vmul.f32 %v4126, %v3117
      %v4135 = vmul.f32 %v4127, %v3120
      %v4136 = vadd.f32 %v1818, %v4128
      %v4137 = vadd.f32 %v1819, %v4129
      %v4138 = vadd.f32 %v1820, %v4130
      %v4139 = vadd.f32 %v1821, %v4131
      %v4140 = vadd.f32 %v1822, %v4132
      %v4141 = vadd.f32 %v1823, %v4133
      %v4142 = vadd.f32 %v1824, %v4134
      %v4143 = vadd.f32 %v1825, %v4135
      %4144 = vst.msk [vmem:[%s683] sm:$0xff] %vm1351, %v4136
      %4145 = vst.msk [vmem:[%s683 + $0x8] sm:$0xff] %vm1351, %v4137
      %4146 = vst.msk [vmem:[%s683 + $0x10] sm:$0xff] %vm1351, %v4138
      %4147 = vst.msk [vmem:[%s683 + $0x18] sm:$0xff] %vm1351, %v4139
      %4148 = vst.msk [vmem:[%s683 + $0x20] sm:$0xff] %vm1351, %v4140
      %4149 = vst.msk [vmem:[%s683 + $0x28] sm:$0xff] %vm1351, %v4141
      %4150 = vst.msk [vmem:[%s683 + $0x30] sm:$0xff] %vm1351, %v4142
      %4151 = vst.msk [vmem:[%s683 + $0x38] sm:$0xff] %vm1351, %v4143
      %p4152 = scmp.lt.s32.totalorder %s33, 1
      %s4153 = scalar_select %p4152, %s33, 1
      %s4154 = smul.addr %s4153, 8
      %s4155 = smul.addr %s4154, 8
      %s4156 = scalar_lea.vmem %s22, %s4155
      // Predicated region
      $region109: #{tpu_custom_call.1} parent=107 // pred_check
        %p4157 = pneg %p518
      $region110: #{tpu_custom_call.1} parent=107 // pred_check_branch
        %4159 = sbr.rel (%p4157) target = $region112
      $region111: #{tpu_custom_call.1} parent=107 // pred_region
        _
      $region112: #{tpu_custom_call.1} parent=107 // pred_fallthru
        _
    $region108: #{tpu_custom_call.1} parent=5 // pred_fallthru
      _
    %p4160 = scmp.le.s32.totalorder 2, %s28
    // Predicated region
    $region113: #{tpu_custom_call.1} parent=5 // pred_check
      %p4161 = pneg %p4160
    $region114: #{tpu_custom_call.1} parent=5 // pred_check_branch
      %4163 = sbr.rel (%p4161) target = $region116
    $region115: #{tpu_custom_call.1} parent=5 // pred_region
      %s4164 = ssub.s32 %s28, 2
      // Predicated region
      $region117: #{tpu_custom_call.1} parent=115 // pred_check
        %p4165 = pneg %p524
      $region118: #{tpu_custom_call.1} parent=115 // pred_check_branch
        %4167 = sbr.rel (%p4165) target = $region120
      $region119: #{tpu_custom_call.1} parent=115 // pred_region
        %p4168 = scmp.lt.s32.totalorder %s34, 1
        %s4169 = scalar_select %p4168, %s34, 1
        %s4170 = smul.addr %s4169, 8
        %s4171 = smul.addr %s4170, 8
        %s4172 = scalar_lea.vmem %s22, %s4171
      $region120: #{tpu_custom_call.1} parent=115 // pred_fallthru
        _
    $region116: #{tpu_custom_call.1} parent=5 // pred_fallthru
      _
  $region6: #{tpu_custom_call.1} parent=0 // loop_footer
    %s32 = sadd.s32 1, %s28
  $region7: #{tpu_custom_call.1} parent=0 // loop_footer_branch
    %27 = sbr.rel target = $region3
  $region8: #{tpu_custom_call.1} parent=0 // loop_exit
    _

</llo_original>
